<compile_context>
chip_gen: v7x
topology: tpu7x:2x2x1
jax: 0.10.0
libtpu: 0.0.40
codegen_flags: <defaults>
</compile_context>

<pallas_src>
import math

import jax
import jax.numpy as jnp
from jax.experimental import pallas as pl
from jax.experimental.pallas import tpu as pltpu

# ----------------------------- config (small) -------------------------------
NET_SIZE = 32                  # net_size   (PyTorch default was 128)
Z_DIM = 8                      # z_dim      (PyTorch default was 32)
SIDE = 8                       # sqrt(n_points); x_dim = y_dim = SIDE
BATCH = 2
N_POINTS = SIDE * SIDE
KSIZE = 5                      # Conv2d kernel size
SCALE = 8.0

N2 = NET_SIZE * 2              # 64
N1 = NET_SIZE                  # 32
NH = NET_SIZE // 2             # 16 (conv-head input channels)
D_IN = 3 + Z_DIM               # 11 (x, y, r, z)
D_PAD = (D_IN + 1 + 7) // 8 * 8  # 16: + ones column (folds b1), zero padded
UPS = 2 * SIDE                 # 16 (upsampled side)
H_OUT = UPS - KSIZE + 1        # 12 (valid conv output side)
KE = KSIZE // 2 + 1            # 3  (effective tap extent per output parity)
MH = H_OUT // 2                # 6  (per-parity output side)
NTAP = KE * KE                 # 9  (taps per parity)
TAPS = 4 * NTAP                # 36 (parity-major tap columns)
assert H_OUT % 2 == 0 and (MH - 1) + (KE - 1) < SIDE


# -------------------- packed weight-slab layout (row offsets) ---------------
def _a8(v):
    return (v + 7) // 8 * 8

R_W1 = 0                       # (D_PAD, N2)  [w2;w3;w4;w1;b1;0] fused stage-1
R_W5 = R_W1 + _a8(D_PAD)       # (N2, N2)
R_W6 = R_W5 + _a8(N2)          # (N2, N1)
R_W7 = R_W6 + _a8(N2)          # (N1, N1)
R_W8 = R_W7 + _a8(N1)          # (N1, NH)
R_W9 = R_W8 + _a8(N1)          # (NH, NH)
R_WE = R_W9 + _a8(NH)          # (NH, TAPS)   upsample-folded conv weights^T
R_B = R_WE + _a8(NH)           # rows: b5, b6, b7, b8, b9
R_M = R_B + 8                  # (NTAP, TAPS) 0/1 tap-selection rows
ROWS = _a8(R_M + NTAP)
LANES = (max(N2, TAPS) + 127) // 128 * 128


def _leaky(v):
    # nn.LeakyReLU(0.1)
    return jnp.where(v >= 0, v, 0.1 * v)


# --------------------------- fused forward kernel ---------------------------
def generator_kernel(inp_ref, w_ref, bc_ref, o_ref):
    f32 = jnp.float32
    nb = inp_ref.shape[0] // N_POINTS          # images in this call (static)

    # ---- MLP (lin_seq) on all nb*N CPPN points in one pass -----------------
    x = inp_ref[...]                                           # (nb*N, D_PAD)
    # U = l4(r)+l2(x)+l3(y)+l1(z)+b1 folded into a single matmul (ones col).
    h = _leaky(jnp.dot(x, w_ref[R_W1:R_W1 + D_PAD, :N2],
                       preferred_element_type=f32))
    # lin_seq: l5, l5, l6, l7, l7, l8, l9, l9 (each followed by leaky).
    b5 = w_ref[R_B + 0, :N2]
    b6 = w_ref[R_B + 1, :N1]
    b7 = w_ref[R_B + 2, :N1]
    b8 = w_ref[R_B + 3, :NH]
    b9 = w_ref[R_B + 4, :NH]
    for r0, rows, cols, b in ((R_W5, N2, N2, b5), (R_W5, N2, N2, b5),
                              (R_W6, N2, N1, b6),
                              (R_W7, N1, N1, b7), (R_W7, N1, N1, b7),
                              (R_W8, N1, NH, b8),
                              (R_W9, NH, NH, b9), (R_W9, NH, NH, b9)):
        h = _leaky(jnp.dot(h, w_ref[r0:r0 + rows, :cols],
                           preferred_element_type=f32) + b)

    # ---- conv channel reduction folded into the MXU -------------------------
    # S[point, t] = sum_c feat[point, c] * weff[t, c] : one scalar per tap.
    S = jnp.dot(h, w_ref[R_WE:R_WE + NH, :TAPS], preferred_element_type=f32)
    S4 = S.reshape(nb, SIDE, SIDE, TAPS)       # layout-preserving major split

    # 0/1 tap-selection rows (hoisted): sels[k][t] == 1 iff t % NTAP == k.
    sels = [w_ref[R_M + k, :TAPS] for k in range(NTAP)]
    bias = bc_ref[0, 0]                         # conv bias, scalar from SMEM

    # ---- upsample(2x) + Conv2d(5) == 4 parity 3x3 shifted sums + sigmoid ----
    outs = []
    for bi in range(nb):
        acc = jnp.zeros((MH, MH, TAPS), f32)
        for dh in range(KE):
            for dw in range(KE):
                acc = acc + (S4[bi, dh:dh + MH, dw:dw + MH, :]
                             * sels[dh * KE + dw])
        for p in range(4):                      # p = ph*2 + pw
            outs.append(jax.nn.sigmoid(
                jnp.sum(acc[:, :, p * NTAP:(p + 1) * NTAP], axis=-1) + bias))
    # Single bulk store of the whole output.
    o_ref[...] = jnp.stack(outs).reshape(nb, 4, MH, MH)


# ------------------ host-side parameter folding (trace time) ----------------
def _fold_upsample_into_conv(wc):
    """wc: (K*K, C) with row ki*K+kj == torch W[0, :, ki, kj].

    Returns (TAPS, C): for output parity (ph, pw) and effective tap (dh, dw),
    row (ph*2+pw)*NTAP + dh*KE + dw holds
    sum_{ki,kj : (ph+ki)//2==dh, (pw+kj)//2==dw} W[ki, kj, :].
    """
    w3 = wc.reshape(KSIZE, KSIZE, -1)
    c = w3.shape[-1]
    rows = []
    for ph in range(2):
        for pw in range(2):
            eff = jnp.zeros((KE, KE, c), jnp.float32)
            for ki in range(KSIZE):
                for kj in range(KSIZE):
                    eff = eff.at[(ph + ki) // 2, (pw + kj) // 2].add(w3[ki, kj])
            rows.append(eff.reshape(NTAP, c))
    return jnp.concatenate(rows, axis=0)


def _pack_weight_slab(p):
    """Pack every weight/bias (plus tap-selection rows) into one f32 slab."""
    slab = jnp.zeros((ROWS, LANES), jnp.float32)

    def put(s, r0, a):
        a = jnp.asarray(a, jnp.float32)
        return s.at[r0:r0 + a.shape[0], :a.shape[1]].set(a)

    # Stage 1: input columns are [x, y, r, z, 1, 0...]; fold b1 as the ones row.
    w1a = jnp.concatenate(
        [p["w2"], p["w3"], p["w4"], p["w1"], p["b1"],
         jnp.zeros((D_PAD - (D_IN + 1), N2), jnp.float32)], axis=0)
    slab = put(slab, R_W1, w1a)
    slab = put(slab, R_W5, p["w5"])
    slab = put(slab, R_W6, p["w6"])
    slab = put(slab, R_W7, p["w7"])
    slab = put(slab, R_W8, p["w8"])
    slab = put(slab, R_W9, p["w9"])
    slab = put(slab, R_WE, _fold_upsample_into_conv(p["wc"]).T)   # (NH, TAPS)
    slab = put(slab, R_B + 0, p["b5"])
    slab = put(slab, R_B + 1, p["b6"])
    slab = put(slab, R_B + 2, p["b7"])
    slab = put(slab, R_B + 3, p["b8"])
    slab = put(slab, R_B + 4, p["b9"])
    sel = (jnp.arange(TAPS)[None, :] % NTAP ==
           jnp.arange(NTAP)[:, None]).astype(jnp.float32)         # (NTAP, TAPS)
    slab = put(slab, R_M, sel)
    return slab


# ----------------------------- full forward ---------------------------------
def generator_forward(x, y, r, z, params):
    # x, y, r: (B, N, 1); z: (B, N, z_dim)
    B, N, _ = x.shape
    side = int(round(math.sqrt(N)))
    assert side * side == N and side == SIDE, (N, side)

    ones = jnp.ones((B, N, 1), jnp.float32)
    zpad = jnp.zeros((B, N, D_PAD - (D_IN + 1)), jnp.float32)
    inp = jnp.concatenate([x, y, r, z, ones, zpad], axis=-1)      # (B, N, D_PAD)
    inp = inp.reshape(B * N, D_PAD)

    slab = _pack_weight_slab(params)                              # (ROWS, LANES)
    bc = jnp.asarray(params["bc"], jnp.float32)                   # (1, 1) scalar

    out_pp = pl.pallas_call(
        generator_kernel,
        out_shape=jax.ShapeDtypeStruct((B, 4, MH, MH), jnp.float32),
        in_specs=[pl.BlockSpec(memory_space=pltpu.MemorySpace.VMEM),
                  pl.BlockSpec(memory_space=pltpu.MemorySpace.VMEM),
                  pl.BlockSpec(memory_space=pltpu.MemorySpace.SMEM)],
        out_specs=pl.BlockSpec(memory_space=pltpu.MemorySpace.VMEM),
    )(inp, slab, bc)

    # Interleave the 4 parity grids back to (B, H_OUT*H_OUT): a ~1 KB layout
    # permute of the final output only (all heavy work stayed in the kernel).
    out = (out_pp.reshape(B, 2, 2, MH, MH)
           .transpose(0, 3, 1, 4, 2)
           .reshape(B, H_OUT * H_OUT))
    return out                                                    # == view(-1, H*W)


# ------------------------- deterministic parameter init ---------------------
def init_params(key, z_dim, net_size):
    n2, n1, nh = net_size * 2, net_size, net_size // 2

    def lin(k, fan_in, fan_out, bias=True):
        kw, kb = jax.random.split(k)
        lim = 1.0 / math.sqrt(fan_in)
        w = jax.random.uniform(kw, (fan_in, fan_out), jnp.float32, -lim, lim)
        b = (jax.random.uniform(kb, (1, fan_out), jnp.float32, -lim, lim)
             if bias else None)
        return w, b

    keys = jax.random.split(key, 10)
    p = {}
    p["w1"], p["b1"] = lin(keys[0], z_dim, n2)
    p["w2"], _ = lin(keys[1], 1, n2, bias=False)
    p["w3"], _ = lin(keys[2], 1, n2, bias=False)
    p["w4"], _ = lin(keys[3], 1, n2, bias=False)
    p["w5"], p["b5"] = lin(keys[4], n2, n2)
    p["w6"], p["b6"] = lin(keys[5], n2, n1)
    p["w7"], p["b7"] = lin(keys[6], n1, n1)
    p["w8"], p["b8"] = lin(keys[7], n1, nh)
    p["w9"], p["b9"] = lin(keys[8], nh, nh)
    # nn.Conv2d(net_size//2, 1, 5): weight stored flattened as (K*K, C).
    lim = 1.0 / math.sqrt(nh * KSIZE * KSIZE)
    kcw, kcb = jax.random.split(keys[9])
    p["wc"] = jax.random.uniform(kcw, (KSIZE * KSIZE, nh), jnp.float32, -lim, lim)
    p["bc"] = jax.random.uniform(kcb, (1, 1), jnp.float32, -lim, lim)
    return p


# ------------------------------ pure-JAX reference ---------------------------
def reference_forward(x, y, r, z, p):
    leaky = lambda v: jnp.where(v >= 0, v, 0.1 * v)
    U = r @ p["w4"] + x @ p["w2"] + y @ p["w3"] + z @ p["w1"] + p["b1"]
    h = leaky(U)
    for (w, b) in [(p["w5"], p["b5"]), (p["w5"], p["b5"]), (p["w6"], p["b6"]),
                   (p["w7"], p["b7"]), (p["w7"], p["b7"]), (p["w8"], p["b8"]),
                   (p["w9"], p["b9"]), (p["w9"], p["b9"])]:
        h = leaky(h @ w + b)
    B, N, C = h.shape
    side = int(round(math.sqrt(N)))
    feat = h.reshape(B, side, side, C)
    up = jnp.repeat(jnp.repeat(feat, 2, axis=1), 2, axis=2)
    Ho = up.shape[1] - KSIZE + 1
    acc = jnp.zeros((B, Ho, Ho), jnp.float32)
    for ki in range(KSIZE):
        for kj in range(KSIZE):
            patch = up[:, ki:ki + Ho, kj:kj + Ho, :]
            acc = acc + jnp.einsum("bhwc,c->bhw", patch, p["wc"][ki * KSIZE + kj])
    out = jax.nn.sigmoid(acc + p["bc"][0, 0])
    return out.reshape(B, -1)


if __name__ == "__main__":
    key = jax.random.PRNGKey(0)
    kp, kz = jax.random.split(key)
    params = init_params(kp, Z_DIM, NET_SIZE)

    # CPPN coordinate inputs (x, y, r grids) and a per-image latent z.
    coords = (jnp.arange(SIDE, dtype=jnp.float32) - (SIDE - 1) / 2.0) \
             / (SIDE - 1) * 2.0 * SCALE
    xv, yv = jnp.meshgrid(coords, coords, indexing="xy")
    x = jnp.tile(xv.reshape(1, N_POINTS, 1), (BATCH, 1, 1))
    y = jnp.tile(yv.reshape(1, N_POINTS, 1), (BATCH, 1, 1))
    r = jnp.sqrt(x * x + y * y)
    z = jnp.tile(jax.random.normal(kz, (BATCH, 1, Z_DIM), jnp.float32),
                 (1, N_POINTS, 1))

    fwd = jax.jit(generator_forward)
    out = jax.block_until_ready(fwd(x, y, r, z, params))
    ref = jax.block_until_ready(reference_forward(x, y, r, z, params))

    assert out.shape == (BATCH, H_OUT * H_OUT), out.shape
    # Tolerance covers MXU default-precision f32 matmul passes (both paths
    # run the same 10-matmul chain; observed error is well below this).
    assert jnp.allclose(out, ref, atol=2e-3, rtol=2e-3), \
        float(jnp.max(jnp.abs(out - ref)))
    print("KERNEL_OK")
</pallas_src>

<mosaic_0001>
module attributes {stable_mosaic.version = 11 : i64} {
  func.func @generator_kernel(%arg0: memref<128x16xf32, #tpu.memory_space<vmem>>, %arg1: memref<264x128xf32, #tpu.memory_space<vmem>>, %arg2: memref<1x1xf32, #tpu.memory_space<smem>>, %arg3: memref<2x4x6x6xf32, #tpu.memory_space<vmem>>) attributes {dimension_semantics = [], scalar_prefetch = 0 : i64, scratch_operands = 0 : i64, tpu.core_type = #tpu.core_type<tc>} {
    %c0 = arith.constant 0 : index
    %c0_0 = arith.constant 0 : index
    %0 = vector.load %arg0[%c0, %c0_0] : memref<128x16xf32, #tpu.memory_space<vmem>>, vector<128x16xf32>
    %c0_1 = arith.constant 0 : index
    %c0_2 = arith.constant 0 : index
    %1 = vector.load %arg1[%c0_1, %c0_2] : memref<264x128xf32, #tpu.memory_space<vmem>>, vector<16x64xf32>
    %cst = arith.constant dense<0.000000e+00> : vector<128x64xf32>
    %2 = tpu.matmul %0, %1, %cst {dimension_numbers = #tpu.dot_dimension_numbers<[1], [0], [0], [1], [0, 0, 1, 1], [], []>} : vector<128x16xf32>, vector<16x64xf32>, vector<128x64xf32> -> vector<128x64xf32>
    %cst_3 = arith.constant 0.000000e+00 : f32
    %3 = vector.broadcast %cst_3 : f32 to vector<128x64xf32>
    %4 = arith.cmpf oge, %2, %3 : vector<128x64xf32>
    %cst_4 = arith.constant 1.000000e-01 : f32
    %5 = vector.broadcast %cst_4 : f32 to vector<128x64xf32>
    %6 = arith.mulf %5, %2 : vector<128x64xf32>
    %7 = arith.select %4, %2, %6 : vector<128x64xi1>, vector<128x64xf32>
    %c240 = arith.constant 240 : index
    %c0_5 = arith.constant 0 : index
    %8 = vector.load %arg1[%c240, %c0_5] : memref<264x128xf32, #tpu.memory_space<vmem>>, vector<1x64xf32>
    %9 = vector.shape_cast %8 : vector<1x64xf32> to vector<64xf32>
    %c241 = arith.constant 241 : index
    %c0_6 = arith.constant 0 : index
    %10 = vector.load %arg1[%c241, %c0_6] : memref<264x128xf32, #tpu.memory_space<vmem>>, vector<1x32xf32>
    %11 = vector.shape_cast %10 : vector<1x32xf32> to vector<32xf32>
    %c242 = arith.constant 242 : index
    %c0_7 = arith.constant 0 : index
    %12 = vector.load %arg1[%c242, %c0_7] : memref<264x128xf32, #tpu.memory_space<vmem>>, vector<1x32xf32>
    %13 = vector.shape_cast %12 : vector<1x32xf32> to vector<32xf32>
    %c243 = arith.constant 243 : index
    %c0_8 = arith.constant 0 : index
    %14 = vector.load %arg1[%c243, %c0_8] : memref<264x128xf32, #tpu.memory_space<vmem>>, vector<1x16xf32>
    %15 = vector.shape_cast %14 : vector<1x16xf32> to vector<16xf32>
    %c244 = arith.constant 244 : index
    %c0_9 = arith.constant 0 : index
    %16 = vector.load %arg1[%c244, %c0_9] : memref<264x128xf32, #tpu.memory_space<vmem>>, vector<1x16xf32>
    %17 = vector.shape_cast %16 : vector<1x16xf32> to vector<16xf32>
    %c16 = arith.constant 16 : index
    %c0_10 = arith.constant 0 : index
    %18 = vector.load %arg1[%c16, %c0_10] : memref<264x128xf32, #tpu.memory_space<vmem>>, vector<64x64xf32>
    %cst_11 = arith.constant dense<0.000000e+00> : vector<128x64xf32>
    %19 = tpu.matmul %7, %18, %cst_11 {dimension_numbers = #tpu.dot_dimension_numbers<[1], [0], [0], [1], [0, 0, 1, 1], [], []>} : vector<128x64xf32>, vector<64x64xf32>, vector<128x64xf32> -> vector<128x64xf32>
    %20 = vector.shape_cast %9 : vector<64xf32> to vector<1x64xf32>
    %21 = vector.broadcast %20 : vector<1x64xf32> to vector<128x64xf32>
    %22 = arith.addf %19, %21 : vector<128x64xf32>
    %cst_12 = arith.constant 0.000000e+00 : f32
    %23 = vector.broadcast %cst_12 : f32 to vector<128x64xf32>
    %24 = arith.cmpf oge, %22, %23 : vector<128x64xf32>
    %cst_13 = arith.constant 1.000000e-01 : f32
    %25 = vector.broadcast %cst_13 : f32 to vector<128x64xf32>
    %26 = arith.mulf %25, %22 : vector<128x64xf32>
    %27 = arith.select %24, %22, %26 : vector<128x64xi1>, vector<128x64xf32>
    %c16_14 = arith.constant 16 : index
    %c0_15 = arith.constant 0 : index
    %28 = vector.load %arg1[%c16_14, %c0_15] : memref<264x128xf32, #tpu.memory_space<vmem>>, vector<64x64xf32>
    %cst_16 = arith.constant dense<0.000000e+00> : vector<128x64xf32>
    %29 = tpu.matmul %27, %28, %cst_16 {dimension_numbers = #tpu.dot_dimension_numbers<[1], [0], [0], [1], [0, 0, 1, 1], [], []>} : vector<128x64xf32>, vector<64x64xf32>, vector<128x64xf32> -> vector<128x64xf32>
    %30 = vector.shape_cast %9 : vector<64xf32> to vector<1x64xf32>
    %31 = vector.broadcast %30 : vector<1x64xf32> to vector<128x64xf32>
    %32 = arith.addf %29, %31 : vector<128x64xf32>
    %cst_17 = arith.constant 0.000000e+00 : f32
    %33 = vector.broadcast %cst_17 : f32 to vector<128x64xf32>
    %34 = arith.cmpf oge, %32, %33 : vector<128x64xf32>
    %cst_18 = arith.constant 1.000000e-01 : f32
    %35 = vector.broadcast %cst_18 : f32 to vector<128x64xf32>
    %36 = arith.mulf %35, %32 : vector<128x64xf32>
    %37 = arith.select %34, %32, %36 : vector<128x64xi1>, vector<128x64xf32>
    %c80 = arith.constant 80 : index
    %c0_19 = arith.constant 0 : index
    %38 = vector.load %arg1[%c80, %c0_19] : memref<264x128xf32, #tpu.memory_space<vmem>>, vector<64x32xf32>
    %cst_20 = arith.constant dense<0.000000e+00> : vector<128x32xf32>
    %39 = tpu.matmul %37, %38, %cst_20 {dimension_numbers = #tpu.dot_dimension_numbers<[1], [0], [0], [1], [0, 0, 1, 1], [], []>} : vector<128x64xf32>, vector<64x32xf32>, vector<128x32xf32> -> vector<128x32xf32>
    %40 = vector.shape_cast %11 : vector<32xf32> to vector<1x32xf32>
    %41 = vector.broadcast %40 : vector<1x32xf32> to vector<128x32xf32>
    %42 = arith.addf %39, %41 : vector<128x32xf32>
    %cst_21 = arith.constant 0.000000e+00 : f32
    %43 = vector.broadcast %cst_21 : f32 to vector<128x32xf32>
    %44 = arith.cmpf oge, %42, %43 : vector<128x32xf32>
    %cst_22 = arith.constant 1.000000e-01 : f32
    %45 = vector.broadcast %cst_22 : f32 to vector<128x32xf32>
    %46 = arith.mulf %45, %42 : vector<128x32xf32>
    %47 = arith.select %44, %42, %46 : vector<128x32xi1>, vector<128x32xf32>
    %c144 = arith.constant 144 : index
    %c0_23 = arith.constant 0 : index
    %48 = vector.load %arg1[%c144, %c0_23] : memref<264x128xf32, #tpu.memory_space<vmem>>, vector<32x32xf32>
    %cst_24 = arith.constant dense<0.000000e+00> : vector<128x32xf32>
    %49 = tpu.matmul %47, %48, %cst_24 {dimension_numbers = #tpu.dot_dimension_numbers<[1], [0], [0], [1], [0, 0, 1, 1], [], []>} : vector<128x32xf32>, vector<32x32xf32>, vector<128x32xf32> -> vector<128x32xf32>
    %50 = vector.shape_cast %13 : vector<32xf32> to vector<1x32xf32>
    %51 = vector.broadcast %50 : vector<1x32xf32> to vector<128x32xf32>
    %52 = arith.addf %49, %51 : vector<128x32xf32>
    %cst_25 = arith.constant 0.000000e+00 : f32
    %53 = vector.broadcast %cst_25 : f32 to vector<128x32xf32>
    %54 = arith.cmpf oge, %52, %53 : vector<128x32xf32>
    %cst_26 = arith.constant 1.000000e-01 : f32
    %55 = vector.broadcast %cst_26 : f32 to vector<128x32xf32>
    %56 = arith.mulf %55, %52 : vector<128x32xf32>
    %57 = arith.select %54, %52, %56 : vector<128x32xi1>, vector<128x32xf32>
    %c144_27 = arith.constant 144 : index
    %c0_28 = arith.constant 0 : index
    %58 = vector.load %arg1[%c144_27, %c0_28] : memref<264x128xf32, #tpu.memory_space<vmem>>, vector<32x32xf32>
    %cst_29 = arith.constant dense<0.000000e+00> : vector<128x32xf32>
    %59 = tpu.matmul %57, %58, %cst_29 {dimension_numbers = #tpu.dot_dimension_numbers<[1], [0], [0], [1], [0, 0, 1, 1], [], []>} : vector<128x32xf32>, vector<32x32xf32>, vector<128x32xf32> -> vector<128x32xf32>
    %60 = vector.shape_cast %13 : vector<32xf32> to vector<1x32xf32>
    %61 = vector.broadcast %60 : vector<1x32xf32> to vector<128x32xf32>
    %62 = arith.addf %59, %61 : vector<128x32xf32>
    %cst_30 = arith.constant 0.000000e+00 : f32
    %63 = vector.broadcast %cst_30 : f32 to vector<128x32xf32>
    %64 = arith.cmpf oge, %62, %63 : vector<128x32xf32>
    %cst_31 = arith.constant 1.000000e-01 : f32
    %65 = vector.broadcast %cst_31 : f32 to vector<128x32xf32>
    %66 = arith.mulf %65, %62 : vector<128x32xf32>
    %67 = arith.select %64, %62, %66 : vector<128x32xi1>, vector<128x32xf32>
    %c176 = arith.constant 176 : index
    %c0_32 = arith.constant 0 : index
    %68 = vector.load %arg1[%c176, %c0_32] : memref<264x128xf32, #tpu.memory_space<vmem>>, vector<32x16xf32>
    %cst_33 = arith.constant dense<0.000000e+00> : vector<128x16xf32>
    %69 = tpu.matmul %67, %68, %cst_33 {dimension_numbers = #tpu.dot_dimension_numbers<[1], [0], [0], [1], [0, 0, 1, 1], [], []>} : vector<128x32xf32>, vector<32x16xf32>, vector<128x16xf32> -> vector<128x16xf32>
    %70 = vector.shape_cast %15 : vector<16xf32> to vector<1x16xf32>
    %71 = vector.broadcast %70 : vector<1x16xf32> to vector<128x16xf32>
    %72 = arith.addf %69, %71 : vector<128x16xf32>
    %cst_34 = arith.constant 0.000000e+00 : f32
    %73 = vector.broadcast %cst_34 : f32 to vector<128x16xf32>
    %74 = arith.cmpf oge, %72, %73 : vector<128x16xf32>
    %cst_35 = arith.constant 1.000000e-01 : f32
    %75 = vector.broadcast %cst_35 : f32 to vector<128x16xf32>
    %76 = arith.mulf %75, %72 : vector<128x16xf32>
    %77 = arith.select %74, %72, %76 : vector<128x16xi1>, vector<128x16xf32>
    %c208 = arith.constant 208 : index
    %c0_36 = arith.constant 0 : index
    %78 = vector.load %arg1[%c208, %c0_36] : memref<264x128xf32, #tpu.memory_space<vmem>>, vector<16x16xf32>
    %cst_37 = arith.constant dense<0.000000e+00> : vector<128x16xf32>
    %79 = tpu.matmul %77, %78, %cst_37 {dimension_numbers = #tpu.dot_dimension_numbers<[1], [0], [0], [1], [0, 0, 1, 1], [], []>} : vector<128x16xf32>, vector<16x16xf32>, vector<128x16xf32> -> vector<128x16xf32>
    %80 = vector.shape_cast %17 : vector<16xf32> to vector<1x16xf32>
    %81 = vector.broadcast %80 : vector<1x16xf32> to vector<128x16xf32>
    %82 = arith.addf %79, %81 : vector<128x16xf32>
    %cst_38 = arith.constant 0.000000e+00 : f32
    %83 = vector.broadcast %cst_38 : f32 to vector<128x16xf32>
    %84 = arith.cmpf oge, %82, %83 : vector<128x16xf32>
    %cst_39 = arith.constant 1.000000e-01 : f32
    %85 = vector.broadcast %cst_39 : f32 to vector<128x16xf32>
    %86 = arith.mulf %85, %82 : vector<128x16xf32>
    %87 = arith.select %84, %82, %86 : vector<128x16xi1>, vector<128x16xf32>
    %c208_40 = arith.constant 208 : index
    %c0_41 = arith.constant 0 : index
    %88 = vector.load %arg1[%c208_40, %c0_41] : memref<264x128xf32, #tpu.memory_space<vmem>>, vector<16x16xf32>
    %cst_42 = arith.constant dense<0.000000e+00> : vector<128x16xf32>
    %89 = tpu.matmul %87, %88, %cst_42 {dimension_numbers = #tpu.dot_dimension_numbers<[1], [0], [0], [1], [0, 0, 1, 1], [], []>} : vector<128x16xf32>, vector<16x16xf32>, vector<128x16xf32> -> vector<128x16xf32>
    %90 = vector.shape_cast %17 : vector<16xf32> to vector<1x16xf32>
    %91 = vector.broadcast %90 : vector<1x16xf32> to vector<128x16xf32>
    %92 = arith.addf %89, %91 : vector<128x16xf32>
    %cst_43 = arith.constant 0.000000e+00 : f32
    %93 = vector.broadcast %cst_43 : f32 to vector<128x16xf32>
    %94 = arith.cmpf oge, %92, %93 : vector<128x16xf32>
    %cst_44 = arith.constant 1.000000e-01 : f32
    %95 = vector.broadcast %cst_44 : f32 to vector<128x16xf32>
    %96 = arith.mulf %95, %92 : vector<128x16xf32>
    %97 = arith.select %94, %92, %96 : vector<128x16xi1>, vector<128x16xf32>
    %c224 = arith.constant 224 : index
    %c0_45 = arith.constant 0 : index
    %98 = vector.load %arg1[%c224, %c0_45] : memref<264x128xf32, #tpu.memory_space<vmem>>, vector<16x36xf32>
    %cst_46 = arith.constant dense<0.000000e+00> : vector<128x36xf32>
    %99 = tpu.matmul %97, %98, %cst_46 {dimension_numbers = #tpu.dot_dimension_numbers<[1], [0], [0], [1], [0, 0, 1, 1], [], []>} : vector<128x16xf32>, vector<16x36xf32>, vector<128x36xf32> -> vector<128x36xf32>
    %100 = vector.shape_cast %99 : vector<128x36xf32> to vector<2x8x8x36xf32>
    %c248 = arith.constant 248 : index
    %c0_47 = arith.constant 0 : index
    %101 = vector.load %arg1[%c248, %c0_47] : memref<264x128xf32, #tpu.memory_space<vmem>>, vector<1x36xf32>
    %102 = vector.shape_cast %101 : vector<1x36xf32> to vector<36xf32>
    %c249 = arith.constant 249 : index
    %c0_48 = arith.constant 0 : index
    %103 = vector.load %arg1[%c249, %c0_48] : memref<264x128xf32, #tpu.memory_space<vmem>>, vector<1x36xf32>
    %104 = vector.shape_cast %103 : vector<1x36xf32> to vector<36xf32>
    %c250 = arith.constant 250 : index
    %c0_49 = arith.constant 0 : index
    %105 = vector.load %arg1[%c250, %c0_49] : memref<264x128xf32, #tpu.memory_space<vmem>>, vector<1x36xf32>
    %106 = vector.shape_cast %105 : vector<1x36xf32> to vector<36xf32>
    %c251 = arith.constant 251 : index
    %c0_50 = arith.constant 0 : index
    %107 = vector.load %arg1[%c251, %c0_50] : memref<264x128xf32, #tpu.memory_space<vmem>>, vector<1x36xf32>
    %108 = vector.shape_cast %107 : vector<1x36xf32> to vector<36xf32>
    %c252 = arith.constant 252 : index
    %c0_51 = arith.constant 0 : index
    %109 = vector.load %arg1[%c252, %c0_51] : memref<264x128xf32, #tpu.memory_space<vmem>>, vector<1x36xf32>
    %110 = vector.shape_cast %109 : vector<1x36xf32> to vector<36xf32>
    %c253 = arith.constant 253 : index
    %c0_52 = arith.constant 0 : index
    %111 = vector.load %arg1[%c253, %c0_52] : memref<264x128xf32, #tpu.memory_space<vmem>>, vector<1x36xf32>
    %112 = vector.shape_cast %111 : vector<1x36xf32> to vector<36xf32>
    %c254 = arith.constant 254 : index
    %c0_53 = arith.constant 0 : index
    %113 = vector.load %arg1[%c254, %c0_53] : memref<264x128xf32, #tpu.memory_space<vmem>>, vector<1x36xf32>
    %114 = vector.shape_cast %113 : vector<1x36xf32> to vector<36xf32>
    %c255 = arith.constant 255 : index
    %c0_54 = arith.constant 0 : index
    %115 = vector.load %arg1[%c255, %c0_54] : memref<264x128xf32, #tpu.memory_space<vmem>>, vector<1x36xf32>
    %116 = vector.shape_cast %115 : vector<1x36xf32> to vector<36xf32>
    %c256 = arith.constant 256 : index
    %c0_55 = arith.constant 0 : index
    %117 = vector.load %arg1[%c256, %c0_55] : memref<264x128xf32, #tpu.memory_space<vmem>>, vector<1x36xf32>
    %118 = vector.shape_cast %117 : vector<1x36xf32> to vector<36xf32>
    %c0_56 = arith.constant 0 : index
    %c0_57 = arith.constant 0 : index
    %119 = memref.load %arg2[%c0_56, %c0_57] : memref<1x1xf32, #tpu.memory_space<smem>>
    %cst_58 = arith.constant 0.000000e+00 : f32
    %120 = vector.broadcast %cst_58 : f32 to vector<6x6x36xf32>
    %121 = vector.extract_strided_slice %100 {offsets = [0, 0, 0, 0], sizes = [1, 6, 6, 36], strides = [1, 1, 1, 1]} : vector<2x8x8x36xf32> to vector<1x6x6x36xf32>
    %122 = vector.shape_cast %121 : vector<1x6x6x36xf32> to vector<6x6x36xf32>
    %123 = vector.shape_cast %102 : vector<36xf32> to vector<1x1x36xf32>
    %124 = vector.broadcast %123 : vector<1x1x36xf32> to vector<6x6x36xf32>
    %125 = arith.mulf %122, %124 : vector<6x6x36xf32>
    %126 = arith.addf %120, %125 : vector<6x6x36xf32>
    %127 = vector.extract_strided_slice %100 {offsets = [0, 0, 1, 0], sizes = [1, 6, 6, 36], strides = [1, 1, 1, 1]} : vector<2x8x8x36xf32> to vector<1x6x6x36xf32>
    %128 = vector.shape_cast %127 : vector<1x6x6x36xf32> to vector<6x6x36xf32>
    %129 = vector.shape_cast %104 : vector<36xf32> to vector<1x1x36xf32>
    %130 = vector.broadcast %129 : vector<1x1x36xf32> to vector<6x6x36xf32>
    %131 = arith.mulf %128, %130 : vector<6x6x36xf32>
    %132 = arith.addf %126, %131 : vector<6x6x36xf32>
    %133 = vector.extract_strided_slice %100 {offsets = [0, 0, 2, 0], sizes = [1, 6, 6, 36], strides = [1, 1, 1, 1]} : vector<2x8x8x36xf32> to vector<1x6x6x36xf32>
    %134 = vector.shape_cast %133 : vector<1x6x6x36xf32> to vector<6x6x36xf32>
    %135 = vector.shape_cast %106 : vector<36xf32> to vector<1x1x36xf32>
    %136 = vector.broadcast %135 : vector<1x1x36xf32> to vector<6x6x36xf32>
    %137 = arith.mulf %134, %136 : vector<6x6x36xf32>
    %138 = arith.addf %132, %137 : vector<6x6x36xf32>
    %139 = vector.extract_strided_slice %100 {offsets = [0, 1, 0, 0], sizes = [1, 6, 6, 36], strides = [1, 1, 1, 1]} : vector<2x8x8x36xf32> to vector<1x6x6x36xf32>
    %140 = vector.shape_cast %139 : vector<1x6x6x36xf32> to vector<6x6x36xf32>
    %141 = vector.shape_cast %108 : vector<36xf32> to vector<1x1x36xf32>
    %142 = vector.broadcast %141 : vector<1x1x36xf32> to vector<6x6x36xf32>
    %143 = arith.mulf %140, %142 : vector<6x6x36xf32>
    %144 = arith.addf %138, %143 : vector<6x6x36xf32>
    %145 = vector.extract_strided_slice %100 {offsets = [0, 1, 1, 0], sizes = [1, 6, 6, 36], strides = [1, 1, 1, 1]} : vector<2x8x8x36xf32> to vector<1x6x6x36xf32>
    %146 = vector.shape_cast %145 : vector<1x6x6x36xf32> to vector<6x6x36xf32>
    %147 = vector.shape_cast %110 : vector<36xf32> to vector<1x1x36xf32>
    %148 = vector.broadcast %147 : vector<1x1x36xf32> to vector<6x6x36xf32>
    %149 = arith.mulf %146, %148 : vector<6x6x36xf32>
    %150 = arith.addf %144, %149 : vector<6x6x36xf32>
    %151 = vector.extract_strided_slice %100 {offsets = [0, 1, 2, 0], sizes = [1, 6, 6, 36], strides = [1, 1, 1, 1]} : vector<2x8x8x36xf32> to vector<1x6x6x36xf32>
    %152 = vector.shape_cast %151 : vector<1x6x6x36xf32> to vector<6x6x36xf32>
    %153 = vector.shape_cast %112 : vector<36xf32> to vector<1x1x36xf32>
    %154 = vector.broadcast %153 : vector<1x1x36xf32> to vector<6x6x36xf32>
    %155 = arith.mulf %152, %154 : vector<6x6x36xf32>
    %156 = arith.addf %150, %155 : vector<6x6x36xf32>
    %157 = vector.extract_strided_slice %100 {offsets = [0, 2, 0, 0], sizes = [1, 6, 6, 36], strides = [1, 1, 1, 1]} : vector<2x8x8x36xf32> to vector<1x6x6x36xf32>
    %158 = vector.shape_cast %157 : vector<1x6x6x36xf32> to vector<6x6x36xf32>
    %159 = vector.shape_cast %114 : vector<36xf32> to vector<1x1x36xf32>
    %160 = vector.broadcast %159 : vector<1x1x36xf32> to vector<6x6x36xf32>
    %161 = arith.mulf %158, %160 : vector<6x6x36xf32>
    %162 = arith.addf %156, %161 : vector<6x6x36xf32>
    %163 = vector.extract_strided_slice %100 {offsets = [0, 2, 1, 0], sizes = [1, 6, 6, 36], strides = [1, 1, 1, 1]} : vector<2x8x8x36xf32> to vector<1x6x6x36xf32>
    %164 = vector.shape_cast %163 : vector<1x6x6x36xf32> to vector<6x6x36xf32>
    %165 = vector.shape_cast %116 : vector<36xf32> to vector<1x1x36xf32>
    %166 = vector.broadcast %165 : vector<1x1x36xf32> to vector<6x6x36xf32>
    %167 = arith.mulf %164, %166 : vector<6x6x36xf32>
    %168 = arith.addf %162, %167 : vector<6x6x36xf32>
    %169 = vector.extract_strided_slice %100 {offsets = [0, 2, 2, 0], sizes = [1, 6, 6, 36], strides = [1, 1, 1, 1]} : vector<2x8x8x36xf32> to vector<1x6x6x36xf32>
    %170 = vector.shape_cast %169 : vector<1x6x6x36xf32> to vector<6x6x36xf32>
    %171 = vector.shape_cast %118 : vector<36xf32> to vector<1x1x36xf32>
    %172 = vector.broadcast %171 : vector<1x1x36xf32> to vector<6x6x36xf32>
    %173 = arith.mulf %170, %172 : vector<6x6x36xf32>
    %174 = arith.addf %168, %173 : vector<6x6x36xf32>
    %175 = vector.extract_strided_slice %174 {offsets = [0, 0, 0], sizes = [6, 6, 9], strides = [1, 1, 1]} : vector<6x6x36xf32> to vector<6x6x9xf32>
    %cst_59 = arith.constant dense<0.000000e+00> : vector<6x6xf32>
    %176 = vector.multi_reduction <add>, %175, %cst_59 [2] : vector<6x6x9xf32> to vector<6x6xf32>
    %177 = vector.broadcast %119 : f32 to vector<6x6xf32>
    %178 = arith.addf %176, %177 : vector<6x6xf32>
    %179 = arith.negf %178 : vector<6x6xf32>
    %180 = math.exp %179 : vector<6x6xf32>
    %cst_60 = arith.constant 1.000000e+00 : f32
    %181 = vector.broadcast %cst_60 : f32 to vector<6x6xf32>
    %182 = arith.addf %181, %180 : vector<6x6xf32>
    %183 = arith.divf %181, %182 : vector<6x6xf32>
    %184 = vector.extract_strided_slice %174 {offsets = [0, 0, 9], sizes = [6, 6, 9], strides = [1, 1, 1]} : vector<6x6x36xf32> to vector<6x6x9xf32>
    %cst_61 = arith.constant dense<0.000000e+00> : vector<6x6xf32>
    %185 = vector.multi_reduction <add>, %184, %cst_61 [2] : vector<6x6x9xf32> to vector<6x6xf32>
    %186 = vector.broadcast %119 : f32 to vector<6x6xf32>
    %187 = arith.addf %185, %186 : vector<6x6xf32>
    %188 = arith.negf %187 : vector<6x6xf32>
    %189 = math.exp %188 : vector<6x6xf32>
    %cst_62 = arith.constant 1.000000e+00 : f32
    %190 = vector.broadcast %cst_62 : f32 to vector<6x6xf32>
    %191 = arith.addf %190, %189 : vector<6x6xf32>
    %192 = arith.divf %190, %191 : vector<6x6xf32>
    %193 = vector.extract_strided_slice %174 {offsets = [0, 0, 18], sizes = [6, 6, 9], strides = [1, 1, 1]} : vector<6x6x36xf32> to vector<6x6x9xf32>
    %cst_63 = arith.constant dense<0.000000e+00> : vector<6x6xf32>
    %194 = vector.multi_reduction <add>, %193, %cst_63 [2] : vector<6x6x9xf32> to vector<6x6xf32>
    %195 = vector.broadcast %119 : f32 to vector<6x6xf32>
    %196 = arith.addf %194, %195 : vector<6x6xf32>
    %197 = arith.negf %196 : vector<6x6xf32>
    %198 = math.exp %197 : vector<6x6xf32>
    %cst_64 = arith.constant 1.000000e+00 : f32
    %199 = vector.broadcast %cst_64 : f32 to vector<6x6xf32>
    %200 = arith.addf %199, %198 : vector<6x6xf32>
    %201 = arith.divf %199, %200 : vector<6x6xf32>
    %202 = vector.extract_strided_slice %174 {offsets = [0, 0, 27], sizes = [6, 6, 9], strides = [1, 1, 1]} : vector<6x6x36xf32> to vector<6x6x9xf32>
    %cst_65 = arith.constant dense<0.000000e+00> : vector<6x6xf32>
    %203 = vector.multi_reduction <add>, %202, %cst_65 [2] : vector<6x6x9xf32> to vector<6x6xf32>
    %204 = vector.broadcast %119 : f32 to vector<6x6xf32>
    %205 = arith.addf %203, %204 : vector<6x6xf32>
    %206 = arith.negf %205 : vector<6x6xf32>
    %207 = math.exp %206 : vector<6x6xf32>
    %cst_66 = arith.constant 1.000000e+00 : f32
    %208 = vector.broadcast %cst_66 : f32 to vector<6x6xf32>
    %209 = arith.addf %208, %207 : vector<6x6xf32>
    %210 = arith.divf %208, %209 : vector<6x6xf32>
    %cst_67 = arith.constant 0.000000e+00 : f32
    %211 = vector.broadcast %cst_67 : f32 to vector<6x6x36xf32>
    %212 = vector.extract_strided_slice %100 {offsets = [1, 0, 0, 0], sizes = [1, 6, 6, 36], strides = [1, 1, 1, 1]} : vector<2x8x8x36xf32> to vector<1x6x6x36xf32>
    %213 = vector.shape_cast %212 : vector<1x6x6x36xf32> to vector<6x6x36xf32>
    %214 = vector.shape_cast %102 : vector<36xf32> to vector<1x1x36xf32>
    %215 = vector.broadcast %214 : vector<1x1x36xf32> to vector<6x6x36xf32>
    %216 = arith.mulf %213, %215 : vector<6x6x36xf32>
    %217 = arith.addf %211, %216 : vector<6x6x36xf32>
    %218 = vector.extract_strided_slice %100 {offsets = [1, 0, 1, 0], sizes = [1, 6, 6, 36], strides = [1, 1, 1, 1]} : vector<2x8x8x36xf32> to vector<1x6x6x36xf32>
    %219 = vector.shape_cast %218 : vector<1x6x6x36xf32> to vector<6x6x36xf32>
    %220 = vector.shape_cast %104 : vector<36xf32> to vector<1x1x36xf32>
    %221 = vector.broadcast %220 : vector<1x1x36xf32> to vector<6x6x36xf32>
    %222 = arith.mulf %219, %221 : vector<6x6x36xf32>
    %223 = arith.addf %217, %222 : vector<6x6x36xf32>
    %224 = vector.extract_strided_slice %100 {offsets = [1, 0, 2, 0], sizes = [1, 6, 6, 36], strides = [1, 1, 1, 1]} : vector<2x8x8x36xf32> to vector<1x6x6x36xf32>
    %225 = vector.shape_cast %224 : vector<1x6x6x36xf32> to vector<6x6x36xf32>
    %226 = vector.shape_cast %106 : vector<36xf32> to vector<1x1x36xf32>
    %227 = vector.broadcast %226 : vector<1x1x36xf32> to vector<6x6x36xf32>
    %228 = arith.mulf %225, %227 : vector<6x6x36xf32>
    %229 = arith.addf %223, %228 : vector<6x6x36xf32>
    %230 = vector.extract_strided_slice %100 {offsets = [1, 1, 0, 0], sizes = [1, 6, 6, 36], strides = [1, 1, 1, 1]} : vector<2x8x8x36xf32> to vector<1x6x6x36xf32>
    %231 = vector.shape_cast %230 : vector<1x6x6x36xf32> to vector<6x6x36xf32>
    %232 = vector.shape_cast %108 : vector<36xf32> to vector<1x1x36xf32>
    %233 = vector.broadcast %232 : vector<1x1x36xf32> to vector<6x6x36xf32>
    %234 = arith.mulf %231, %233 : vector<6x6x36xf32>
    %235 = arith.addf %229, %234 : vector<6x6x36xf32>
    %236 = vector.extract_strided_slice %100 {offsets = [1, 1, 1, 0], sizes = [1, 6, 6, 36], strides = [1, 1, 1, 1]} : vector<2x8x8x36xf32> to vector<1x6x6x36xf32>
    %237 = vector.shape_cast %236 : vector<1x6x6x36xf32> to vector<6x6x36xf32>
    %238 = vector.shape_cast %110 : vector<36xf32> to vector<1x1x36xf32>
    %239 = vector.broadcast %238 : vector<1x1x36xf32> to vector<6x6x36xf32>
    %240 = arith.mulf %237, %239 : vector<6x6x36xf32>
    %241 = arith.addf %235, %240 : vector<6x6x36xf32>
    %242 = vector.extract_strided_slice %100 {offsets = [1, 1, 2, 0], sizes = [1, 6, 6, 36], strides = [1, 1, 1, 1]} : vector<2x8x8x36xf32> to vector<1x6x6x36xf32>
    %243 = vector.shape_cast %242 : vector<1x6x6x36xf32> to vector<6x6x36xf32>
    %244 = vector.shape_cast %112 : vector<36xf32> to vector<1x1x36xf32>
    %245 = vector.broadcast %244 : vector<1x1x36xf32> to vector<6x6x36xf32>
    %246 = arith.mulf %243, %245 : vector<6x6x36xf32>
    %247 = arith.addf %241, %246 : vector<6x6x36xf32>
    %248 = vector.extract_strided_slice %100 {offsets = [1, 2, 0, 0], sizes = [1, 6, 6, 36], strides = [1, 1, 1, 1]} : vector<2x8x8x36xf32> to vector<1x6x6x36xf32>
    %249 = vector.shape_cast %248 : vector<1x6x6x36xf32> to vector<6x6x36xf32>
    %250 = vector.shape_cast %114 : vector<36xf32> to vector<1x1x36xf32>
    %251 = vector.broadcast %250 : vector<1x1x36xf32> to vector<6x6x36xf32>
    %252 = arith.mulf %249, %251 : vector<6x6x36xf32>
    %253 = arith.addf %247, %252 : vector<6x6x36xf32>
    %254 = vector.extract_strided_slice %100 {offsets = [1, 2, 1, 0], sizes = [1, 6, 6, 36], strides = [1, 1, 1, 1]} : vector<2x8x8x36xf32> to vector<1x6x6x36xf32>
    %255 = vector.shape_cast %254 : vector<1x6x6x36xf32> to vector<6x6x36xf32>
    %256 = vector.shape_cast %116 : vector<36xf32> to vector<1x1x36xf32>
    %257 = vector.broadcast %256 : vector<1x1x36xf32> to vector<6x6x36xf32>
    %258 = arith.mulf %255, %257 : vector<6x6x36xf32>
    %259 = arith.addf %253, %258 : vector<6x6x36xf32>
    %260 = vector.extract_strided_slice %100 {offsets = [1, 2, 2, 0], sizes = [1, 6, 6, 36], strides = [1, 1, 1, 1]} : vector<2x8x8x36xf32> to vector<1x6x6x36xf32>
    %261 = vector.shape_cast %260 : vector<1x6x6x36xf32> to vector<6x6x36xf32>
    %262 = vector.shape_cast %118 : vector<36xf32> to vector<1x1x36xf32>
    %263 = vector.broadcast %262 : vector<1x1x36xf32> to vector<6x6x36xf32>
    %264 = arith.mulf %261, %263 : vector<6x6x36xf32>
    %265 = arith.addf %259, %264 : vector<6x6x36xf32>
    %266 = vector.extract_strided_slice %265 {offsets = [0, 0, 0], sizes = [6, 6, 9], strides = [1, 1, 1]} : vector<6x6x36xf32> to vector<6x6x9xf32>
    %cst_68 = arith.constant dense<0.000000e+00> : vector<6x6xf32>
    %267 = vector.multi_reduction <add>, %266, %cst_68 [2] : vector<6x6x9xf32> to vector<6x6xf32>
    %268 = vector.broadcast %119 : f32 to vector<6x6xf32>
    %269 = arith.addf %267, %268 : vector<6x6xf32>
    %270 = arith.negf %269 : vector<6x6xf32>
    %271 = math.exp %270 : vector<6x6xf32>
    %cst_69 = arith.constant 1.000000e+00 : f32
    %272 = vector.broadcast %cst_69 : f32 to vector<6x6xf32>
    %273 = arith.addf %272, %271 : vector<6x6xf32>
    %274 = arith.divf %272, %273 : vector<6x6xf32>
    %275 = vector.extract_strided_slice %265 {offsets = [0, 0, 9], sizes = [6, 6, 9], strides = [1, 1, 1]} : vector<6x6x36xf32> to vector<6x6x9xf32>
    %cst_70 = arith.constant dense<0.000000e+00> : vector<6x6xf32>
    %276 = vector.multi_reduction <add>, %275, %cst_70 [2] : vector<6x6x9xf32> to vector<6x6xf32>
    %277 = vector.broadcast %119 : f32 to vector<6x6xf32>
    %278 = arith.addf %276, %277 : vector<6x6xf32>
    %279 = arith.negf %278 : vector<6x6xf32>
    %280 = math.exp %279 : vector<6x6xf32>
    %cst_71 = arith.constant 1.000000e+00 : f32
    %281 = vector.broadcast %cst_71 : f32 to vector<6x6xf32>
    %282 = arith.addf %281, %280 : vector<6x6xf32>
    %283 = arith.divf %281, %282 : vector<6x6xf32>
    %284 = vector.extract_strided_slice %265 {offsets = [0, 0, 18], sizes = [6, 6, 9], strides = [1, 1, 1]} : vector<6x6x36xf32> to vector<6x6x9xf32>
    %cst_72 = arith.constant dense<0.000000e+00> : vector<6x6xf32>
    %285 = vector.multi_reduction <add>, %284, %cst_72 [2] : vector<6x6x9xf32> to vector<6x6xf32>
    %286 = vector.broadcast %119 : f32 to vector<6x6xf32>
    %287 = arith.addf %285, %286 : vector<6x6xf32>
    %288 = arith.negf %287 : vector<6x6xf32>
    %289 = math.exp %288 : vector<6x6xf32>
    %cst_73 = arith.constant 1.000000e+00 : f32
    %290 = vector.broadcast %cst_73 : f32 to vector<6x6xf32>
    %291 = arith.addf %290, %289 : vector<6x6xf32>
    %292 = arith.divf %290, %291 : vector<6x6xf32>
    %293 = vector.extract_strided_slice %265 {offsets = [0, 0, 27], sizes = [6, 6, 9], strides = [1, 1, 1]} : vector<6x6x36xf32> to vector<6x6x9xf32>
    %cst_74 = arith.constant dense<0.000000e+00> : vector<6x6xf32>
    %294 = vector.multi_reduction <add>, %293, %cst_74 [2] : vector<6x6x9xf32> to vector<6x6xf32>
    %295 = vector.broadcast %119 : f32 to vector<6x6xf32>
    %296 = arith.addf %294, %295 : vector<6x6xf32>
    %297 = arith.negf %296 : vector<6x6xf32>
    %298 = math.exp %297 : vector<6x6xf32>
    %cst_75 = arith.constant 1.000000e+00 : f32
    %299 = vector.broadcast %cst_75 : f32 to vector<6x6xf32>
    %300 = arith.addf %299, %298 : vector<6x6xf32>
    %301 = arith.divf %299, %300 : vector<6x6xf32>
    %302 = vector.shape_cast %183 : vector<6x6xf32> to vector<1x6x6xf32>
    %303 = vector.shape_cast %192 : vector<6x6xf32> to vector<1x6x6xf32>
    %304 = vector.shape_cast %201 : vector<6x6xf32> to vector<1x6x6xf32>
    %305 = vector.shape_cast %210 : vector<6x6xf32> to vector<1x6x6xf32>
    %306 = vector.shape_cast %274 : vector<6x6xf32> to vector<1x6x6xf32>
    %307 = vector.shape_cast %283 : vector<6x6xf32> to vector<1x6x6xf32>
    %308 = vector.shape_cast %292 : vector<6x6xf32> to vector<1x6x6xf32>
    %309 = vector.shape_cast %301 : vector<6x6xf32> to vector<1x6x6xf32>
    %310 = tpu.concatenate %302, %303, %304, %305, %306, %307, %308, %309 in 0 : vector<1x6x6xf32>, vector<1x6x6xf32>, vector<1x6x6xf32>, vector<1x6x6xf32>, vector<1x6x6xf32>, vector<1x6x6xf32>, vector<1x6x6xf32>, vector<1x6x6xf32> -> vector<8x6x6xf32>
    %311 = vector.shape_cast %310 : vector<8x6x6xf32> to vector<2x4x6x6xf32>
    %c0_76 = arith.constant 0 : index
    %c0_77 = arith.constant 0 : index
    %c0_78 = arith.constant 0 : index
    %c0_79 = arith.constant 0 : index
    %312 = vector.load %arg3[%c0_76, %c0_77, %c0_78, %c0_79] : memref<2x4x6x6xf32, #tpu.memory_space<vmem>>, vector<2x4x6x6xf32>
    tpu.vector_store %arg3[%c0_76, %c0_77, %c0_78, %c0_79], %311 {strides = array<i32>} : memref<2x4x6x6xf32, #tpu.memory_space<vmem>>, vector<2x4x6x6xf32>,
    return
  }
}

</mosaic_0001>

<llo_original>
// kernel: generator_forward.1
$region0: #{generator_forward.1}
  #allocation0 [shape = 'u32[]', space=smem, size = 0x4, offset = 0x4, fixed_abs, tag = 'smem constant byte address 0x4 - core index']
  #allocation1 [shape = 'u32[144,128]{1,0:T(1,128)}', space=vmem, size = 0x12000, scoped, tag = 'internal scratch']
  #allocation2 [shape = 'f32[1,1]{1,0:T(1,128)S(6)}', space=smem, size = 0x200, scoped, tag = 'scoped memory for generator_forward.1']
  %s0 = inlined_call_operand.vmem [shape: f32[128,16], index: 0, kind: input, shape index: {}]
  %s1 = inlined_call_operand.vmem [shape: f32[264,128], index: 1, kind: input, shape index: {}]
  %s2 = inlined_call_operand.<no memory space> [shape: f32[1,1], index: 2, kind: input, shape index: {}]
  %s3 = inlined_call_operand.vmem [shape: f32[2,4,6,6], index: 3, kind: output, shape index: {}]
  %s4 = sld [smem:[#allocation0]]
  $region22: #{generator_forward.1} parent=0
    _
  %s6 = ssub.s32 1, %s4
  %s7 = scalar_select 0, %s6, %s4
  %8 = sst [smem:[#allocation2]] %s2
  // Predicated region
  $region2: #{generator_forward.1} parent=0 // pred_check
    _
  $region3: #{generator_forward.1} parent=0 // pred_check_branch
    %10 = sbr.rel (0) target = $region5
  $region4: #{generator_forward.1} parent=0 // pred_region
    _
  $region5: #{generator_forward.1} parent=0 // pred_fallthru
    _
  // Predicated region
  $region6: #{generator_forward.1} parent=0 // pred_check
    _
  $region7: #{generator_forward.1} parent=0 // pred_check_branch
    %12 = sbr.rel (0) target = $region9
  $region8: #{generator_forward.1} parent=0 // pred_region
    _
  $region9: #{generator_forward.1} parent=0 // pred_fallthru
    _
  // Predicated region
  $region10: #{generator_forward.1} parent=0 // pred_check
    _
  $region11: #{generator_forward.1} parent=0 // pred_check_branch
    %14 = sbr.rel (0) target = $region13
  $region12: #{generator_forward.1} parent=0 // pred_region
    _
  $region13: #{generator_forward.1} parent=0 // pred_fallthru
    _
  %v15 = vld [vmem:[%s0] sm:$0xff]
  %v16 = vld [vmem:[%s0 + $0x8] sm:$0xff]
  %v17 = vld [vmem:[%s0 + $0x10] sm:$0xff]
  %v18 = vld [vmem:[%s0 + $0x18] sm:$0xff]
  %v19 = vld [vmem:[%s0 + $0x20] sm:$0xff]
  %v20 = vld [vmem:[%s0 + $0x28] sm:$0xff]
  %v21 = vld [vmem:[%s0 + $0x30] sm:$0xff]
  %v22 = vld [vmem:[%s0 + $0x38] sm:$0xff]
  %v23 = vld [vmem:[%s0 + $0x40] sm:$0xff]
  %v24 = vld [vmem:[%s0 + $0x48] sm:$0xff]
  %v25 = vld [vmem:[%s0 + $0x50] sm:$0xff]
  %v26 = vld [vmem:[%s0 + $0x58] sm:$0xff]
  %v27 = vld [vmem:[%s0 + $0x60] sm:$0xff]
  %v28 = vld [vmem:[%s0 + $0x68] sm:$0xff]
  %v29 = vld [vmem:[%s0 + $0x70] sm:$0xff]
  %v30 = vld [vmem:[%s0 + $0x78] sm:$0xff]
  %v31 = vld [vmem:[%s1] sm:$0xff]
  %v32 = vld [vmem:[%s1 + $0x8] sm:$0xff]
  %vm33 = vcmask 130048
  %v35 = vsel %vm33, %v15, 0
  %v38 = vsel %vm33, %v16, 0
  %v41 = vsel %vm33, %v17, 0
  %v44 = vsel %vm33, %v18, 0
  %v47 = vsel %vm33, %v19, 0
  %v50 = vsel %vm33, %v20, 0
  %v53 = vsel %vm33, %v21, 0
  %v56 = vsel %vm33, %v22, 0
  %v59 = vsel %vm33, %v23, 0
  %v62 = vsel %vm33, %v24, 0
  %v65 = vsel %vm33, %v25, 0
  %v68 = vsel %vm33, %v26, 0
  %v71 = vsel %vm33, %v27, 0
  %v74 = vsel %vm33, %v28, 0
  %v77 = vsel %vm33, %v29, 0
  %v80 = vsel %vm33, %v30, 0
  %82 = vmatprep.subr.mxu0 0.0
  %83 = vmatpush1.msra.mxu0 %v31
  %84 = vmatprep.subr.mxu0 0.0
  %85 = vmatpush1.msra.mxu0 %v32
  %86 = vmatprep.subr.mxu0 0.0
  %87 = vmatpush1.msra.mxu0 0.0
  %88 = vmatprep.subr.mxu0 0.0
  %89 = vmatpush1.msra.mxu0 0.0
  %90 = vmatprep.subr.mxu0 0.0
  %91 = vmatpush1.msra.mxu0 0.0
  %92 = vmatprep.subr.mxu0 0.0
  %93 = vmatpush1.msra.mxu0 0.0
  %94 = vmatprep.subr.mxu0 0.0
  %95 = vmatpush1.msra.mxu0 0.0
  %96 = vmatprep.subr.mxu0 0.0
  %97 = vmatpush1.msra.mxu0 0.0
  %98 = vmatprep.subr.mxu0 0.0
  %99 = vmatpush1.msra.mxu0 0.0
  %100 = vmatprep.subr.mxu0 0.0
  %101 = vmatpush1.msra.mxu0 0.0
  %102 = vmatprep.subr.mxu0 0.0
  %103 = vmatpush1.msra.mxu0 0.0
  %104 = vmatprep.subr.mxu0 0.0
  %105 = vmatpush1.msra.mxu0 0.0
  %106 = vmatprep.subr.mxu0 0.0
  %107 = vmatpush1.msra.mxu0 0.0
  %108 = vmatprep.subr.mxu0 0.0
  %109 = vmatpush1.msra.mxu0 0.0
  %110 = vmatprep.subr.mxu0 0.0
  %111 = vmatpush1.msra.mxu0 0.0
  %112 = vmatprep.subr.mxu0 0.0
  %113 = vmatpush1.msra.mxu0 0.0
  %114 = vmatprep.subr.mxu0 0.0
  %115 = vmatpush1.msra.mxu0 0.0
  %116 = vmatprep.subr.mxu0 0.0
  %117 = vmatpush1.msra.mxu0 0.0
  %118 = vmatprep.subr.mxu0 0.0
  %119 = vmatpush1.msra.mxu0 0.0
  %120 = vmatprep.subr.mxu0 0.0
  %121 = vmatpush1.msra.mxu0 0.0
  %122 = vmatprep.subr.mxu0 0.0
  %123 = vmatpush1.msra.mxu0 0.0
  %124 = vmatprep.subr.mxu0 0.0
  %125 = vmatpush1.msra.mxu0 0.0
  %126 = vmatprep.subr.mxu0 0.0
  %127 = vmatpush1.msra.mxu0 0.0
  %128 = vmatprep.subr.mxu0 0.0
  %129 = vmatpush1.msra.mxu0 0.0
  %130 = vmatprep.subr.mxu0 0.0
  %131 = vmatpush1.msra.mxu0 0.0
  %132 = vmatprep.subr.mxu0 0.0
  %133 = vmatpush1.msra.mxu0 0.0
  %134 = vmatprep.subr.mxu0 0.0
  %135 = vmatpush1.msra.mxu0 0.0
  %136 = vmatprep.subr.mxu0 0.0
  %137 = vmatpush1.msra.mxu0 0.0
  %138 = vmatprep.subr.mxu0 0.0
  %139 = vmatpush1.msra.mxu0 0.0
  %140 = vmatprep.subr.mxu0 0.0
  %141 = vmatpush1.msra.mxu0 0.0
  %142 = vmatprep.subr.mxu0 0.0
  %143 = vmatpush1.msra.mxu0 0.0
  %144 = vmatprep.subr.mxu0 0.0
  %145 = vmatpush1.msra.mxu0 0.0
  %146 = vmatprep.mubr.f32.mxu0 0.0
  %147 = vmatmul.mubr.f32.gmra.mrb[0].mxu0 %v35
  %v148 = vpop.f32.mrb[0].mxu0
  %v149 = vadd.f32 0.0, %v148
  %v150 = vpop.f32.mrb[0].mxu0
  %151 = vmatprep.mubr.f32.mxu0 0.0
  %152 = vmatmul.mubr.f32.gmra.mrb[0].mxu0 %v38
  %v153 = vpop.f32.mrb[0].mxu0
  %v154 = vadd.f32 0.0, %v153
  %v155 = vpop.f32.mrb[0].mxu0
  %156 = vmatprep.mubr.f32.mxu0 0.0
  %157 = vmatmul.mubr.f32.gmra.mrb[0].mxu0 %v41
  %v158 = vpop.f32.mrb[0].mxu0
  %v159 = vadd.f32 0.0, %v158
  %v160 = vpop.f32.mrb[0].mxu0
  %161 = vmatprep.mubr.f32.mxu0 0.0
  %162 = vmatmul.mubr.f32.gmra.mrb[0].mxu0 %v44
  %v163 = vpop.f32.mrb[0].mxu0
  %v164 = vadd.f32 0.0, %v163
  %v165 = vpop.f32.mrb[0].mxu0
  %166 = vmatprep.mubr.f32.mxu0 0.0
  %167 = vmatmul.mubr.f32.gmra.mrb[0].mxu0 %v47
  %v168 = vpop.f32.mrb[0].mxu0
  %v169 = vadd.f32 0.0, %v168
  %v170 = vpop.f32.mrb[0].mxu0
  %171 = vmatprep.mubr.f32.mxu0 0.0
  %172 = vmatmul.mubr.f32.gmra.mrb[0].mxu0 %v50
  %v173 = vpop.f32.mrb[0].mxu0
  %v174 = vadd.f32 0.0, %v173
  %v175 = vpop.f32.mrb[0].mxu0
  %176 = vmatprep.mubr.f32.mxu0 0.0
  %177 = vmatmul.mubr.f32.gmra.mrb[0].mxu0 %v53
  %v178 = vpop.f32.mrb[0].mxu0
  %v179 = vadd.f32 0.0, %v178
  %v180 = vpop.f32.mrb[0].mxu0
  %181 = vmatprep.mubr.f32.mxu0 0.0
  %182 = vmatmul.mubr.f32.gmra.mrb[0].mxu0 %v56
  %v183 = vpop.f32.mrb[0].mxu0
  %v184 = vadd.f32 0.0, %v183
  %v185 = vpop.f32.mrb[0].mxu0
  %186 = vmatprep.mubr.f32.mxu0 0.0
  %187 = vmatmul.mubr.f32.gmra.mrb[0].mxu0 %v59
  %v188 = vpop.f32.mrb[0].mxu0
  %v189 = vadd.f32 0.0, %v188
  %v190 = vpop.f32.mrb[0].mxu0
  %191 = vmatprep.mubr.f32.mxu0 0.0
  %192 = vmatmul.mubr.f32.gmra.mrb[0].mxu0 %v62
  %v193 = vpop.f32.mrb[0].mxu0
  %v194 = vadd.f32 0.0, %v193
  %v195 = vpop.f32.mrb[0].mxu0
  %196 = vmatprep.mubr.f32.mxu0 0.0
  %197 = vmatmul.mubr.f32.gmra.mrb[0].mxu0 %v65
  %v198 = vpop.f32.mrb[0].mxu0
  %v199 = vadd.f32 0.0, %v198
  %v200 = vpop.f32.mrb[0].mxu0
  %201 = vmatprep.mubr.f32.mxu0 0.0
  %202 = vmatmul.mubr.f32.gmra.mrb[0].mxu0 %v68
  %v203 = vpop.f32.mrb[0].mxu0
  %v204 = vadd.f32 0.0, %v203
  %v205 = vpop.f32.mrb[0].mxu0
  %206 = vmatprep.mubr.f32.mxu0 0.0
  %207 = vmatmul.mubr.f32.gmra.mrb[0].mxu0 %v71
  %v208 = vpop.f32.mrb[0].mxu0
  %v209 = vadd.f32 0.0, %v208
  %v210 = vpop.f32.mrb[0].mxu0
  %211 = vmatprep.mubr.f32.mxu0 0.0
  %212 = vmatmul.mubr.f32.gmra.mrb[0].mxu0 %v74
  %v213 = vpop.f32.mrb[0].mxu0
  %v214 = vadd.f32 0.0, %v213
  %v215 = vpop.f32.mrb[0].mxu0
  %216 = vmatprep.mubr.f32.mxu0 0.0
  %217 = vmatmul.mubr.f32.gmra.mrb[0].mxu0 %v77
  %v218 = vpop.f32.mrb[0].mxu0
  %v219 = vadd.f32 0.0, %v218
  %v220 = vpop.f32.mrb[0].mxu0
  %221 = vmatprep.mubr.f32.mxu0 0.0
  %222 = vmatmul.mubr.f32.gmra.mrb[0].mxu0 %v80
  %v223 = vpop.f32.mrb[0].mxu0
  %v224 = vadd.f32 0.0, %v223
  %v225 = vpop.f32.mrb[0].mxu0
  %226 = vdwg.mxu0
  %vm227 = vcmp.ge.f32.partialorder %v149, 0.0
  %vm228 = vcmp.ge.f32.partialorder %v154, 0.0
  %vm229 = vcmp.ge.f32.partialorder %v159, 0.0
  %vm230 = vcmp.ge.f32.partialorder %v164, 0.0
  %vm231 = vcmp.ge.f32.partialorder %v169, 0.0
  %vm232 = vcmp.ge.f32.partialorder %v174, 0.0
  %vm233 = vcmp.ge.f32.partialorder %v179, 0.0
  %vm234 = vcmp.ge.f32.partialorder %v184, 0.0
  %vm235 = vcmp.ge.f32.partialorder %v189, 0.0
  %vm236 = vcmp.ge.f32.partialorder %v194, 0.0
  %vm237 = vcmp.ge.f32.partialorder %v199, 0.0
  %vm238 = vcmp.ge.f32.partialorder %v204, 0.0
  %vm239 = vcmp.ge.f32.partialorder %v209, 0.0
  %vm240 = vcmp.ge.f32.partialorder %v214, 0.0
  %vm241 = vcmp.ge.f32.partialorder %v219, 0.0
  %vm242 = vcmp.ge.f32.partialorder %v224, 0.0
  %v243 = vmul.f32 %v149, 0.1
  %v244 = vmul.f32 %v154, 0.1
  %v245 = vmul.f32 %v159, 0.1
  %v246 = vmul.f32 %v164, 0.1
  %v247 = vmul.f32 %v169, 0.1
  %v248 = vmul.f32 %v174, 0.1
  %v249 = vmul.f32 %v179, 0.1
  %v250 = vmul.f32 %v184, 0.1
  %v251 = vmul.f32 %v189, 0.1
  %v252 = vmul.f32 %v194, 0.1
  %v253 = vmul.f32 %v199, 0.1
  %v254 = vmul.f32 %v204, 0.1
  %v255 = vmul.f32 %v209, 0.1
  %v256 = vmul.f32 %v214, 0.1
  %v257 = vmul.f32 %v219, 0.1
  %v258 = vmul.f32 %v224, 0.1
  %v259 = vsel %vm227, %v149, %v243
  %v260 = vsel %vm228, %v154, %v244
  %v261 = vsel %vm229, %v159, %v245
  %v262 = vsel %vm230, %v164, %v246
  %v263 = vsel %vm231, %v169, %v247
  %v264 = vsel %vm232, %v174, %v248
  %v265 = vsel %vm233, %v179, %v249
  %v266 = vsel %vm234, %v184, %v250
  %v267 = vsel %vm235, %v189, %v251
  %v268 = vsel %vm236, %v194, %v252
  %v269 = vsel %vm237, %v199, %v253
  %v270 = vsel %vm238, %v204, %v254
  %v271 = vsel %vm239, %v209, %v255
  %v272 = vsel %vm240, %v214, %v256
  %v273 = vsel %vm241, %v219, %v257
  %v274 = vsel %vm242, %v224, %v258
  %v275 = vld [vmem:[%s1 + $0xf0] sm:$0x1]
  %v276 = vld [vmem:[%s1 + $0xf1] sm:$0x1]
  %v277 = vld [vmem:[%s1 + $0xf2] sm:$0x1]
  %v278 = vld [vmem:[%s1 + $0xf3] sm:$0x1]
  %v279 = vld [vmem:[%s1 + $0xf4] sm:$0x1]
  %v280 = vld [vmem:[%s1 + $0x10] sm:$0xff]
  %v281 = vld [vmem:[%s1 + $0x18] sm:$0xff]
  %v282 = vld [vmem:[%s1 + $0x20] sm:$0xff]
  %v283 = vld [vmem:[%s1 + $0x28] sm:$0xff]
  %v284 = vld [vmem:[%s1 + $0x30] sm:$0xff]
  %v285 = vld [vmem:[%s1 + $0x38] sm:$0xff]
  %v286 = vld [vmem:[%s1 + $0x40] sm:$0xff]
  %v287 = vld [vmem:[%s1 + $0x48] sm:$0xff]
  %v288 = vlaneseq
  %v289 = vshrl.u32 %v288, 7
  %v290 = vsub.s32 0, %v289
  %v291 = vrot.slane %v275, %v290
  %vm292 = vcmask 523264
  %v294 = vsel %vm292, %v259, 0
  %v297 = vsel %vm292, %v260, 0
  %v300 = vsel %vm292, %v261, 0
  %v303 = vsel %vm292, %v262, 0
  %v306 = vsel %vm292, %v263, 0
  %v309 = vsel %vm292, %v264, 0
  %v312 = vsel %vm292, %v265, 0
  %v315 = vsel %vm292, %v266, 0
  %v318 = vsel %vm292, %v267, 0
  %v321 = vsel %vm292, %v268, 0
  %v324 = vsel %vm292, %v269, 0
  %v327 = vsel %vm292, %v270, 0
  %v330 = vsel %vm292, %v271, 0
  %v333 = vsel %vm292, %v272, 0
  %v336 = vsel %vm292, %v273, 0
  %v339 = vsel %vm292, %v274, 0
  %341 = vmatprep.subr.mxu0 0.0
  %342 = vmatpush1.msra.mxu0 %v280
  %343 = vmatprep.subr.mxu0 0.0
  %344 = vmatpush1.msra.mxu0 %v281
  %345 = vmatprep.subr.mxu0 0.0
  %346 = vmatpush1.msra.mxu0 %v282
  %347 = vmatprep.subr.mxu0 0.0
  %348 = vmatpush1.msra.mxu0 %v283
  %349 = vmatprep.subr.mxu0 0.0
  %350 = vmatpush1.msra.mxu0 %v284
  %351 = vmatprep.subr.mxu0 0.0
  %352 = vmatpush1.msra.mxu0 %v285
  %353 = vmatprep.subr.mxu0 0.0
  %354 = vmatpush1.msra.mxu0 %v286
  %355 = vmatprep.subr.mxu0 0.0
  %356 = vmatpush1.msra.mxu0 %v287
  %357 = vmatprep.subr.mxu0 0.0
  %358 = vmatpush1.msra.mxu0 0.0
  %359 = vmatprep.subr.mxu0 0.0
  %360 = vmatpush1.msra.mxu0 0.0
  %361 = vmatprep.subr.mxu0 0.0
  %362 = vmatpush1.msra.mxu0 0.0
  %363 = vmatprep.subr.mxu0 0.0
  %364 = vmatpush1.msra.mxu0 0.0
  %365 = vmatprep.subr.mxu0 0.0
  %366 = vmatpush1.msra.mxu0 0.0
  %367 = vmatprep.subr.mxu0 0.0
  %368 = vmatpush1.msra.mxu0 0.0
  %369 = vmatprep.subr.mxu0 0.0
  %370 = vmatpush1.msra.mxu0 0.0
  %371 = vmatprep.subr.mxu0 0.0
  %372 = vmatpush1.msra.mxu0 0.0
  %373 = vmatprep.subr.mxu0 0.0
  %374 = vmatpush1.msra.mxu0 0.0
  %375 = vmatprep.subr.mxu0 0.0
  %376 = vmatpush1.msra.mxu0 0.0
  %377 = vmatprep.subr.mxu0 0.0
  %378 = vmatpush1.msra.mxu0 0.0
  %379 = vmatprep.subr.mxu0 0.0
  %380 = vmatpush1.msra.mxu0 0.0
  %381 = vmatprep.subr.mxu0 0.0
  %382 = vmatpush1.msra.mxu0 0.0
  %383 = vmatprep.subr.mxu0 0.0
  %384 = vmatpush1.msra.mxu0 0.0
  %385 = vmatprep.subr.mxu0 0.0
  %386 = vmatpush1.msra.mxu0 0.0
  %387 = vmatprep.subr.mxu0 0.0
  %388 = vmatpush1.msra.mxu0 0.0
  %389 = vmatprep.subr.mxu0 0.0
  %390 = vmatpush1.msra.mxu0 0.0
  %391 = vmatprep.subr.mxu0 0.0
  %392 = vmatpush1.msra.mxu0 0.0
  %393 = vmatprep.subr.mxu0 0.0
  %394 = vmatpush1.msra.mxu0 0.0
  %395 = vmatprep.subr.mxu0 0.0
  %396 = vmatpush1.msra.mxu0 0.0
  %397 = vmatprep.subr.mxu0 0.0
  %398 = vmatpush1.msra.mxu0 0.0
  %399 = vmatprep.subr.mxu0 0.0
  %400 = vmatpush1.msra.mxu0 0.0
  %401 = vmatprep.subr.mxu0 0.0
  %402 = vmatpush1.msra.mxu0 0.0
  %403 = vmatprep.subr.mxu0 0.0
  %404 = vmatpush1.msra.mxu0 0.0
  %405 = vmatprep.mubr.f32.mxu0 0.0
  %406 = vmatmul.mubr.f32.gmra.mrb[0].mxu0 %v294
  %v407 = vpop.f32.mrb[0].mxu0
  %v408 = vadd.f32 %v291, %v407
  %v409 = vpop.f32.mrb[0].mxu0
  %410 = vmatprep.mubr.f32.mxu0 0.0
  %411 = vmatmul.mubr.f32.gmra.mrb[0].mxu0 %v297
  %v412 = vpop.f32.mrb[0].mxu0
  %v413 = vadd.f32 %v291, %v412
  %v414 = vpop.f32.mrb[0].mxu0
  %415 = vmatprep.mubr.f32.mxu0 0.0
  %416 = vmatmul.mubr.f32.gmra.mrb[0].mxu0 %v300
  %v417 = vpop.f32.mrb[0].mxu0
  %v418 = vadd.f32 %v291, %v417
  %v419 = vpop.f32.mrb[0].mxu0
  %420 = vmatprep.mubr.f32.mxu0 0.0
  %421 = vmatmul.mubr.f32.gmra.mrb[0].mxu0 %v303
  %v422 = vpop.f32.mrb[0].mxu0
  %v423 = vadd.f32 %v291, %v422
  %v424 = vpop.f32.mrb[0].mxu0
  %425 = vmatprep.mubr.f32.mxu0 0.0
  %426 = vmatmul.mubr.f32.gmra.mrb[0].mxu0 %v306
  %v427 = vpop.f32.mrb[0].mxu0
  %v428 = vadd.f32 %v291, %v427
  %v429 = vpop.f32.mrb[0].mxu0
  %430 = vmatprep.mubr.f32.mxu0 0.0
  %431 = vmatmul.mubr.f32.gmra.mrb[0].mxu0 %v309
  %v432 = vpop.f32.mrb[0].mxu0
  %v433 = vadd.f32 %v291, %v432
  %v434 = vpop.f32.mrb[0].mxu0
  %435 = vmatprep.mubr.f32.mxu0 0.0
  %436 = vmatmul.mubr.f32.gmra.mrb[0].mxu0 %v312
  %v437 = vpop.f32.mrb[0].mxu0
  %v438 = vadd.f32 %v291, %v437
  %v439 = vpop.f32.mrb[0].mxu0
  %440 = vmatprep.mubr.f32.mxu0 0.0
  %441 = vmatmul.mubr.f32.gmra.mrb[0].mxu0 %v315
  %v442 = vpop.f32.mrb[0].mxu0
  %v443 = vadd.f32 %v291, %v442
  %v444 = vpop.f32.mrb[0].mxu0
  %445 = vmatprep.mubr.f32.mxu0 0.0
  %446 = vmatmul.mubr.f32.gmra.mrb[0].mxu0 %v318
  %v447 = vpop.f32.mrb[0].mxu0
  %v448 = vadd.f32 %v291, %v447
  %v449 = vpop.f32.mrb[0].mxu0
  %450 = vmatprep.mubr.f32.mxu0 0.0
  %451 = vmatmul.mubr.f32.gmra.mrb[0].mxu0 %v321
  %v452 = vpop.f32.mrb[0].mxu0
  %v453 = vadd.f32 %v291, %v452
  %v454 = vpop.f32.mrb[0].mxu0
  %455 = vmatprep.mubr.f32.mxu0 0.0
  %456 = vmatmul.mubr.f32.gmra.mrb[0].mxu0 %v324
  %v457 = vpop.f32.mrb[0].mxu0
  %v458 = vadd.f32 %v291, %v457
  %v459 = vpop.f32.mrb[0].mxu0
  %460 = vmatprep.mubr.f32.mxu0 0.0
  %461 = vmatmul.mubr.f32.gmra.mrb[0].mxu0 %v327
  %v462 = vpop.f32.mrb[0].mxu0
  %v463 = vadd.f32 %v291, %v462
  %v464 = vpop.f32.mrb[0].mxu0
  %465 = vmatprep.mubr.f32.mxu0 0.0
  %466 = vmatmul.mubr.f32.gmra.mrb[0].mxu0 %v330
  %v467 = vpop.f32.mrb[0].mxu0
  %v468 = vadd.f32 %v291, %v467
  %v469 = vpop.f32.mrb[0].mxu0
  %470 = vmatprep.mubr.f32.mxu0 0.0
  %471 = vmatmul.mubr.f32.gmra.mrb[0].mxu0 %v333
  %v472 = vpop.f32.mrb[0].mxu0
  %v473 = vadd.f32 %v291, %v472
  %v474 = vpop.f32.mrb[0].mxu0
  %475 = vmatprep.mubr.f32.mxu0 0.0
  %476 = vmatmul.mubr.f32.gmra.mrb[0].mxu0 %v336
  %v477 = vpop.f32.mrb[0].mxu0
  %v478 = vadd.f32 %v291, %v477
  %v479 = vpop.f32.mrb[0].mxu0
  %480 = vmatprep.mubr.f32.mxu0 0.0
  %481 = vmatmul.mubr.f32.gmra.mrb[0].mxu0 %v339
  %v482 = vpop.f32.mrb[0].mxu0
  %v483 = vadd.f32 %v291, %v482
  %v484 = vpop.f32.mrb[0].mxu0
  %485 = vdwg.mxu0
  %vm486 = vcmp.ge.f32.partialorder %v408, 0.0
  %vm487 = vcmp.ge.f32.partialorder %v413, 0.0
  %vm488 = vcmp.ge.f32.partialorder %v418, 0.0
  %vm489 = vcmp.ge.f32.partialorder %v423, 0.0
  %vm490 = vcmp.ge.f32.partialorder %v428, 0.0
  %vm491 = vcmp.ge.f32.partialorder %v433, 0.0
  %vm492 = vcmp.ge.f32.partialorder %v438, 0.0
  %vm493 = vcmp.ge.f32.partialorder %v443, 0.0
  %vm494 = vcmp.ge.f32.partialorder %v448, 0.0
  %vm495 = vcmp.ge.f32.partialorder %v453, 0.0
  %vm496 = vcmp.ge.f32.partialorder %v458, 0.0
  %vm497 = vcmp.ge.f32.partialorder %v463, 0.0
  %vm498 = vcmp.ge.f32.partialorder %v468, 0.0
  %vm499 = vcmp.ge.f32.partialorder %v473, 0.0
  %vm500 = vcmp.ge.f32.partialorder %v478, 0.0
  %vm501 = vcmp.ge.f32.partialorder %v483, 0.0
  %v502 = vmul.f32 %v408, 0.1
  %v503 = vmul.f32 %v413, 0.1
  %v504 = vmul.f32 %v418, 0.1
  %v505 = vmul.f32 %v423, 0.1
  %v506 = vmul.f32 %v428, 0.1
  %v507 = vmul.f32 %v433, 0.1
  %v508 = vmul.f32 %v438, 0.1
  %v509 = vmul.f32 %v443, 0.1
  %v510 = vmul.f32 %v448, 0.1
  %v511 = vmul.f32 %v453, 0.1
  %v512 = vmul.f32 %v458, 0.1
  %v513 = vmul.f32 %v463, 0.1
  %v514 = vmul.f32 %v468, 0.1
  %v515 = vmul.f32 %v473, 0.1
  %v516 = vmul.f32 %v478, 0.1
  %v517 = vmul.f32 %v483, 0.1
  %v518 = vsel %vm486, %v408, %v502
  %v519 = vsel %vm487, %v413, %v503
  %v520 = vsel %vm488, %v418, %v504
  %v521 = vsel %vm489, %v423, %v505
  %v522 = vsel %vm490, %v428, %v506
  %v523 = vsel %vm491, %v433, %v507
  %v524 = vsel %vm492, %v438, %v508
  %v525 = vsel %vm493, %v443, %v509
  %v526 = vsel %vm494, %v448, %v510
  %v527 = vsel %vm495, %v453, %v511
  %v528 = vsel %vm496, %v458, %v512
  %v529 = vsel %vm497, %v463, %v513
  %v530 = vsel %vm498, %v468, %v514
  %v531 = vsel %vm499, %v473, %v515
  %v532 = vsel %vm500, %v478, %v516
  %v533 = vsel %vm501, %v483, %v517
  %v535 = vsel %vm292, %v518, 0
  %v538 = vsel %vm292, %v519, 0
  %v541 = vsel %vm292, %v520, 0
  %v544 = vsel %vm292, %v521, 0
  %v547 = vsel %vm292, %v522, 0
  %v550 = vsel %vm292, %v523, 0
  %v553 = vsel %vm292, %v524, 0
  %v556 = vsel %vm292, %v525, 0
  %v559 = vsel %vm292, %v526, 0
  %v562 = vsel %vm292, %v527, 0
  %v565 = vsel %vm292, %v528, 0
  %v568 = vsel %vm292, %v529, 0
  %v571 = vsel %vm292, %v530, 0
  %v574 = vsel %vm292, %v531, 0
  %v577 = vsel %vm292, %v532, 0
  %v580 = vsel %vm292, %v533, 0
  %582 = vmatprep.subr.mxu0 0.0
  %583 = vmatpush1.msra.mxu0 %v280
  %584 = vmatprep.subr.mxu0 0.0
  %585 = vmatpush1.msra.mxu0 %v281
  %586 = vmatprep.subr.mxu0 0.0
  %587 = vmatpush1.msra.mxu0 %v282
  %588 = vmatprep.subr.mxu0 0.0
  %589 = vmatpush1.msra.mxu0 %v283
  %590 = vmatprep.subr.mxu0 0.0
  %591 = vmatpush1.msra.mxu0 %v284
  %592 = vmatprep.subr.mxu0 0.0
  %593 = vmatpush1.msra.mxu0 %v285
  %594 = vmatprep.subr.mxu0 0.0
  %595 = vmatpush1.msra.mxu0 %v286
  %596 = vmatprep.subr.mxu0 0.0
  %597 = vmatpush1.msra.mxu0 %v287
  %598 = vmatprep.subr.mxu0 0.0
  %599 = vmatpush1.msra.mxu0 0.0
  %600 = vmatprep.subr.mxu0 0.0
  %601 = vmatpush1.msra.mxu0 0.0
  %602 = vmatprep.subr.mxu0 0.0
  %603 = vmatpush1.msra.mxu0 0.0
  %604 = vmatprep.subr.mxu0 0.0
  %605 = vmatpush1.msra.mxu0 0.0
  %606 = vmatprep.subr.mxu0 0.0
  %607 = vmatpush1.msra.mxu0 0.0
  %608 = vmatprep.subr.mxu0 0.0
  %609 = vmatpush1.msra.mxu0 0.0
  %610 = vmatprep.subr.mxu0 0.0
  %611 = vmatpush1.msra.mxu0 0.0
  %612 = vmatprep.subr.mxu0 0.0
  %613 = vmatpush1.msra.mxu0 0.0
  %614 = vmatprep.subr.mxu0 0.0
  %615 = vmatpush1.msra.mxu0 0.0
  %616 = vmatprep.subr.mxu0 0.0
  %617 = vmatpush1.msra.mxu0 0.0
  %618 = vmatprep.subr.mxu0 0.0
  %619 = vmatpush1.msra.mxu0 0.0
  %620 = vmatprep.subr.mxu0 0.0
  %621 = vmatpush1.msra.mxu0 0.0
  %622 = vmatprep.subr.mxu0 0.0
  %623 = vmatpush1.msra.mxu0 0.0
  %624 = vmatprep.subr.mxu0 0.0
  %625 = vmatpush1.msra.mxu0 0.0
  %626 = vmatprep.subr.mxu0 0.0
  %627 = vmatpush1.msra.mxu0 0.0
  %628 = vmatprep.subr.mxu0 0.0
  %629 = vmatpush1.msra.mxu0 0.0
  %630 = vmatprep.subr.mxu0 0.0
  %631 = vmatpush1.msra.mxu0 0.0
  %632 = vmatprep.subr.mxu0 0.0
  %633 = vmatpush1.msra.mxu0 0.0
  %634 = vmatprep.subr.mxu0 0.0
  %635 = vmatpush1.msra.mxu0 0.0
  %636 = vmatprep.subr.mxu0 0.0
  %637 = vmatpush1.msra.mxu0 0.0
  %638 = vmatprep.subr.mxu0 0.0
  %639 = vmatpush1.msra.mxu0 0.0
  %640 = vmatprep.subr.mxu0 0.0
  %641 = vmatpush1.msra.mxu0 0.0
  %642 = vmatprep.subr.mxu0 0.0
  %643 = vmatpush1.msra.mxu0 0.0
  %644 = vmatprep.subr.mxu0 0.0
  %645 = vmatpush1.msra.mxu0 0.0
  %646 = vmatprep.mubr.f32.mxu0 0.0
  %647 = vmatmul.mubr.f32.gmra.mrb[0].mxu0 %v535
  %v648 = vpop.f32.mrb[0].mxu0
  %v649 = vadd.f32 %v291, %v648
  %v650 = vpop.f32.mrb[0].mxu0
  %651 = vmatprep.mubr.f32.mxu0 0.0
  %652 = vmatmul.mubr.f32.gmra.mrb[0].mxu0 %v538
  %v653 = vpop.f32.mrb[0].mxu0
  %v654 = vadd.f32 %v291, %v653
  %v655 = vpop.f32.mrb[0].mxu0
  %656 = vmatprep.mubr.f32.mxu0 0.0
  %657 = vmatmul.mubr.f32.gmra.mrb[0].mxu0 %v541
  %v658 = vpop.f32.mrb[0].mxu0
  %v659 = vadd.f32 %v291, %v658
  %v660 = vpop.f32.mrb[0].mxu0
  %661 = vmatprep.mubr.f32.mxu0 0.0
  %662 = vmatmul.mubr.f32.gmra.mrb[0].mxu0 %v544
  %v663 = vpop.f32.mrb[0].mxu0
  %v664 = vadd.f32 %v291, %v663
  %v665 = vpop.f32.mrb[0].mxu0
  %666 = vmatprep.mubr.f32.mxu0 0.0
  %667 = vmatmul.mubr.f32.gmra.mrb[0].mxu0 %v547
  %v668 = vpop.f32.mrb[0].mxu0
  %v669 = vadd.f32 %v291, %v668
  %v670 = vpop.f32.mrb[0].mxu0
  %671 = vmatprep.mubr.f32.mxu0 0.0
  %672 = vmatmul.mubr.f32.gmra.mrb[0].mxu0 %v550
  %v673 = vpop.f32.mrb[0].mxu0
  %v674 = vadd.f32 %v291, %v673
  %v675 = vpop.f32.mrb[0].mxu0
  %676 = vmatprep.mubr.f32.mxu0 0.0
  %677 = vmatmul.mubr.f32.gmra.mrb[0].mxu0 %v553
  %v678 = vpop.f32.mrb[0].mxu0
  %v679 = vadd.f32 %v291, %v678
  %v680 = vpop.f32.mrb[0].mxu0
  %681 = vmatprep.mubr.f32.mxu0 0.0
  %682 = vmatmul.mubr.f32.gmra.mrb[0].mxu0 %v556
  %v683 = vpop.f32.mrb[0].mxu0
  %v684 = vadd.f32 %v291, %v683
  %v685 = vpop.f32.mrb[0].mxu0
  %686 = vmatprep.mubr.f32.mxu0 0.0
  %687 = vmatmul.mubr.f32.gmra.mrb[0].mxu0 %v559
  %v688 = vpop.f32.mrb[0].mxu0
  %v689 = vadd.f32 %v291, %v688
  %v690 = vpop.f32.mrb[0].mxu0
  %691 = vmatprep.mubr.f32.mxu0 0.0
  %692 = vmatmul.mubr.f32.gmra.mrb[0].mxu0 %v562
  %v693 = vpop.f32.mrb[0].mxu0
  %v694 = vadd.f32 %v291, %v693
  %v695 = vpop.f32.mrb[0].mxu0
  %696 = vmatprep.mubr.f32.mxu0 0.0
  %697 = vmatmul.mubr.f32.gmra.mrb[0].mxu0 %v565
  %v698 = vpop.f32.mrb[0].mxu0
  %v699 = vadd.f32 %v291, %v698
  %v700 = vpop.f32.mrb[0].mxu0
  %701 = vmatprep.mubr.f32.mxu0 0.0
  %702 = vmatmul.mubr.f32.gmra.mrb[0].mxu0 %v568
  %v703 = vpop.f32.mrb[0].mxu0
  %v704 = vadd.f32 %v291, %v703
  %v705 = vpop.f32.mrb[0].mxu0
  %706 = vmatprep.mubr.f32.mxu0 0.0
  %707 = vmatmul.mubr.f32.gmra.mrb[0].mxu0 %v571
  %v708 = vpop.f32.mrb[0].mxu0
  %v709 = vadd.f32 %v291, %v708
  %v710 = vpop.f32.mrb[0].mxu0
  %711 = vmatprep.mubr.f32.mxu0 0.0
  %712 = vmatmul.mubr.f32.gmra.mrb[0].mxu0 %v574
  %v713 = vpop.f32.mrb[0].mxu0
  %v714 = vadd.f32 %v291, %v713
  %v715 = vpop.f32.mrb[0].mxu0
  %716 = vmatprep.mubr.f32.mxu0 0.0
  %717 = vmatmul.mubr.f32.gmra.mrb[0].mxu0 %v577
  %v718 = vpop.f32.mrb[0].mxu0
  %v719 = vadd.f32 %v291, %v718
  %v720 = vpop.f32.mrb[0].mxu0
  %721 = vmatprep.mubr.f32.mxu0 0.0
  %722 = vmatmul.mubr.f32.gmra.mrb[0].mxu0 %v580
  %v723 = vpop.f32.mrb[0].mxu0
  %v724 = vadd.f32 %v291, %v723
  %v725 = vpop.f32.mrb[0].mxu0
  %726 = vdwg.mxu0
  %vm727 = vcmp.ge.f32.partialorder %v649, 0.0
  %vm728 = vcmp.ge.f32.partialorder %v654, 0.0
  %vm729 = vcmp.ge.f32.partialorder %v659, 0.0
  %vm730 = vcmp.ge.f32.partialorder %v664, 0.0
  %vm731 = vcmp.ge.f32.partialorder %v669, 0.0
  %vm732 = vcmp.ge.f32.partialorder %v674, 0.0
  %vm733 = vcmp.ge.f32.partialorder %v679, 0.0
  %vm734 = vcmp.ge.f32.partialorder %v684, 0.0
  %vm735 = vcmp.ge.f32.partialorder %v689, 0.0
  %vm736 = vcmp.ge.f32.partialorder %v694, 0.0
  %vm737 = vcmp.ge.f32.partialorder %v699, 0.0
  %vm738 = vcmp.ge.f32.partialorder %v704, 0.0
  %vm739 = vcmp.ge.f32.partialorder %v709, 0.0
  %vm740 = vcmp.ge.f32.partialorder %v714, 0.0
  %vm741 = vcmp.ge.f32.partialorder %v719, 0.0
  %vm742 = vcmp.ge.f32.partialorder %v724, 0.0
  %v743 = vmul.f32 %v649, 0.1
  %v744 = vmul.f32 %v654, 0.1
  %v745 = vmul.f32 %v659, 0.1
  %v746 = vmul.f32 %v664, 0.1
  %v747 = vmul.f32 %v669, 0.1
  %v748 = vmul.f32 %v674, 0.1
  %v749 = vmul.f32 %v679, 0.1
  %v750 = vmul.f32 %v684, 0.1
  %v751 = vmul.f32 %v689, 0.1
  %v752 = vmul.f32 %v694, 0.1
  %v753 = vmul.f32 %v699, 0.1
  %v754 = vmul.f32 %v704, 0.1
  %v755 = vmul.f32 %v709, 0.1
  %v756 = vmul.f32 %v714, 0.1
  %v757 = vmul.f32 %v719, 0.1
  %v758 = vmul.f32 %v724, 0.1
  %v759 = vsel %vm727, %v649, %v743
  %v760 = vsel %vm728, %v654, %v744
  %v761 = vsel %vm729, %v659, %v745
  %v762 = vsel %vm730, %v664, %v746
  %v763 = vsel %vm731, %v669, %v747
  %v764 = vsel %vm732, %v674, %v748
  %v765 = vsel %vm733, %v679, %v749
  %v766 = vsel %vm734, %v684, %v750
  %v767 = vsel %vm735, %v689, %v751
  %v768 = vsel %vm736, %v694, %v752
  %v769 = vsel %vm737, %v699, %v753
  %v770 = vsel %vm738, %v704, %v754
  %v771 = vsel %vm739, %v709, %v755
  %v772 = vsel %vm740, %v714, %v756
  %v773 = vsel %vm741, %v719, %v757
  %v774 = vsel %vm742, %v724, %v758
  %v775 = vld [vmem:[%s1 + $0x50] sm:$0xff]
  %v776 = vld [vmem:[%s1 + $0x58] sm:$0xff]
  %v777 = vld [vmem:[%s1 + $0x60] sm:$0xff]
  %v778 = vld [vmem:[%s1 + $0x68] sm:$0xff]
  %v779 = vld [vmem:[%s1 + $0x70] sm:$0xff]
  %v780 = vld [vmem:[%s1 + $0x78] sm:$0xff]
  %v781 = vld [vmem:[%s1 + $0x80] sm:$0xff]
  %v782 = vld [vmem:[%s1 + $0x88] sm:$0xff]
  %v783 = vlaneseq
  %v784 = vshrl.u32 %v783, 7
  %v785 = vsub.s32 0, %v784
  %v786 = vrot.slane %v276, %v785
  %v788 = vsel %vm292, %v759, 0
  %v791 = vsel %vm292, %v760, 0
  %v794 = vsel %vm292, %v761, 0
  %v797 = vsel %vm292, %v762, 0
  %v800 = vsel %vm292, %v763, 0
  %v803 = vsel %vm292, %v764, 0
  %v806 = vsel %vm292, %v765, 0
  %v809 = vsel %vm292, %v766, 0
  %v812 = vsel %vm292, %v767, 0
  %v815 = vsel %vm292, %v768, 0
  %v818 = vsel %vm292, %v769, 0
  %v821 = vsel %vm292, %v770, 0
  %v824 = vsel %vm292, %v771, 0
  %v827 = vsel %vm292, %v772, 0
  %v830 = vsel %vm292, %v773, 0
  %v833 = vsel %vm292, %v774, 0
  %835 = vmatprep.subr.mxu0 0.0
  %836 = vmatpush1.msra.mxu0 %v775
  %837 = vmatprep.subr.mxu0 0.0
  %838 = vmatpush1.msra.mxu0 %v776
  %839 = vmatprep.subr.mxu0 0.0
  %840 = vmatpush1.msra.mxu0 %v777
  %841 = vmatprep.subr.mxu0 0.0
  %842 = vmatpush1.msra.mxu0 %v778
  %843 = vmatprep.subr.mxu0 0.0
  %844 = vmatpush1.msra.mxu0 %v779
  %845 = vmatprep.subr.mxu0 0.0
  %846 = vmatpush1.msra.mxu0 %v780
  %847 = vmatprep.subr.mxu0 0.0
  %848 = vmatpush1.msra.mxu0 %v781
  %849 = vmatprep.subr.mxu0 0.0
  %850 = vmatpush1.msra.mxu0 %v782
  %851 = vmatprep.subr.mxu0 0.0
  %852 = vmatpush1.msra.mxu0 0.0
  %853 = vmatprep.subr.mxu0 0.0
  %854 = vmatpush1.msra.mxu0 0.0
  %855 = vmatprep.subr.mxu0 0.0
  %856 = vmatpush1.msra.mxu0 0.0
  %857 = vmatprep.subr.mxu0 0.0
  %858 = vmatpush1.msra.mxu0 0.0
  %859 = vmatprep.subr.mxu0 0.0
  %860 = vmatpush1.msra.mxu0 0.0
  %861 = vmatprep.subr.mxu0 0.0
  %862 = vmatpush1.msra.mxu0 0.0
  %863 = vmatprep.subr.mxu0 0.0
  %864 = vmatpush1.msra.mxu0 0.0
  %865 = vmatprep.subr.mxu0 0.0
  %866 = vmatpush1.msra.mxu0 0.0
  %867 = vmatprep.subr.mxu0 0.0
  %868 = vmatpush1.msra.mxu0 0.0
  %869 = vmatprep.subr.mxu0 0.0
  %870 = vmatpush1.msra.mxu0 0.0
  %871 = vmatprep.subr.mxu0 0.0
  %872 = vmatpush1.msra.mxu0 0.0
  %873 = vmatprep.subr.mxu0 0.0
  %874 = vmatpush1.msra.mxu0 0.0
  %875 = vmatprep.subr.mxu0 0.0
  %876 = vmatpush1.msra.mxu0 0.0
  %877 = vmatprep.subr.mxu0 0.0
  %878 = vmatpush1.msra.mxu0 0.0
  %879 = vmatprep.subr.mxu0 0.0
  %880 = vmatpush1.msra.mxu0 0.0
  %881 = vmatprep.subr.mxu0 0.0
  %882 = vmatpush1.msra.mxu0 0.0
  %883 = vmatprep.subr.mxu0 0.0
  %884 = vmatpush1.msra.mxu0 0.0
  %885 = vmatprep.subr.mxu0 0.0
  %886 = vmatpush1.msra.mxu0 0.0
  %887 = vmatprep.subr.mxu0 0.0
  %888 = vmatpush1.msra.mxu0 0.0
  %889 = vmatprep.subr.mxu0 0.0
  %890 = vmatpush1.msra.mxu0 0.0
  %891 = vmatprep.subr.mxu0 0.0
  %892 = vmatpush1.msra.mxu0 0.0
  %893 = vmatprep.subr.mxu0 0.0
  %894 = vmatpush1.msra.mxu0 0.0
  %895 = vmatprep.subr.mxu0 0.0
  %896 = vmatpush1.msra.mxu0 0.0
  %897 = vmatprep.subr.mxu0 0.0
  %898 = vmatpush1.msra.mxu0 0.0
  %899 = vmatprep.mubr.f32.mxu0 0.0
  %900 = vmatmul.mubr.f32.gmra.mrb[0].mxu0 %v788
  %v901 = vpop.f32.mrb[0].mxu0
  %v902 = vadd.f32 %v786, %v901
  %v903 = vpop.f32.mrb[0].mxu0
  %904 = vmatprep.mubr.f32.mxu0 0.0
  %905 = vmatmul.mubr.f32.gmra.mrb[0].mxu0 %v791
  %v906 = vpop.f32.mrb[0].mxu0
  %v907 = vadd.f32 %v786, %v906
  %v908 = vpop.f32.mrb[0].mxu0
  %909 = vmatprep.mubr.f32.mxu0 0.0
  %910 = vmatmul.mubr.f32.gmra.mrb[0].mxu0 %v794
  %v911 = vpop.f32.mrb[0].mxu0
  %v912 = vadd.f32 %v786, %v911
  %v913 = vpop.f32.mrb[0].mxu0
  %914 = vmatprep.mubr.f32.mxu0 0.0
  %915 = vmatmul.mubr.f32.gmra.mrb[0].mxu0 %v797
  %v916 = vpop.f32.mrb[0].mxu0
  %v917 = vadd.f32 %v786, %v916
  %v918 = vpop.f32.mrb[0].mxu0
  %919 = vmatprep.mubr.f32.mxu0 0.0
  %920 = vmatmul.mubr.f32.gmra.mrb[0].mxu0 %v800
  %v921 = vpop.f32.mrb[0].mxu0
  %v922 = vadd.f32 %v786, %v921
  %v923 = vpop.f32.mrb[0].mxu0
  %924 = vmatprep.mubr.f32.mxu0 0.0
  %925 = vmatmul.mubr.f32.gmra.mrb[0].mxu0 %v803
  %v926 = vpop.f32.mrb[0].mxu0
  %v927 = vadd.f32 %v786, %v926
  %v928 = vpop.f32.mrb[0].mxu0
  %929 = vmatprep.mubr.f32.mxu0 0.0
  %930 = vmatmul.mubr.f32.gmra.mrb[0].mxu0 %v806
  %v931 = vpop.f32.mrb[0].mxu0
  %v932 = vadd.f32 %v786, %v931
  %v933 = vpop.f32.mrb[0].mxu0
  %934 = vmatprep.mubr.f32.mxu0 0.0
  %935 = vmatmul.mubr.f32.gmra.mrb[0].mxu0 %v809
  %v936 = vpop.f32.mrb[0].mxu0
  %v937 = vadd.f32 %v786, %v936
  %v938 = vpop.f32.mrb[0].mxu0
  %939 = vmatprep.mubr.f32.mxu0 0.0
  %940 = vmatmul.mubr.f32.gmra.mrb[0].mxu0 %v812
  %v941 = vpop.f32.mrb[0].mxu0
  %v942 = vadd.f32 %v786, %v941
  %v943 = vpop.f32.mrb[0].mxu0
  %944 = vmatprep.mubr.f32.mxu0 0.0
  %945 = vmatmul.mubr.f32.gmra.mrb[0].mxu0 %v815
  %v946 = vpop.f32.mrb[0].mxu0
  %v947 = vadd.f32 %v786, %v946
  %v948 = vpop.f32.mrb[0].mxu0
  %949 = vmatprep.mubr.f32.mxu0 0.0
  %950 = vmatmul.mubr.f32.gmra.mrb[0].mxu0 %v818
  %v951 = vpop.f32.mrb[0].mxu0
  %v952 = vadd.f32 %v786, %v951
  %v953 = vpop.f32.mrb[0].mxu0
  %954 = vmatprep.mubr.f32.mxu0 0.0
  %955 = vmatmul.mubr.f32.gmra.mrb[0].mxu0 %v821
  %v956 = vpop.f32.mrb[0].mxu0
  %v957 = vadd.f32 %v786, %v956
  %v958 = vpop.f32.mrb[0].mxu0
  %959 = vmatprep.mubr.f32.mxu0 0.0
  %960 = vmatmul.mubr.f32.gmra.mrb[0].mxu0 %v824
  %v961 = vpop.f32.mrb[0].mxu0
  %v962 = vadd.f32 %v786, %v961
  %v963 = vpop.f32.mrb[0].mxu0
  %964 = vmatprep.mubr.f32.mxu0 0.0
  %965 = vmatmul.mubr.f32.gmra.mrb[0].mxu0 %v827
  %v966 = vpop.f32.mrb[0].mxu0
  %v967 = vadd.f32 %v786, %v966
  %v968 = vpop.f32.mrb[0].mxu0
  %969 = vmatprep.mubr.f32.mxu0 0.0
  %970 = vmatmul.mubr.f32.gmra.mrb[0].mxu0 %v830
  %v971 = vpop.f32.mrb[0].mxu0
  %v972 = vadd.f32 %v786, %v971
  %v973 = vpop.f32.mrb[0].mxu0
  %974 = vmatprep.mubr.f32.mxu0 0.0
  %975 = vmatmul.mubr.f32.gmra.mrb[0].mxu0 %v833
  %v976 = vpop.f32.mrb[0].mxu0
  %v977 = vadd.f32 %v786, %v976
  %v978 = vpop.f32.mrb[0].mxu0
  %979 = vdwg.mxu0
  %vm980 = vcmp.ge.f32.partialorder %v902, 0.0
  %vm981 = vcmp.ge.f32.partialorder %v907, 0.0
  %vm982 = vcmp.ge.f32.partialorder %v912, 0.0
  %vm983 = vcmp.ge.f32.partialorder %v917, 0.0
  %vm984 = vcmp.ge.f32.partialorder %v922, 0.0
  %vm985 = vcmp.ge.f32.partialorder %v927, 0.0
  %vm986 = vcmp.ge.f32.partialorder %v932, 0.0
  %vm987 = vcmp.ge.f32.partialorder %v937, 0.0
  %vm988 = vcmp.ge.f32.partialorder %v942, 0.0
  %vm989 = vcmp.ge.f32.partialorder %v947, 0.0
  %vm990 = vcmp.ge.f32.partialorder %v952, 0.0
  %vm991 = vcmp.ge.f32.partialorder %v957, 0.0
  %vm992 = vcmp.ge.f32.partialorder %v962, 0.0
  %vm993 = vcmp.ge.f32.partialorder %v967, 0.0
  %vm994 = vcmp.ge.f32.partialorder %v972, 0.0
  %vm995 = vcmp.ge.f32.partialorder %v977, 0.0
  %v996 = vmul.f32 %v902, 0.1
  %v997 = vmul.f32 %v907, 0.1
  %v998 = vmul.f32 %v912, 0.1
  %v999 = vmul.f32 %v917, 0.1
  %v1000 = vmul.f32 %v922, 0.1
  %v1001 = vmul.f32 %v927, 0.1
  %v1002 = vmul.f32 %v932, 0.1
  %v1003 = vmul.f32 %v937, 0.1
  %v1004 = vmul.f32 %v942, 0.1
  %v1005 = vmul.f32 %v947, 0.1
  %v1006 = vmul.f32 %v952, 0.1
  %v1007 = vmul.f32 %v957, 0.1
  %v1008 = vmul.f32 %v962, 0.1
  %v1009 = vmul.f32 %v967, 0.1
  %v1010 = vmul.f32 %v972, 0.1
  %v1011 = vmul.f32 %v977, 0.1
  %v1012 = vsel %vm980, %v902, %v996
  %v1013 = vsel %vm981, %v907, %v997
  %v1014 = vsel %vm982, %v912, %v998
  %v1015 = vsel %vm983, %v917, %v999
  %v1016 = vsel %vm984, %v922, %v1000
  %v1017 = vsel %vm985, %v927, %v1001
  %v1018 = vsel %vm986, %v932, %v1002
  %v1019 = vsel %vm987, %v937, %v1003
  %v1020 = vsel %vm988, %v942, %v1004
  %v1021 = vsel %vm989, %v947, %v1005
  %v1022 = vsel %vm990, %v952, %v1006
  %v1023 = vsel %vm991, %v957, %v1007
  %v1024 = vsel %vm992, %v962, %v1008
  %v1025 = vsel %vm993, %v967, %v1009
  %v1026 = vsel %vm994, %v972, %v1010
  %v1027 = vsel %vm995, %v977, %v1011
  %v1028 = vld [vmem:[%s1 + $0x90] sm:$0xff]
  %v1029 = vld [vmem:[%s1 + $0x98] sm:$0xff]
  %v1030 = vld [vmem:[%s1 + $0xa0] sm:$0xff]
  %v1031 = vld [vmem:[%s1 + $0xa8] sm:$0xff]
  %v1032 = vlaneseq
  %v1033 = vshrl.u32 %v1032, 7
  %v1034 = vsub.s32 0, %v1033
  %v1035 = vrot.slane %v277, %v1034
  %vm1036 = vcmask 261120
  %v1038 = vsel %vm1036, %v1012, 0
  %v1041 = vsel %vm1036, %v1013, 0
  %v1044 = vsel %vm1036, %v1014, 0
  %v1047 = vsel %vm1036, %v1015, 0
  %v1050 = vsel %vm1036, %v1016, 0
  %v1053 = vsel %vm1036, %v1017, 0
  %v1056 = vsel %vm1036, %v1018, 0
  %v1059 = vsel %vm1036, %v1019, 0
  %v1062 = vsel %vm1036, %v1020, 0
  %v1065 = vsel %vm1036, %v1021, 0
  %v1068 = vsel %vm1036, %v1022, 0
  %v1071 = vsel %vm1036, %v1023, 0
  %v1074 = vsel %vm1036, %v1024, 0
  %v1077 = vsel %vm1036, %v1025, 0
  %v1080 = vsel %vm1036, %v1026, 0
  %v1083 = vsel %vm1036, %v1027, 0
  %1085 = vmatprep.subr.mxu0 0.0
  %1086 = vmatpush1.msra.mxu0 %v1028
  %1087 = vmatprep.subr.mxu0 0.0
  %1088 = vmatpush1.msra.mxu0 %v1029
  %1089 = vmatprep.subr.mxu0 0.0
  %1090 = vmatpush1.msra.mxu0 %v1030
  %1091 = vmatprep.subr.mxu0 0.0
  %1092 = vmatpush1.msra.mxu0 %v1031
  %1093 = vmatprep.subr.mxu0 0.0
  %1094 = vmatpush1.msra.mxu0 0.0
  %1095 = vmatprep.subr.mxu0 0.0
  %1096 = vmatpush1.msra.mxu0 0.0
  %1097 = vmatprep.subr.mxu0 0.0
  %1098 = vmatpush1.msra.mxu0 0.0
  %1099 = vmatprep.subr.mxu0 0.0
  %1100 = vmatpush1.msra.mxu0 0.0
  %1101 = vmatprep.subr.mxu0 0.0
  %1102 = vmatpush1.msra.mxu0 0.0
  %1103 = vmatprep.subr.mxu0 0.0
  %1104 = vmatpush1.msra.mxu0 0.0
  %1105 = vmatprep.subr.mxu0 0.0
  %1106 = vmatpush1.msra.mxu0 0.0
  %1107 = vmatprep.subr.mxu0 0.0
  %1108 = vmatpush1.msra.mxu0 0.0
  %1109 = vmatprep.subr.mxu0 0.0
  %1110 = vmatpush1.msra.mxu0 0.0
  %1111 = vmatprep.subr.mxu0 0.0
  %1112 = vmatpush1.msra.mxu0 0.0
  %1113 = vmatprep.subr.mxu0 0.0
  %1114 = vmatpush1.msra.mxu0 0.0
  %1115 = vmatprep.subr.mxu0 0.0
  %1116 = vmatpush1.msra.mxu0 0.0
  %1117 = vmatprep.subr.mxu0 0.0
  %1118 = vmatpush1.msra.mxu0 0.0
  %1119 = vmatprep.subr.mxu0 0.0
  %1120 = vmatpush1.msra.mxu0 0.0
  %1121 = vmatprep.subr.mxu0 0.0
  %1122 = vmatpush1.msra.mxu0 0.0
  %1123 = vmatprep.subr.mxu0 0.0
  %1124 = vmatpush1.msra.mxu0 0.0
  %1125 = vmatprep.subr.mxu0 0.0
  %1126 = vmatpush1.msra.mxu0 0.0
  %1127 = vmatprep.subr.mxu0 0.0
  %1128 = vmatpush1.msra.mxu0 0.0
  %1129 = vmatprep.subr.mxu0 0.0
  %1130 = vmatpush1.msra.mxu0 0.0
  %1131 = vmatprep.subr.mxu0 0.0
  %1132 = vmatpush1.msra.mxu0 0.0
  %1133 = vmatprep.subr.mxu0 0.0
  %1134 = vmatpush1.msra.mxu0 0.0
  %1135 = vmatprep.subr.mxu0 0.0
  %1136 = vmatpush1.msra.mxu0 0.0
  %1137 = vmatprep.subr.mxu0 0.0
  %1138 = vmatpush1.msra.mxu0 0.0
  %1139 = vmatprep.subr.mxu0 0.0
  %1140 = vmatpush1.msra.mxu0 0.0
  %1141 = vmatprep.subr.mxu0 0.0
  %1142 = vmatpush1.msra.mxu0 0.0
  %1143 = vmatprep.subr.mxu0 0.0
  %1144 = vmatpush1.msra.mxu0 0.0
  %1145 = vmatprep.subr.mxu0 0.0
  %1146 = vmatpush1.msra.mxu0 0.0
  %1147 = vmatprep.subr.mxu0 0.0
  %1148 = vmatpush1.msra.mxu0 0.0
  %1149 = vmatprep.mubr.f32.mxu0 0.0
  %1150 = vmatmul.mubr.f32.gmra.mrb[0].mxu0 %v1038
  %v1151 = vpop.f32.mrb[0].mxu0
  %v1152 = vadd.f32 %v1035, %v1151
  %v1153 = vpop.f32.mrb[0].mxu0
  %1154 = vmatprep.mubr.f32.mxu0 0.0
  %1155 = vmatmul.mubr.f32.gmra.mrb[0].mxu0 %v1041
  %v1156 = vpop.f32.mrb[0].mxu0
  %v1157 = vadd.f32 %v1035, %v1156
  %v1158 = vpop.f32.mrb[0].mxu0
  %1159 = vmatprep.mubr.f32.mxu0 0.0
  %1160 = vmatmul.mubr.f32.gmra.mrb[0].mxu0 %v1044
  %v1161 = vpop.f32.mrb[0].mxu0
  %v1162 = vadd.f32 %v1035, %v1161
  %v1163 = vpop.f32.mrb[0].mxu0
  %1164 = vmatprep.mubr.f32.mxu0 0.0
  %1165 = vmatmul.mubr.f32.gmra.mrb[0].mxu0 %v1047
  %v1166 = vpop.f32.mrb[0].mxu0
  %v1167 = vadd.f32 %v1035, %v1166
  %v1168 = vpop.f32.mrb[0].mxu0
  %1169 = vmatprep.mubr.f32.mxu0 0.0
  %1170 = vmatmul.mubr.f32.gmra.mrb[0].mxu0 %v1050
  %v1171 = vpop.f32.mrb[0].mxu0
  %v1172 = vadd.f32 %v1035, %v1171
  %v1173 = vpop.f32.mrb[0].mxu0
  %1174 = vmatprep.mubr.f32.mxu0 0.0
  %1175 = vmatmul.mubr.f32.gmra.mrb[0].mxu0 %v1053
  %v1176 = vpop.f32.mrb[0].mxu0
  %v1177 = vadd.f32 %v1035, %v1176
  %v1178 = vpop.f32.mrb[0].mxu0
  %1179 = vmatprep.mubr.f32.mxu0 0.0
  %1180 = vmatmul.mubr.f32.gmra.mrb[0].mxu0 %v1056
  %v1181 = vpop.f32.mrb[0].mxu0
  %v1182 = vadd.f32 %v1035, %v1181
  %v1183 = vpop.f32.mrb[0].mxu0
  %1184 = vmatprep.mubr.f32.mxu0 0.0
  %1185 = vmatmul.mubr.f32.gmra.mrb[0].mxu0 %v1059
  %v1186 = vpop.f32.mrb[0].mxu0
  %v1187 = vadd.f32 %v1035, %v1186
  %v1188 = vpop.f32.mrb[0].mxu0
  %1189 = vmatprep.mubr.f32.mxu0 0.0
  %1190 = vmatmul.mubr.f32.gmra.mrb[0].mxu0 %v1062
  %v1191 = vpop.f32.mrb[0].mxu0
  %v1192 = vadd.f32 %v1035, %v1191
  %v1193 = vpop.f32.mrb[0].mxu0
  %1194 = vmatprep.mubr.f32.mxu0 0.0
  %1195 = vmatmul.mubr.f32.gmra.mrb[0].mxu0 %v1065
  %v1196 = vpop.f32.mrb[0].mxu0
  %v1197 = vadd.f32 %v1035, %v1196
  %v1198 = vpop.f32.mrb[0].mxu0
  %1199 = vmatprep.mubr.f32.mxu0 0.0
  %1200 = vmatmul.mubr.f32.gmra.mrb[0].mxu0 %v1068
  %v1201 = vpop.f32.mrb[0].mxu0
  %v1202 = vadd.f32 %v1035, %v1201
  %v1203 = vpop.f32.mrb[0].mxu0
  %1204 = vmatprep.mubr.f32.mxu0 0.0
  %1205 = vmatmul.mubr.f32.gmra.mrb[0].mxu0 %v1071
  %v1206 = vpop.f32.mrb[0].mxu0
  %v1207 = vadd.f32 %v1035, %v1206
  %v1208 = vpop.f32.mrb[0].mxu0
  %1209 = vmatprep.mubr.f32.mxu0 0.0
  %1210 = vmatmul.mubr.f32.gmra.mrb[0].mxu0 %v1074
  %v1211 = vpop.f32.mrb[0].mxu0
  %v1212 = vadd.f32 %v1035, %v1211
  %v1213 = vpop.f32.mrb[0].mxu0
  %1214 = vmatprep.mubr.f32.mxu0 0.0
  %1215 = vmatmul.mubr.f32.gmra.mrb[0].mxu0 %v1077
  %v1216 = vpop.f32.mrb[0].mxu0
  %v1217 = vadd.f32 %v1035, %v1216
  %v1218 = vpop.f32.mrb[0].mxu0
  %1219 = vmatprep.mubr.f32.mxu0 0.0
  %1220 = vmatmul.mubr.f32.gmra.mrb[0].mxu0 %v1080
  %v1221 = vpop.f32.mrb[0].mxu0
  %v1222 = vadd.f32 %v1035, %v1221
  %v1223 = vpop.f32.mrb[0].mxu0
  %1224 = vmatprep.mubr.f32.mxu0 0.0
  %1225 = vmatmul.mubr.f32.gmra.mrb[0].mxu0 %v1083
  %v1226 = vpop.f32.mrb[0].mxu0
  %v1227 = vadd.f32 %v1035, %v1226
  %v1228 = vpop.f32.mrb[0].mxu0
  %1229 = vdwg.mxu0
  %vm1230 = vcmp.ge.f32.partialorder %v1152, 0.0
  %vm1231 = vcmp.ge.f32.partialorder %v1157, 0.0
  %vm1232 = vcmp.ge.f32.partialorder %v1162, 0.0
  %vm1233 = vcmp.ge.f32.partialorder %v1167, 0.0
  %vm1234 = vcmp.ge.f32.partialorder %v1172, 0.0
  %vm1235 = vcmp.ge.f32.partialorder %v1177, 0.0
  %vm1236 = vcmp.ge.f32.partialorder %v1182, 0.0
  %vm1237 = vcmp.ge.f32.partialorder %v1187, 0.0
  %vm1238 = vcmp.ge.f32.partialorder %v1192, 0.0
  %vm1239 = vcmp.ge.f32.partialorder %v1197, 0.0
  %vm1240 = vcmp.ge.f32.partialorder %v1202, 0.0
  %vm1241 = vcmp.ge.f32.partialorder %v1207, 0.0
  %vm1242 = vcmp.ge.f32.partialorder %v1212, 0.0
  %vm1243 = vcmp.ge.f32.partialorder %v1217, 0.0
  %vm1244 = vcmp.ge.f32.partialorder %v1222, 0.0
  %vm1245 = vcmp.ge.f32.partialorder %v1227, 0.0
  %v1246 = vmul.f32 %v1152, 0.1
  %v1247 = vmul.f32 %v1157, 0.1
  %v1248 = vmul.f32 %v1162, 0.1
  %v1249 = vmul.f32 %v1167, 0.1
  %v1250 = vmul.f32 %v1172, 0.1
  %v1251 = vmul.f32 %v1177, 0.1
  %v1252 = vmul.f32 %v1182, 0.1
  %v1253 = vmul.f32 %v1187, 0.1
  %v1254 = vmul.f32 %v1192, 0.1
  %v1255 = vmul.f32 %v1197, 0.1
  %v1256 = vmul.f32 %v1202, 0.1
  %v1257 = vmul.f32 %v1207, 0.1
  %v1258 = vmul.f32 %v1212, 0.1
  %v1259 = vmul.f32 %v1217, 0.1
  %v1260 = vmul.f32 %v1222, 0.1
  %v1261 = vmul.f32 %v1227, 0.1
  %v1262 = vsel %vm1230, %v1152, %v1246
  %v1263 = vsel %vm1231, %v1157, %v1247
  %v1264 = vsel %vm1232, %v1162, %v1248
  %v1265 = vsel %vm1233, %v1167, %v1249
  %v1266 = vsel %vm1234, %v1172, %v1250
  %v1267 = vsel %vm1235, %v1177, %v1251
  %v1268 = vsel %vm1236, %v1182, %v1252
  %v1269 = vsel %vm1237, %v1187, %v1253
  %v1270 = vsel %vm1238, %v1192, %v1254
  %v1271 = vsel %vm1239, %v1197, %v1255
  %v1272 = vsel %vm1240, %v1202, %v1256
  %v1273 = vsel %vm1241, %v1207, %v1257
  %v1274 = vsel %vm1242, %v1212, %v1258
  %v1275 = vsel %vm1243, %v1217, %v1259
  %v1276 = vsel %vm1244, %v1222, %v1260
  %v1277 = vsel %vm1245, %v1227, %v1261
  %v1279 = vsel %vm1036, %v1262, 0
  %v1282 = vsel %vm1036, %v1263, 0
  %v1285 = vsel %vm1036, %v1264, 0
  %v1288 = vsel %vm1036, %v1265, 0
  %v1291 = vsel %vm1036, %v1266, 0
  %v1294 = vsel %vm1036, %v1267, 0
  %v1297 = vsel %vm1036, %v1268, 0
  %v1300 = vsel %vm1036, %v1269, 0
  %v1303 = vsel %vm1036, %v1270, 0
  %v1306 = vsel %vm1036, %v1271, 0
  %v1309 = vsel %vm1036, %v1272, 0
  %v1312 = vsel %vm1036, %v1273, 0
  %v1315 = vsel %vm1036, %v1274, 0
  %v1318 = vsel %vm1036, %v1275, 0
  %v1321 = vsel %vm1036, %v1276, 0
  %v1324 = vsel %vm1036, %v1277, 0
  %1326 = vmatprep.subr.mxu0 0.0
  %1327 = vmatpush1.msra.mxu0 %v1028
  %1328 = vmatprep.subr.mxu0 0.0
  %1329 = vmatpush1.msra.mxu0 %v1029
  %1330 = vmatprep.subr.mxu0 0.0
  %1331 = vmatpush1.msra.mxu0 %v1030
  %1332 = vmatprep.subr.mxu0 0.0
  %1333 = vmatpush1.msra.mxu0 %v1031
  %1334 = vmatprep.subr.mxu0 0.0
  %1335 = vmatpush1.msra.mxu0 0.0
  %1336 = vmatprep.subr.mxu0 0.0
  %1337 = vmatpush1.msra.mxu0 0.0
  %1338 = vmatprep.subr.mxu0 0.0
  %1339 = vmatpush1.msra.mxu0 0.0
  %1340 = vmatprep.subr.mxu0 0.0
  %1341 = vmatpush1.msra.mxu0 0.0
  %1342 = vmatprep.subr.mxu0 0.0
  %1343 = vmatpush1.msra.mxu0 0.0
  %1344 = vmatprep.subr.mxu0 0.0
  %1345 = vmatpush1.msra.mxu0 0.0
  %1346 = vmatprep.subr.mxu0 0.0
  %1347 = vmatpush1.msra.mxu0 0.0
  %1348 = vmatprep.subr.mxu0 0.0
  %1349 = vmatpush1.msra.mxu0 0.0
  %1350 = vmatprep.subr.mxu0 0.0
  %1351 = vmatpush1.msra.mxu0 0.0
  %1352 = vmatprep.subr.mxu0 0.0
  %1353 = vmatpush1.msra.mxu0 0.0
  %1354 = vmatprep.subr.mxu0 0.0
  %1355 = vmatpush1.msra.mxu0 0.0
  %1356 = vmatprep.subr.mxu0 0.0
  %1357 = vmatpush1.msra.mxu0 0.0
  %1358 = vmatprep.subr.mxu0 0.0
  %1359 = vmatpush1.msra.mxu0 0.0
  %1360 = vmatprep.subr.mxu0 0.0
  %1361 = vmatpush1.msra.mxu0 0.0
  %1362 = vmatprep.subr.mxu0 0.0
  %1363 = vmatpush1.msra.mxu0 0.0
  %1364 = vmatprep.subr.mxu0 0.0
  %1365 = vmatpush1.msra.mxu0 0.0
  %1366 = vmatprep.subr.mxu0 0.0
  %1367 = vmatpush1.msra.mxu0 0.0
  %1368 = vmatprep.subr.mxu0 0.0
  %1369 = vmatpush1.msra.mxu0 0.0
  %1370 = vmatprep.subr.mxu0 0.0
  %1371 = vmatpush1.msra.mxu0 0.0
  %1372 = vmatprep.subr.mxu0 0.0
  %1373 = vmatpush1.msra.mxu0 0.0
  %1374 = vmatprep.subr.mxu0 0.0
  %1375 = vmatpush1.msra.mxu0 0.0
  %1376 = vmatprep.subr.mxu0 0.0
  %1377 = vmatpush1.msra.mxu0 0.0
  %1378 = vmatprep.subr.mxu0 0.0
  %1379 = vmatpush1.msra.mxu0 0.0
  %1380 = vmatprep.subr.mxu0 0.0
  %1381 = vmatpush1.msra.mxu0 0.0
  %1382 = vmatprep.subr.mxu0 0.0
  %1383 = vmatpush1.msra.mxu0 0.0
  %1384 = vmatprep.subr.mxu0 0.0
  %1385 = vmatpush1.msra.mxu0 0.0
  %1386 = vmatprep.subr.mxu0 0.0
  %1387 = vmatpush1.msra.mxu0 0.0
  %1388 = vmatprep.subr.mxu0 0.0
  %1389 = vmatpush1.msra.mxu0 0.0
  %1390 = vmatprep.mubr.f32.mxu0 0.0
  %1391 = vmatmul.mubr.f32.gmra.mrb[0].mxu0 %v1279
  %v1392 = vpop.f32.mrb[0].mxu0
  %v1393 = vadd.f32 %v1035, %v1392
  %v1394 = vpop.f32.mrb[0].mxu0
  %1395 = vmatprep.mubr.f32.mxu0 0.0
  %1396 = vmatmul.mubr.f32.gmra.mrb[0].mxu0 %v1282
  %v1397 = vpop.f32.mrb[0].mxu0
  %v1398 = vadd.f32 %v1035, %v1397
  %v1399 = vpop.f32.mrb[0].mxu0
  %1400 = vmatprep.mubr.f32.mxu0 0.0
  %1401 = vmatmul.mubr.f32.gmra.mrb[0].mxu0 %v1285
  %v1402 = vpop.f32.mrb[0].mxu0
  %v1403 = vadd.f32 %v1035, %v1402
  %v1404 = vpop.f32.mrb[0].mxu0
  %1405 = vmatprep.mubr.f32.mxu0 0.0
  %1406 = vmatmul.mubr.f32.gmra.mrb[0].mxu0 %v1288
  %v1407 = vpop.f32.mrb[0].mxu0
  %v1408 = vadd.f32 %v1035, %v1407
  %v1409 = vpop.f32.mrb[0].mxu0
  %1410 = vmatprep.mubr.f32.mxu0 0.0
  %1411 = vmatmul.mubr.f32.gmra.mrb[0].mxu0 %v1291
  %v1412 = vpop.f32.mrb[0].mxu0
  %v1413 = vadd.f32 %v1035, %v1412
  %v1414 = vpop.f32.mrb[0].mxu0
  %1415 = vmatprep.mubr.f32.mxu0 0.0
  %1416 = vmatmul.mubr.f32.gmra.mrb[0].mxu0 %v1294
  %v1417 = vpop.f32.mrb[0].mxu0
  %v1418 = vadd.f32 %v1035, %v1417
  %v1419 = vpop.f32.mrb[0].mxu0
  %1420 = vmatprep.mubr.f32.mxu0 0.0
  %1421 = vmatmul.mubr.f32.gmra.mrb[0].mxu0 %v1297
  %v1422 = vpop.f32.mrb[0].mxu0
  %v1423 = vadd.f32 %v1035, %v1422
  %v1424 = vpop.f32.mrb[0].mxu0
  %1425 = vmatprep.mubr.f32.mxu0 0.0
  %1426 = vmatmul.mubr.f32.gmra.mrb[0].mxu0 %v1300
  %v1427 = vpop.f32.mrb[0].mxu0
  %v1428 = vadd.f32 %v1035, %v1427
  %v1429 = vpop.f32.mrb[0].mxu0
  %1430 = vmatprep.mubr.f32.mxu0 0.0
  %1431 = vmatmul.mubr.f32.gmra.mrb[0].mxu0 %v1303
  %v1432 = vpop.f32.mrb[0].mxu0
  %v1433 = vadd.f32 %v1035, %v1432
  %v1434 = vpop.f32.mrb[0].mxu0
  %1435 = vmatprep.mubr.f32.mxu0 0.0
  %1436 = vmatmul.mubr.f32.gmra.mrb[0].mxu0 %v1306
  %v1437 = vpop.f32.mrb[0].mxu0
  %v1438 = vadd.f32 %v1035, %v1437
  %v1439 = vpop.f32.mrb[0].mxu0
  %1440 = vmatprep.mubr.f32.mxu0 0.0
  %1441 = vmatmul.mubr.f32.gmra.mrb[0].mxu0 %v1309
  %v1442 = vpop.f32.mrb[0].mxu0
  %v1443 = vadd.f32 %v1035, %v1442
  %v1444 = vpop.f32.mrb[0].mxu0
  %1445 = vmatprep.mubr.f32.mxu0 0.0
  %1446 = vmatmul.mubr.f32.gmra.mrb[0].mxu0 %v1312
  %v1447 = vpop.f32.mrb[0].mxu0
  %v1448 = vadd.f32 %v1035, %v1447
  %v1449 = vpop.f32.mrb[0].mxu0
  %1450 = vmatprep.mubr.f32.mxu0 0.0
  %1451 = vmatmul.mubr.f32.gmra.mrb[0].mxu0 %v1315
  %v1452 = vpop.f32.mrb[0].mxu0
  %v1453 = vadd.f32 %v1035, %v1452
  %v1454 = vpop.f32.mrb[0].mxu0
  %1455 = vmatprep.mubr.f32.mxu0 0.0
  %1456 = vmatmul.mubr.f32.gmra.mrb[0].mxu0 %v1318
  %v1457 = vpop.f32.mrb[0].mxu0
  %v1458 = vadd.f32 %v1035, %v1457
  %v1459 = vpop.f32.mrb[0].mxu0
  %1460 = vmatprep.mubr.f32.mxu0 0.0
  %1461 = vmatmul.mubr.f32.gmra.mrb[0].mxu0 %v1321
  %v1462 = vpop.f32.mrb[0].mxu0
  %v1463 = vadd.f32 %v1035, %v1462
  %v1464 = vpop.f32.mrb[0].mxu0
  %1465 = vmatprep.mubr.f32.mxu0 0.0
  %1466 = vmatmul.mubr.f32.gmra.mrb[0].mxu0 %v1324
  %v1467 = vpop.f32.mrb[0].mxu0
  %v1468 = vadd.f32 %v1035, %v1467
  %v1469 = vpop.f32.mrb[0].mxu0
  %1470 = vdwg.mxu0
  %vm1471 = vcmp.ge.f32.partialorder %v1393, 0.0
  %vm1472 = vcmp.ge.f32.partialorder %v1398, 0.0
  %vm1473 = vcmp.ge.f32.partialorder %v1403, 0.0
  %vm1474 = vcmp.ge.f32.partialorder %v1408, 0.0
  %vm1475 = vcmp.ge.f32.partialorder %v1413, 0.0
  %vm1476 = vcmp.ge.f32.partialorder %v1418, 0.0
  %vm1477 = vcmp.ge.f32.partialorder %v1423, 0.0
  %vm1478 = vcmp.ge.f32.partialorder %v1428, 0.0
  %vm1479 = vcmp.ge.f32.partialorder %v1433, 0.0
  %vm1480 = vcmp.ge.f32.partialorder %v1438, 0.0
  %vm1481 = vcmp.ge.f32.partialorder %v1443, 0.0
  %vm1482 = vcmp.ge.f32.partialorder %v1448, 0.0
  %vm1483 = vcmp.ge.f32.partialorder %v1453, 0.0
  %vm1484 = vcmp.ge.f32.partialorder %v1458, 0.0
  %vm1485 = vcmp.ge.f32.partialorder %v1463, 0.0
  %vm1486 = vcmp.ge.f32.partialorder %v1468, 0.0
  %v1487 = vmul.f32 %v1393, 0.1
  %v1488 = vmul.f32 %v1398, 0.1
  %v1489 = vmul.f32 %v1403, 0.1
  %v1490 = vmul.f32 %v1408, 0.1
  %v1491 = vmul.f32 %v1413, 0.1
  %v1492 = vmul.f32 %v1418, 0.1
  %v1493 = vmul.f32 %v1423, 0.1
  %v1494 = vmul.f32 %v1428, 0.1
  %v1495 = vmul.f32 %v1433, 0.1
  %v1496 = vmul.f32 %v1438, 0.1
  %v1497 = vmul.f32 %v1443, 0.1
  %v1498 = vmul.f32 %v1448, 0.1
  %v1499 = vmul.f32 %v1453, 0.1
  %v1500 = vmul.f32 %v1458, 0.1
  %v1501 = vmul.f32 %v1463, 0.1
  %v1502 = vmul.f32 %v1468, 0.1
  %v1503 = vsel %vm1471, %v1393, %v1487
  %v1504 = vsel %vm1472, %v1398, %v1488
  %v1505 = vsel %vm1473, %v1403, %v1489
  %v1506 = vsel %vm1474, %v1408, %v1490
  %v1507 = vsel %vm1475, %v1413, %v1491
  %v1508 = vsel %vm1476, %v1418, %v1492
  %v1509 = vsel %vm1477, %v1423, %v1493
  %v1510 = vsel %vm1478, %v1428, %v1494
  %v1511 = vsel %vm1479, %v1433, %v1495
  %v1512 = vsel %vm1480, %v1438, %v1496
  %v1513 = vsel %vm1481, %v1443, %v1497
  %v1514 = vsel %vm1482, %v1448, %v1498
  %v1515 = vsel %vm1483, %v1453, %v1499
  %v1516 = vsel %vm1484, %v1458, %v1500
  %v1517 = vsel %vm1485, %v1463, %v1501
  %v1518 = vsel %vm1486, %v1468, %v1502
  %v1519 = vld [vmem:[%s1 + $0xb0] sm:$0xff]
  %v1520 = vld [vmem:[%s1 + $0xb8] sm:$0xff]
  %v1521 = vld [vmem:[%s1 + $0xc0] sm:$0xff]
  %v1522 = vld [vmem:[%s1 + $0xc8] sm:$0xff]
  %v1523 = vlaneseq
  %v1524 = vshrl.u32 %v1523, 7
  %v1525 = vsub.s32 0, %v1524
  %v1526 = vrot.slane %v278, %v1525
  %v1528 = vsel %vm1036, %v1503, 0
  %v1531 = vsel %vm1036, %v1504, 0
  %v1534 = vsel %vm1036, %v1505, 0
  %v1537 = vsel %vm1036, %v1506, 0
  %v1540 = vsel %vm1036, %v1507, 0
  %v1543 = vsel %vm1036, %v1508, 0
  %v1546 = vsel %vm1036, %v1509, 0
  %v1549 = vsel %vm1036, %v1510, 0
  %v1552 = vsel %vm1036, %v1511, 0
  %v1555 = vsel %vm1036, %v1512, 0
  %v1558 = vsel %vm1036, %v1513, 0
  %v1561 = vsel %vm1036, %v1514, 0
  %v1564 = vsel %vm1036, %v1515, 0
  %v1567 = vsel %vm1036, %v1516, 0
  %v1570 = vsel %vm1036, %v1517, 0
  %v1573 = vsel %vm1036, %v1518, 0
  %1575 = vmatprep.subr.mxu0 0.0
  %1576 = vmatpush1.msra.mxu0 %v1519
  %1577 = vmatprep.subr.mxu0 0.0
  %1578 = vmatpush1.msra.mxu0 %v1520
  %1579 = vmatprep.subr.mxu0 0.0
  %1580 = vmatpush1.msra.mxu0 %v1521
  %1581 = vmatprep.subr.mxu0 0.0
  %1582 = vmatpush1.msra.mxu0 %v1522
  %1583 = vmatprep.subr.mxu0 0.0
  %1584 = vmatpush1.msra.mxu0 0.0
  %1585 = vmatprep.subr.mxu0 0.0
  %1586 = vmatpush1.msra.mxu0 0.0
  %1587 = vmatprep.subr.mxu0 0.0
  %1588 = vmatpush1.msra.mxu0 0.0
  %1589 = vmatprep.subr.mxu0 0.0
  %1590 = vmatpush1.msra.mxu0 0.0
  %1591 = vmatprep.subr.mxu0 0.0
  %1592 = vmatpush1.msra.mxu0 0.0
  %1593 = vmatprep.subr.mxu0 0.0
  %1594 = vmatpush1.msra.mxu0 0.0
  %1595 = vmatprep.subr.mxu0 0.0
  %1596 = vmatpush1.msra.mxu0 0.0
  %1597 = vmatprep.subr.mxu0 0.0
  %1598 = vmatpush1.msra.mxu0 0.0
  %1599 = vmatprep.subr.mxu0 0.0
  %1600 = vmatpush1.msra.mxu0 0.0
  %1601 = vmatprep.subr.mxu0 0.0
  %1602 = vmatpush1.msra.mxu0 0.0
  %1603 = vmatprep.subr.mxu0 0.0
  %1604 = vmatpush1.msra.mxu0 0.0
  %1605 = vmatprep.subr.mxu0 0.0
  %1606 = vmatpush1.msra.mxu0 0.0
  %1607 = vmatprep.subr.mxu0 0.0
  %1608 = vmatpush1.msra.mxu0 0.0
  %1609 = vmatprep.subr.mxu0 0.0
  %1610 = vmatpush1.msra.mxu0 0.0
  %1611 = vmatprep.subr.mxu0 0.0
  %1612 = vmatpush1.msra.mxu0 0.0
  %1613 = vmatprep.subr.mxu0 0.0
  %1614 = vmatpush1.msra.mxu0 0.0
  %1615 = vmatprep.subr.mxu0 0.0
  %1616 = vmatpush1.msra.mxu0 0.0
  %1617 = vmatprep.subr.mxu0 0.0
  %1618 = vmatpush1.msra.mxu0 0.0
  %1619 = vmatprep.subr.mxu0 0.0
  %1620 = vmatpush1.msra.mxu0 0.0
  %1621 = vmatprep.subr.mxu0 0.0
  %1622 = vmatpush1.msra.mxu0 0.0
  %1623 = vmatprep.subr.mxu0 0.0
  %1624 = vmatpush1.msra.mxu0 0.0
  %1625 = vmatprep.subr.mxu0 0.0
  %1626 = vmatpush1.msra.mxu0 0.0
  %1627 = vmatprep.subr.mxu0 0.0
  %1628 = vmatpush1.msra.mxu0 0.0
  %1629 = vmatprep.subr.mxu0 0.0
  %1630 = vmatpush1.msra.mxu0 0.0
  %1631 = vmatprep.subr.mxu0 0.0
  %1632 = vmatpush1.msra.mxu0 0.0
  %1633 = vmatprep.subr.mxu0 0.0
  %1634 = vmatpush1.msra.mxu0 0.0
  %1635 = vmatprep.subr.mxu0 0.0
  %1636 = vmatpush1.msra.mxu0 0.0
  %1637 = vmatprep.subr.mxu0 0.0
  %1638 = vmatpush1.msra.mxu0 0.0
  %1639 = vmatprep.mubr.f32.mxu0 0.0
  %1640 = vmatmul.mubr.f32.gmra.mrb[0].mxu0 %v1528
  %v1641 = vpop.f32.mrb[0].mxu0
  %v1642 = vadd.f32 %v1526, %v1641
  %v1643 = vpop.f32.mrb[0].mxu0
  %1644 = vmatprep.mubr.f32.mxu0 0.0
  %1645 = vmatmul.mubr.f32.gmra.mrb[0].mxu0 %v1531
  %v1646 = vpop.f32.mrb[0].mxu0
  %v1647 = vadd.f32 %v1526, %v1646
  %v1648 = vpop.f32.mrb[0].mxu0
  %1649 = vmatprep.mubr.f32.mxu0 0.0
  %1650 = vmatmul.mubr.f32.gmra.mrb[0].mxu0 %v1534
  %v1651 = vpop.f32.mrb[0].mxu0
  %v1652 = vadd.f32 %v1526, %v1651
  %v1653 = vpop.f32.mrb[0].mxu0
  %1654 = vmatprep.mubr.f32.mxu0 0.0
  %1655 = vmatmul.mubr.f32.gmra.mrb[0].mxu0 %v1537
  %v1656 = vpop.f32.mrb[0].mxu0
  %v1657 = vadd.f32 %v1526, %v1656
  %v1658 = vpop.f32.mrb[0].mxu0
  %1659 = vmatprep.mubr.f32.mxu0 0.0
  %1660 = vmatmul.mubr.f32.gmra.mrb[0].mxu0 %v1540
  %v1661 = vpop.f32.mrb[0].mxu0
  %v1662 = vadd.f32 %v1526, %v1661
  %v1663 = vpop.f32.mrb[0].mxu0
  %1664 = vmatprep.mubr.f32.mxu0 0.0
  %1665 = vmatmul.mubr.f32.gmra.mrb[0].mxu0 %v1543
  %v1666 = vpop.f32.mrb[0].mxu0
  %v1667 = vadd.f32 %v1526, %v1666
  %v1668 = vpop.f32.mrb[0].mxu0
  %1669 = vmatprep.mubr.f32.mxu0 0.0
  %1670 = vmatmul.mubr.f32.gmra.mrb[0].mxu0 %v1546
  %v1671 = vpop.f32.mrb[0].mxu0
  %v1672 = vadd.f32 %v1526, %v1671
  %v1673 = vpop.f32.mrb[0].mxu0
  %1674 = vmatprep.mubr.f32.mxu0 0.0
  %1675 = vmatmul.mubr.f32.gmra.mrb[0].mxu0 %v1549
  %v1676 = vpop.f32.mrb[0].mxu0
  %v1677 = vadd.f32 %v1526, %v1676
  %v1678 = vpop.f32.mrb[0].mxu0
  %1679 = vmatprep.mubr.f32.mxu0 0.0
  %1680 = vmatmul.mubr.f32.gmra.mrb[0].mxu0 %v1552
  %v1681 = vpop.f32.mrb[0].mxu0
  %v1682 = vadd.f32 %v1526, %v1681
  %v1683 = vpop.f32.mrb[0].mxu0
  %1684 = vmatprep.mubr.f32.mxu0 0.0
  %1685 = vmatmul.mubr.f32.gmra.mrb[0].mxu0 %v1555
  %v1686 = vpop.f32.mrb[0].mxu0
  %v1687 = vadd.f32 %v1526, %v1686
  %v1688 = vpop.f32.mrb[0].mxu0
  %1689 = vmatprep.mubr.f32.mxu0 0.0
  %1690 = vmatmul.mubr.f32.gmra.mrb[0].mxu0 %v1558
  %v1691 = vpop.f32.mrb[0].mxu0
  %v1692 = vadd.f32 %v1526, %v1691
  %v1693 = vpop.f32.mrb[0].mxu0
  %1694 = vmatprep.mubr.f32.mxu0 0.0
  %1695 = vmatmul.mubr.f32.gmra.mrb[0].mxu0 %v1561
  %v1696 = vpop.f32.mrb[0].mxu0
  %v1697 = vadd.f32 %v1526, %v1696
  %v1698 = vpop.f32.mrb[0].mxu0
  %1699 = vmatprep.mubr.f32.mxu0 0.0
  %1700 = vmatmul.mubr.f32.gmra.mrb[0].mxu0 %v1564
  %v1701 = vpop.f32.mrb[0].mxu0
  %v1702 = vadd.f32 %v1526, %v1701
  %v1703 = vpop.f32.mrb[0].mxu0
  %1704 = vmatprep.mubr.f32.mxu0 0.0
  %1705 = vmatmul.mubr.f32.gmra.mrb[0].mxu0 %v1567
  %v1706 = vpop.f32.mrb[0].mxu0
  %v1707 = vadd.f32 %v1526, %v1706
  %v1708 = vpop.f32.mrb[0].mxu0
  %1709 = vmatprep.mubr.f32.mxu0 0.0
  %1710 = vmatmul.mubr.f32.gmra.mrb[0].mxu0 %v1570
  %v1711 = vpop.f32.mrb[0].mxu0
  %v1712 = vadd.f32 %v1526, %v1711
  %v1713 = vpop.f32.mrb[0].mxu0
  %1714 = vmatprep.mubr.f32.mxu0 0.0
  %1715 = vmatmul.mubr.f32.gmra.mrb[0].mxu0 %v1573
  %v1716 = vpop.f32.mrb[0].mxu0
  %v1717 = vadd.f32 %v1526, %v1716
  %v1718 = vpop.f32.mrb[0].mxu0
  %1719 = vdwg.mxu0
  %vm1720 = vcmp.ge.f32.partialorder %v1642, 0.0
  %vm1721 = vcmp.ge.f32.partialorder %v1647, 0.0
  %vm1722 = vcmp.ge.f32.partialorder %v1652, 0.0
  %vm1723 = vcmp.ge.f32.partialorder %v1657, 0.0
  %vm1724 = vcmp.ge.f32.partialorder %v1662, 0.0
  %vm1725 = vcmp.ge.f32.partialorder %v1667, 0.0
  %vm1726 = vcmp.ge.f32.partialorder %v1672, 0.0
  %vm1727 = vcmp.ge.f32.partialorder %v1677, 0.0
  %vm1728 = vcmp.ge.f32.partialorder %v1682, 0.0
  %vm1729 = vcmp.ge.f32.partialorder %v1687, 0.0
  %vm1730 = vcmp.ge.f32.partialorder %v1692, 0.0
  %vm1731 = vcmp.ge.f32.partialorder %v1697, 0.0
  %vm1732 = vcmp.ge.f32.partialorder %v1702, 0.0
  %vm1733 = vcmp.ge.f32.partialorder %v1707, 0.0
  %vm1734 = vcmp.ge.f32.partialorder %v1712, 0.0
  %vm1735 = vcmp.ge.f32.partialorder %v1717, 0.0
  %v1736 = vmul.f32 %v1642, 0.1
  %v1737 = vmul.f32 %v1647, 0.1
  %v1738 = vmul.f32 %v1652, 0.1
  %v1739 = vmul.f32 %v1657, 0.1
  %v1740 = vmul.f32 %v1662, 0.1
  %v1741 = vmul.f32 %v1667, 0.1
  %v1742 = vmul.f32 %v1672, 0.1
  %v1743 = vmul.f32 %v1677, 0.1
  %v1744 = vmul.f32 %v1682, 0.1
  %v1745 = vmul.f32 %v1687, 0.1
  %v1746 = vmul.f32 %v1692, 0.1
  %v1747 = vmul.f32 %v1697, 0.1
  %v1748 = vmul.f32 %v1702, 0.1
  %v1749 = vmul.f32 %v1707, 0.1
  %v1750 = vmul.f32 %v1712, 0.1
  %v1751 = vmul.f32 %v1717, 0.1
  %v1752 = vsel %vm1720, %v1642, %v1736
  %v1753 = vsel %vm1721, %v1647, %v1737
  %v1754 = vsel %vm1722, %v1652, %v1738
  %v1755 = vsel %vm1723, %v1657, %v1739
  %v1756 = vsel %vm1724, %v1662, %v1740
  %v1757 = vsel %vm1725, %v1667, %v1741
  %v1758 = vsel %vm1726, %v1672, %v1742
  %v1759 = vsel %vm1727, %v1677, %v1743
  %v1760 = vsel %vm1728, %v1682, %v1744
  %v1761 = vsel %vm1729, %v1687, %v1745
  %v1762 = vsel %vm1730, %v1692, %v1746
  %v1763 = vsel %vm1731, %v1697, %v1747
  %v1764 = vsel %vm1732, %v1702, %v1748
  %v1765 = vsel %vm1733, %v1707, %v1749
  %v1766 = vsel %vm1734, %v1712, %v1750
  %v1767 = vsel %vm1735, %v1717, %v1751
  %v1768 = vld [vmem:[%s1 + $0xd0] sm:$0xff]
  %v1769 = vld [vmem:[%s1 + $0xd8] sm:$0xff]
  %v1770 = vlaneseq
  %v1771 = vshrl.u32 %v1770, 7
  %v1772 = vsub.s32 0, %v1771
  %v1773 = vrot.slane %v279, %v1772
  %v1775 = vsel %vm33, %v1752, 0
  %v1778 = vsel %vm33, %v1753, 0
  %v1781 = vsel %vm33, %v1754, 0
  %v1784 = vsel %vm33, %v1755, 0
  %v1787 = vsel %vm33, %v1756, 0
  %v1790 = vsel %vm33, %v1757, 0
  %v1793 = vsel %vm33, %v1758, 0
  %v1796 = vsel %vm33, %v1759, 0
  %v1799 = vsel %vm33, %v1760, 0
  %v1802 = vsel %vm33, %v1761, 0
  %v1805 = vsel %vm33, %v1762, 0
  %v1808 = vsel %vm33, %v1763, 0
  %v1811 = vsel %vm33, %v1764, 0
  %v1814 = vsel %vm33, %v1765, 0
  %v1817 = vsel %vm33, %v1766, 0
  %v1820 = vsel %vm33, %v1767, 0
  %1822 = vmatprep.subr.mxu0 0.0
  %1823 = vmatpush1.msra.mxu0 %v1768
  %1824 = vmatprep.subr.mxu0 0.0
  %1825 = vmatpush1.msra.mxu0 %v1769
  %1826 = vmatprep.subr.mxu0 0.0
  %1827 = vmatpush1.msra.mxu0 0.0
  %1828 = vmatprep.subr.mxu0 0.0
  %1829 = vmatpush1.msra.mxu0 0.0
  %1830 = vmatprep.subr.mxu0 0.0
  %1831 = vmatpush1.msra.mxu0 0.0
  %1832 = vmatprep.subr.mxu0 0.0
  %1833 = vmatpush1.msra.mxu0 0.0
  %1834 = vmatprep.subr.mxu0 0.0
  %1835 = vmatpush1.msra.mxu0 0.0
  %1836 = vmatprep.subr.mxu0 0.0
  %1837 = vmatpush1.msra.mxu0 0.0
  %1838 = vmatprep.subr.mxu0 0.0
  %1839 = vmatpush1.msra.mxu0 0.0
  %1840 = vmatprep.subr.mxu0 0.0
  %1841 = vmatpush1.msra.mxu0 0.0
  %1842 = vmatprep.subr.mxu0 0.0
  %1843 = vmatpush1.msra.mxu0 0.0
  %1844 = vmatprep.subr.mxu0 0.0
  %1845 = vmatpush1.msra.mxu0 0.0
  %1846 = vmatprep.subr.mxu0 0.0
  %1847 = vmatpush1.msra.mxu0 0.0
  %1848 = vmatprep.subr.mxu0 0.0
  %1849 = vmatpush1.msra.mxu0 0.0
  %1850 = vmatprep.subr.mxu0 0.0
  %1851 = vmatpush1.msra.mxu0 0.0
  %1852 = vmatprep.subr.mxu0 0.0
  %1853 = vmatpush1.msra.mxu0 0.0
  %1854 = vmatprep.subr.mxu0 0.0
  %1855 = vmatpush1.msra.mxu0 0.0
  %1856 = vmatprep.subr.mxu0 0.0
  %1857 = vmatpush1.msra.mxu0 0.0
  %1858 = vmatprep.subr.mxu0 0.0
  %1859 = vmatpush1.msra.mxu0 0.0
  %1860 = vmatprep.subr.mxu0 0.0
  %1861 = vmatpush1.msra.mxu0 0.0
  %1862 = vmatprep.subr.mxu0 0.0
  %1863 = vmatpush1.msra.mxu0 0.0
  %1864 = vmatprep.subr.mxu0 0.0
  %1865 = vmatpush1.msra.mxu0 0.0
  %1866 = vmatprep.subr.mxu0 0.0
  %1867 = vmatpush1.msra.mxu0 0.0
  %1868 = vmatprep.subr.mxu0 0.0
  %1869 = vmatpush1.msra.mxu0 0.0
  %1870 = vmatprep.subr.mxu0 0.0
  %1871 = vmatpush1.msra.mxu0 0.0
  %1872 = vmatprep.subr.mxu0 0.0
  %1873 = vmatpush1.msra.mxu0 0.0
  %1874 = vmatprep.subr.mxu0 0.0
  %1875 = vmatpush1.msra.mxu0 0.0
  %1876 = vmatprep.subr.mxu0 0.0
  %1877 = vmatpush1.msra.mxu0 0.0
  %1878 = vmatprep.subr.mxu0 0.0
  %1879 = vmatpush1.msra.mxu0 0.0
  %1880 = vmatprep.subr.mxu0 0.0
  %1881 = vmatpush1.msra.mxu0 0.0
  %1882 = vmatprep.subr.mxu0 0.0
  %1883 = vmatpush1.msra.mxu0 0.0
  %1884 = vmatprep.subr.mxu0 0.0
  %1885 = vmatpush1.msra.mxu0 0.0
  %1886 = vmatprep.mubr.f32.mxu0 0.0
  %1887 = vmatmul.mubr.f32.gmra.mrb[0].mxu0 %v1775
  %v1888 = vpop.f32.mrb[0].mxu0
  %v1889 = vadd.f32 %v1773, %v1888
  %v1890 = vpop.f32.mrb[0].mxu0
  %1891 = vmatprep.mubr.f32.mxu0 0.0
  %1892 = vmatmul.mubr.f32.gmra.mrb[0].mxu0 %v1778
  %v1893 = vpop.f32.mrb[0].mxu0
  %v1894 = vadd.f32 %v1773, %v1893
  %v1895 = vpop.f32.mrb[0].mxu0
  %1896 = vmatprep.mubr.f32.mxu0 0.0
  %1897 = vmatmul.mubr.f32.gmra.mrb[0].mxu0 %v1781
  %v1898 = vpop.f32.mrb[0].mxu0
  %v1899 = vadd.f32 %v1773, %v1898
  %v1900 = vpop.f32.mrb[0].mxu0
  %1901 = vmatprep.mubr.f32.mxu0 0.0
  %1902 = vmatmul.mubr.f32.gmra.mrb[0].mxu0 %v1784
  %v1903 = vpop.f32.mrb[0].mxu0
  %v1904 = vadd.f32 %v1773, %v1903
  %v1905 = vpop.f32.mrb[0].mxu0
  %1906 = vmatprep.mubr.f32.mxu0 0.0
  %1907 = vmatmul.mubr.f32.gmra.mrb[0].mxu0 %v1787
  %v1908 = vpop.f32.mrb[0].mxu0
  %v1909 = vadd.f32 %v1773, %v1908
  %v1910 = vpop.f32.mrb[0].mxu0
  %1911 = vmatprep.mubr.f32.mxu0 0.0
  %1912 = vmatmul.mubr.f32.gmra.mrb[0].mxu0 %v1790
  %v1913 = vpop.f32.mrb[0].mxu0
  %v1914 = vadd.f32 %v1773, %v1913
  %v1915 = vpop.f32.mrb[0].mxu0
  %1916 = vmatprep.mubr.f32.mxu0 0.0
  %1917 = vmatmul.mubr.f32.gmra.mrb[0].mxu0 %v1793
  %v1918 = vpop.f32.mrb[0].mxu0
  %v1919 = vadd.f32 %v1773, %v1918
  %v1920 = vpop.f32.mrb[0].mxu0
  %1921 = vmatprep.mubr.f32.mxu0 0.0
  %1922 = vmatmul.mubr.f32.gmra.mrb[0].mxu0 %v1796
  %v1923 = vpop.f32.mrb[0].mxu0
  %v1924 = vadd.f32 %v1773, %v1923
  %v1925 = vpop.f32.mrb[0].mxu0
  %1926 = vmatprep.mubr.f32.mxu0 0.0
  %1927 = vmatmul.mubr.f32.gmra.mrb[0].mxu0 %v1799
  %v1928 = vpop.f32.mrb[0].mxu0
  %v1929 = vadd.f32 %v1773, %v1928
  %v1930 = vpop.f32.mrb[0].mxu0
  %1931 = vmatprep.mubr.f32.mxu0 0.0
  %1932 = vmatmul.mubr.f32.gmra.mrb[0].mxu0 %v1802
  %v1933 = vpop.f32.mrb[0].mxu0
  %v1934 = vadd.f32 %v1773, %v1933
  %v1935 = vpop.f32.mrb[0].mxu0
  %1936 = vmatprep.mubr.f32.mxu0 0.0
  %1937 = vmatmul.mubr.f32.gmra.mrb[0].mxu0 %v1805
  %v1938 = vpop.f32.mrb[0].mxu0
  %v1939 = vadd.f32 %v1773, %v1938
  %v1940 = vpop.f32.mrb[0].mxu0
  %1941 = vmatprep.mubr.f32.mxu0 0.0
  %1942 = vmatmul.mubr.f32.gmra.mrb[0].mxu0 %v1808
  %v1943 = vpop.f32.mrb[0].mxu0
  %v1944 = vadd.f32 %v1773, %v1943
  %v1945 = vpop.f32.mrb[0].mxu0
  %1946 = vmatprep.mubr.f32.mxu0 0.0
  %1947 = vmatmul.mubr.f32.gmra.mrb[0].mxu0 %v1811
  %v1948 = vpop.f32.mrb[0].mxu0
  %v1949 = vadd.f32 %v1773, %v1948
  %v1950 = vpop.f32.mrb[0].mxu0
  %1951 = vmatprep.mubr.f32.mxu0 0.0
  %1952 = vmatmul.mubr.f32.gmra.mrb[0].mxu0 %v1814
  %v1953 = vpop.f32.mrb[0].mxu0
  %v1954 = vadd.f32 %v1773, %v1953
  %v1955 = vpop.f32.mrb[0].mxu0
  %1956 = vmatprep.mubr.f32.mxu0 0.0
  %1957 = vmatmul.mubr.f32.gmra.mrb[0].mxu0 %v1817
  %v1958 = vpop.f32.mrb[0].mxu0
  %v1959 = vadd.f32 %v1773, %v1958
  %v1960 = vpop.f32.mrb[0].mxu0
  %1961 = vmatprep.mubr.f32.mxu0 0.0
  %1962 = vmatmul.mubr.f32.gmra.mrb[0].mxu0 %v1820
  %v1963 = vpop.f32.mrb[0].mxu0
  %v1964 = vadd.f32 %v1773, %v1963
  %v1965 = vpop.f32.mrb[0].mxu0
  %1966 = vdwg.mxu0
  %vm1967 = vcmp.ge.f32.partialorder %v1889, 0.0
  %vm1968 = vcmp.ge.f32.partialorder %v1894, 0.0
  %vm1969 = vcmp.ge.f32.partialorder %v1899, 0.0
  %vm1970 = vcmp.ge.f32.partialorder %v1904, 0.0
  %vm1971 = vcmp.ge.f32.partialorder %v1909, 0.0
  %vm1972 = vcmp.ge.f32.partialorder %v1914, 0.0
  %vm1973 = vcmp.ge.f32.partialorder %v1919, 0.0
  %vm1974 = vcmp.ge.f32.partialorder %v1924, 0.0
  %vm1975 = vcmp.ge.f32.partialorder %v1929, 0.0
  %vm1976 = vcmp.ge.f32.partialorder %v1934, 0.0
  %vm1977 = vcmp.ge.f32.partialorder %v1939, 0.0
  %vm1978 = vcmp.ge.f32.partialorder %v1944, 0.0
  %vm1979 = vcmp.ge.f32.partialorder %v1949, 0.0
  %vm1980 = vcmp.ge.f32.partialorder %v1954, 0.0
  %vm1981 = vcmp.ge.f32.partialorder %v1959, 0.0
  %vm1982 = vcmp.ge.f32.partialorder %v1964, 0.0
  %v1983 = vmul.f32 %v1889, 0.1
  %v1984 = vmul.f32 %v1894, 0.1
  %v1985 = vmul.f32 %v1899, 0.1
  %v1986 = vmul.f32 %v1904, 0.1
  %v1987 = vmul.f32 %v1909, 0.1
  %v1988 = vmul.f32 %v1914, 0.1
  %v1989 = vmul.f32 %v1919, 0.1
  %v1990 = vmul.f32 %v1924, 0.1
  %v1991 = vmul.f32 %v1929, 0.1
  %v1992 = vmul.f32 %v1934, 0.1
  %v1993 = vmul.f32 %v1939, 0.1
  %v1994 = vmul.f32 %v1944, 0.1
  %v1995 = vmul.f32 %v1949, 0.1
  %v1996 = vmul.f32 %v1954, 0.1
  %v1997 = vmul.f32 %v1959, 0.1
  %v1998 = vmul.f32 %v1964, 0.1
  %v1999 = vsel %vm1967, %v1889, %v1983
  %v2000 = vsel %vm1968, %v1894, %v1984
  %v2001 = vsel %vm1969, %v1899, %v1985
  %v2002 = vsel %vm1970, %v1904, %v1986
  %v2003 = vsel %vm1971, %v1909, %v1987
  %v2004 = vsel %vm1972, %v1914, %v1988
  %v2005 = vsel %vm1973, %v1919, %v1989
  %v2006 = vsel %vm1974, %v1924, %v1990
  %v2007 = vsel %vm1975, %v1929, %v1991
  %v2008 = vsel %vm1976, %v1934, %v1992
  %v2009 = vsel %vm1977, %v1939, %v1993
  %v2010 = vsel %vm1978, %v1944, %v1994
  %v2011 = vsel %vm1979, %v1949, %v1995
  %v2012 = vsel %vm1980, %v1954, %v1996
  %v2013 = vsel %vm1981, %v1959, %v1997
  %v2014 = vsel %vm1982, %v1964, %v1998
  %v2016 = vsel %vm33, %v1999, 0
  %v2019 = vsel %vm33, %v2000, 0
  %v2022 = vsel %vm33, %v2001, 0
  %v2025 = vsel %vm33, %v2002, 0
  %v2028 = vsel %vm33, %v2003, 0
  %v2031 = vsel %vm33, %v2004, 0
  %v2034 = vsel %vm33, %v2005, 0
  %v2037 = vsel %vm33, %v2006, 0
  %v2040 = vsel %vm33, %v2007, 0
  %v2043 = vsel %vm33, %v2008, 0
  %v2046 = vsel %vm33, %v2009, 0
  %v2049 = vsel %vm33, %v2010, 0
  %v2052 = vsel %vm33, %v2011, 0
  %v2055 = vsel %vm33, %v2012, 0
  %v2058 = vsel %vm33, %v2013, 0
  %v2061 = vsel %vm33, %v2014, 0
  %2063 = vmatprep.subr.mxu0 0.0
  %2064 = vmatpush1.msra.mxu0 %v1768
  %2065 = vmatprep.subr.mxu0 0.0
  %2066 = vmatpush1.msra.mxu0 %v1769
  %2067 = vmatprep.subr.mxu0 0.0
  %2068 = vmatpush1.msra.mxu0 0.0
  %2069 = vmatprep.subr.mxu0 0.0
  %2070 = vmatpush1.msra.mxu0 0.0
  %2071 = vmatprep.subr.mxu0 0.0
  %2072 = vmatpush1.msra.mxu0 0.0
  %2073 = vmatprep.subr.mxu0 0.0
  %2074 = vmatpush1.msra.mxu0 0.0
  %2075 = vmatprep.subr.mxu0 0.0
  %2076 = vmatpush1.msra.mxu0 0.0
  %2077 = vmatprep.subr.mxu0 0.0
  %2078 = vmatpush1.msra.mxu0 0.0
  %2079 = vmatprep.subr.mxu0 0.0
  %2080 = vmatpush1.msra.mxu0 0.0
  %2081 = vmatprep.subr.mxu0 0.0
  %2082 = vmatpush1.msra.mxu0 0.0
  %2083 = vmatprep.subr.mxu0 0.0
  %2084 = vmatpush1.msra.mxu0 0.0
  %2085 = vmatprep.subr.mxu0 0.0
  %2086 = vmatpush1.msra.mxu0 0.0
  %2087 = vmatprep.subr.mxu0 0.0
  %2088 = vmatpush1.msra.mxu0 0.0
  %2089 = vmatprep.subr.mxu0 0.0
  %2090 = vmatpush1.msra.mxu0 0.0
  %2091 = vmatprep.subr.mxu0 0.0
  %2092 = vmatpush1.msra.mxu0 0.0
  %2093 = vmatprep.subr.mxu0 0.0
  %2094 = vmatpush1.msra.mxu0 0.0
  %2095 = vmatprep.subr.mxu0 0.0
  %2096 = vmatpush1.msra.mxu0 0.0
  %2097 = vmatprep.subr.mxu0 0.0
  %2098 = vmatpush1.msra.mxu0 0.0
  %2099 = vmatprep.subr.mxu0 0.0
  %2100 = vmatpush1.msra.mxu0 0.0
  %2101 = vmatprep.subr.mxu0 0.0
  %2102 = vmatpush1.msra.mxu0 0.0
  %2103 = vmatprep.subr.mxu0 0.0
  %2104 = vmatpush1.msra.mxu0 0.0
  %2105 = vmatprep.subr.mxu0 0.0
  %2106 = vmatpush1.msra.mxu0 0.0
  %2107 = vmatprep.subr.mxu0 0.0
  %2108 = vmatpush1.msra.mxu0 0.0
  %2109 = vmatprep.subr.mxu0 0.0
  %2110 = vmatpush1.msra.mxu0 0.0
  %2111 = vmatprep.subr.mxu0 0.0
  %2112 = vmatpush1.msra.mxu0 0.0
  %2113 = vmatprep.subr.mxu0 0.0
  %2114 = vmatpush1.msra.mxu0 0.0
  %2115 = vmatprep.subr.mxu0 0.0
  %2116 = vmatpush1.msra.mxu0 0.0
  %2117 = vmatprep.subr.mxu0 0.0
  %2118 = vmatpush1.msra.mxu0 0.0
  %2119 = vmatprep.subr.mxu0 0.0
  %2120 = vmatpush1.msra.mxu0 0.0
  %2121 = vmatprep.subr.mxu0 0.0
  %2122 = vmatpush1.msra.mxu0 0.0
  %2123 = vmatprep.subr.mxu0 0.0
  %2124 = vmatpush1.msra.mxu0 0.0
  %2125 = vmatprep.subr.mxu0 0.0
  %2126 = vmatpush1.msra.mxu0 0.0
  %2127 = vmatprep.mubr.f32.mxu0 0.0
  %2128 = vmatmul.mubr.f32.gmra.mrb[0].mxu0 %v2016
  %v2129 = vpop.f32.mrb[0].mxu0
  %v2130 = vadd.f32 %v1773, %v2129
  %v2131 = vpop.f32.mrb[0].mxu0
  %2132 = vmatprep.mubr.f32.mxu0 0.0
  %2133 = vmatmul.mubr.f32.gmra.mrb[0].mxu0 %v2019
  %v2134 = vpop.f32.mrb[0].mxu0
  %v2135 = vadd.f32 %v1773, %v2134
  %v2136 = vpop.f32.mrb[0].mxu0
  %2137 = vmatprep.mubr.f32.mxu0 0.0
  %2138 = vmatmul.mubr.f32.gmra.mrb[0].mxu0 %v2022
  %v2139 = vpop.f32.mrb[0].mxu0
  %v2140 = vadd.f32 %v1773, %v2139
  %v2141 = vpop.f32.mrb[0].mxu0
  %2142 = vmatprep.mubr.f32.mxu0 0.0
  %2143 = vmatmul.mubr.f32.gmra.mrb[0].mxu0 %v2025
  %v2144 = vpop.f32.mrb[0].mxu0
  %v2145 = vadd.f32 %v1773, %v2144
  %v2146 = vpop.f32.mrb[0].mxu0
  %2147 = vmatprep.mubr.f32.mxu0 0.0
  %2148 = vmatmul.mubr.f32.gmra.mrb[0].mxu0 %v2028
  %v2149 = vpop.f32.mrb[0].mxu0
  %v2150 = vadd.f32 %v1773, %v2149
  %v2151 = vpop.f32.mrb[0].mxu0
  %2152 = vmatprep.mubr.f32.mxu0 0.0
  %2153 = vmatmul.mubr.f32.gmra.mrb[0].mxu0 %v2031
  %v2154 = vpop.f32.mrb[0].mxu0
  %v2155 = vadd.f32 %v1773, %v2154
  %v2156 = vpop.f32.mrb[0].mxu0
  %2157 = vmatprep.mubr.f32.mxu0 0.0
  %2158 = vmatmul.mubr.f32.gmra.mrb[0].mxu0 %v2034
  %v2159 = vpop.f32.mrb[0].mxu0
  %v2160 = vadd.f32 %v1773, %v2159
  %v2161 = vpop.f32.mrb[0].mxu0
  %2162 = vmatprep.mubr.f32.mxu0 0.0
  %2163 = vmatmul.mubr.f32.gmra.mrb[0].mxu0 %v2037
  %v2164 = vpop.f32.mrb[0].mxu0
  %v2165 = vadd.f32 %v1773, %v2164
  %v2166 = vpop.f32.mrb[0].mxu0
  %2167 = vmatprep.mubr.f32.mxu0 0.0
  %2168 = vmatmul.mubr.f32.gmra.mrb[0].mxu0 %v2040
  %v2169 = vpop.f32.mrb[0].mxu0
  %v2170 = vadd.f32 %v1773, %v2169
  %v2171 = vpop.f32.mrb[0].mxu0
  %2172 = vmatprep.mubr.f32.mxu0 0.0
  %2173 = vmatmul.mubr.f32.gmra.mrb[0].mxu0 %v2043
  %v2174 = vpop.f32.mrb[0].mxu0
  %v2175 = vadd.f32 %v1773, %v2174
  %v2176 = vpop.f32.mrb[0].mxu0
  %2177 = vmatprep.mubr.f32.mxu0 0.0
  %2178 = vmatmul.mubr.f32.gmra.mrb[0].mxu0 %v2046
  %v2179 = vpop.f32.mrb[0].mxu0
  %v2180 = vadd.f32 %v1773, %v2179
  %v2181 = vpop.f32.mrb[0].mxu0
  %2182 = vmatprep.mubr.f32.mxu0 0.0
  %2183 = vmatmul.mubr.f32.gmra.mrb[0].mxu0 %v2049
  %v2184 = vpop.f32.mrb[0].mxu0
  %v2185 = vadd.f32 %v1773, %v2184
  %v2186 = vpop.f32.mrb[0].mxu0
  %2187 = vmatprep.mubr.f32.mxu0 0.0
  %2188 = vmatmul.mubr.f32.gmra.mrb[0].mxu0 %v2052
  %v2189 = vpop.f32.mrb[0].mxu0
  %v2190 = vadd.f32 %v1773, %v2189
  %v2191 = vpop.f32.mrb[0].mxu0
  %2192 = vmatprep.mubr.f32.mxu0 0.0
  %2193 = vmatmul.mubr.f32.gmra.mrb[0].mxu0 %v2055
  %v2194 = vpop.f32.mrb[0].mxu0
  %v2195 = vadd.f32 %v1773, %v2194
  %v2196 = vpop.f32.mrb[0].mxu0
  %2197 = vmatprep.mubr.f32.mxu0 0.0
  %2198 = vmatmul.mubr.f32.gmra.mrb[0].mxu0 %v2058
  %v2199 = vpop.f32.mrb[0].mxu0
  %v2200 = vadd.f32 %v1773, %v2199
  %v2201 = vpop.f32.mrb[0].mxu0
  %2202 = vmatprep.mubr.f32.mxu0 0.0
  %2203 = vmatmul.mubr.f32.gmra.mrb[0].mxu0 %v2061
  %v2204 = vpop.f32.mrb[0].mxu0
  %v2205 = vadd.f32 %v1773, %v2204
  %v2206 = vpop.f32.mrb[0].mxu0
  %2207 = vdwg.mxu0
  %vm2208 = vcmp.ge.f32.partialorder %v2130, 0.0
  %vm2209 = vcmp.ge.f32.partialorder %v2135, 0.0
  %vm2210 = vcmp.ge.f32.partialorder %v2140, 0.0
  %vm2211 = vcmp.ge.f32.partialorder %v2145, 0.0
  %vm2212 = vcmp.ge.f32.partialorder %v2150, 0.0
  %vm2213 = vcmp.ge.f32.partialorder %v2155, 0.0
  %vm2214 = vcmp.ge.f32.partialorder %v2160, 0.0
  %vm2215 = vcmp.ge.f32.partialorder %v2165, 0.0
  %vm2216 = vcmp.ge.f32.partialorder %v2170, 0.0
  %vm2217 = vcmp.ge.f32.partialorder %v2175, 0.0
  %vm2218 = vcmp.ge.f32.partialorder %v2180, 0.0
  %vm2219 = vcmp.ge.f32.partialorder %v2185, 0.0
  %vm2220 = vcmp.ge.f32.partialorder %v2190, 0.0
  %vm2221 = vcmp.ge.f32.partialorder %v2195, 0.0
  %vm2222 = vcmp.ge.f32.partialorder %v2200, 0.0
  %vm2223 = vcmp.ge.f32.partialorder %v2205, 0.0
  %v2224 = vmul.f32 %v2130, 0.1
  %v2225 = vmul.f32 %v2135, 0.1
  %v2226 = vmul.f32 %v2140, 0.1
  %v2227 = vmul.f32 %v2145, 0.1
  %v2228 = vmul.f32 %v2150, 0.1
  %v2229 = vmul.f32 %v2155, 0.1
  %v2230 = vmul.f32 %v2160, 0.1
  %v2231 = vmul.f32 %v2165, 0.1
  %v2232 = vmul.f32 %v2170, 0.1
  %v2233 = vmul.f32 %v2175, 0.1
  %v2234 = vmul.f32 %v2180, 0.1
  %v2235 = vmul.f32 %v2185, 0.1
  %v2236 = vmul.f32 %v2190, 0.1
  %v2237 = vmul.f32 %v2195, 0.1
  %v2238 = vmul.f32 %v2200, 0.1
  %v2239 = vmul.f32 %v2205, 0.1
  %v2240 = vsel %vm2208, %v2130, %v2224
  %v2241 = vsel %vm2209, %v2135, %v2225
  %v2242 = vsel %vm2210, %v2140, %v2226
  %v2243 = vsel %vm2211, %v2145, %v2227
  %v2244 = vsel %vm2212, %v2150, %v2228
  %v2245 = vsel %vm2213, %v2155, %v2229
  %v2246 = vsel %vm2214, %v2160, %v2230
  %v2247 = vsel %vm2215, %v2165, %v2231
  %v2248 = vsel %vm2216, %v2170, %v2232
  %v2249 = vsel %vm2217, %v2175, %v2233
  %v2250 = vsel %vm2218, %v2180, %v2234
  %v2251 = vsel %vm2219, %v2185, %v2235
  %v2252 = vsel %vm2220, %v2190, %v2236
  %v2253 = vsel %vm2221, %v2195, %v2237
  %v2254 = vsel %vm2222, %v2200, %v2238
  %v2255 = vsel %vm2223, %v2205, %v2239
  %v2256 = vld [vmem:[%s1 + $0xe0] sm:$0xff]
  %v2257 = vld [vmem:[%s1 + $0xe8] sm:$0xff]
  %v2259 = vsel %vm33, %v2240, 0
  %v2262 = vsel %vm33, %v2241, 0
  %v2265 = vsel %vm33, %v2242, 0
  %v2268 = vsel %vm33, %v2243, 0
  %v2271 = vsel %vm33, %v2244, 0
  %v2274 = vsel %vm33, %v2245, 0
  %v2277 = vsel %vm33, %v2246, 0
  %v2280 = vsel %vm33, %v2247, 0
  %v2283 = vsel %vm33, %v2248, 0
  %v2286 = vsel %vm33, %v2249, 0
  %v2289 = vsel %vm33, %v2250, 0
  %v2292 = vsel %vm33, %v2251, 0
  %v2295 = vsel %vm33, %v2252, 0
  %v2298 = vsel %vm33, %v2253, 0
  %v2301 = vsel %vm33, %v2254, 0
  %v2304 = vsel %vm33, %v2255, 0
  %2306 = vmatprep.subr.mxu0 0.0
  %2307 = vmatpush1.msra.mxu0 %v2256
  %2308 = vmatprep.subr.mxu0 0.0
  %2309 = vmatpush1.msra.mxu0 %v2257
  %2310 = vmatprep.subr.mxu0 0.0
  %2311 = vmatpush1.msra.mxu0 0.0
  %2312 = vmatprep.subr.mxu0 0.0
  %2313 = vmatpush1.msra.mxu0 0.0
  %2314 = vmatprep.subr.mxu0 0.0
  %2315 = vmatpush1.msra.mxu0 0.0
  %2316 = vmatprep.subr.mxu0 0.0
  %2317 = vmatpush1.msra.mxu0 0.0
  %2318 = vmatprep.subr.mxu0 0.0
  %2319 = vmatpush1.msra.mxu0 0.0
  %2320 = vmatprep.subr.mxu0 0.0
  %2321 = vmatpush1.msra.mxu0 0.0
  %2322 = vmatprep.subr.mxu0 0.0
  %2323 = vmatpush1.msra.mxu0 0.0
  %2324 = vmatprep.subr.mxu0 0.0
  %2325 = vmatpush1.msra.mxu0 0.0
  %2326 = vmatprep.subr.mxu0 0.0
  %2327 = vmatpush1.msra.mxu0 0.0
  %2328 = vmatprep.subr.mxu0 0.0
  %2329 = vmatpush1.msra.mxu0 0.0
  %2330 = vmatprep.subr.mxu0 0.0
  %2331 = vmatpush1.msra.mxu0 0.0
  %2332 = vmatprep.subr.mxu0 0.0
  %2333 = vmatpush1.msra.mxu0 0.0
  %2334 = vmatprep.subr.mxu0 0.0
  %2335 = vmatpush1.msra.mxu0 0.0
  %2336 = vmatprep.subr.mxu0 0.0
  %2337 = vmatpush1.msra.mxu0 0.0
  %2338 = vmatprep.subr.mxu0 0.0
  %2339 = vmatpush1.msra.mxu0 0.0
  %2340 = vmatprep.subr.mxu0 0.0
  %2341 = vmatpush1.msra.mxu0 0.0
  %2342 = vmatprep.subr.mxu0 0.0
  %2343 = vmatpush1.msra.mxu0 0.0
  %2344 = vmatprep.subr.mxu0 0.0
  %2345 = vmatpush1.msra.mxu0 0.0
  %2346 = vmatprep.subr.mxu0 0.0
  %2347 = vmatpush1.msra.mxu0 0.0
  %2348 = vmatprep.subr.mxu0 0.0
  %2349 = vmatpush1.msra.mxu0 0.0
  %2350 = vmatprep.subr.mxu0 0.0
  %2351 = vmatpush1.msra.mxu0 0.0
  %2352 = vmatprep.subr.mxu0 0.0
  %2353 = vmatpush1.msra.mxu0 0.0
  %2354 = vmatprep.subr.mxu0 0.0
  %2355 = vmatpush1.msra.mxu0 0.0
  %2356 = vmatprep.subr.mxu0 0.0
  %2357 = vmatpush1.msra.mxu0 0.0
  %2358 = vmatprep.subr.mxu0 0.0
  %2359 = vmatpush1.msra.mxu0 0.0
  %2360 = vmatprep.subr.mxu0 0.0
  %2361 = vmatpush1.msra.mxu0 0.0
  %2362 = vmatprep.subr.mxu0 0.0
  %2363 = vmatpush1.msra.mxu0 0.0
  %2364 = vmatprep.subr.mxu0 0.0
  %2365 = vmatpush1.msra.mxu0 0.0
  %2366 = vmatprep.subr.mxu0 0.0
  %2367 = vmatpush1.msra.mxu0 0.0
  %2368 = vmatprep.subr.mxu0 0.0
  %2369 = vmatpush1.msra.mxu0 0.0
  %2370 = vmatprep.mubr.f32.mxu0 0.0
  %2371 = vmatmul.mubr.f32.gmra.mrb[0].mxu0 %v2259
  %v2372 = vpop.f32.mrb[0].mxu0
  %v2373 = vadd.f32 0.0, %v2372
  %v2374 = vpop.f32.mrb[0].mxu0
  %2375 = vmatprep.mubr.f32.mxu0 0.0
  %2376 = vmatmul.mubr.f32.gmra.mrb[0].mxu0 %v2262
  %v2377 = vpop.f32.mrb[0].mxu0
  %v2378 = vadd.f32 0.0, %v2377
  %v2379 = vpop.f32.mrb[0].mxu0
  %2380 = vmatprep.mubr.f32.mxu0 0.0
  %2381 = vmatmul.mubr.f32.gmra.mrb[0].mxu0 %v2265
  %v2382 = vpop.f32.mrb[0].mxu0
  %v2383 = vadd.f32 0.0, %v2382
  %v2384 = vpop.f32.mrb[0].mxu0
  %2385 = vmatprep.mubr.f32.mxu0 0.0
  %2386 = vmatmul.mubr.f32.gmra.mrb[0].mxu0 %v2268
  %v2387 = vpop.f32.mrb[0].mxu0
  %v2388 = vadd.f32 0.0, %v2387
  %v2389 = vpop.f32.mrb[0].mxu0
  %2390 = vmatprep.mubr.f32.mxu0 0.0
  %2391 = vmatmul.mubr.f32.gmra.mrb[0].mxu0 %v2271
  %v2392 = vpop.f32.mrb[0].mxu0
  %v2393 = vadd.f32 0.0, %v2392
  %v2394 = vpop.f32.mrb[0].mxu0
  %2395 = vmatprep.mubr.f32.mxu0 0.0
  %2396 = vmatmul.mubr.f32.gmra.mrb[0].mxu0 %v2274
  %v2397 = vpop.f32.mrb[0].mxu0
  %v2398 = vadd.f32 0.0, %v2397
  %v2399 = vpop.f32.mrb[0].mxu0
  %2400 = vmatprep.mubr.f32.mxu0 0.0
  %2401 = vmatmul.mubr.f32.gmra.mrb[0].mxu0 %v2277
  %v2402 = vpop.f32.mrb[0].mxu0
  %v2403 = vadd.f32 0.0, %v2402
  %v2404 = vpop.f32.mrb[0].mxu0
  %2405 = vmatprep.mubr.f32.mxu0 0.0
  %2406 = vmatmul.mubr.f32.gmra.mrb[0].mxu0 %v2280
  %v2407 = vpop.f32.mrb[0].mxu0
  %v2408 = vadd.f32 0.0, %v2407
  %v2409 = vpop.f32.mrb[0].mxu0
  %2410 = vmatprep.mubr.f32.mxu0 0.0
  %2411 = vmatmul.mubr.f32.gmra.mrb[0].mxu0 %v2283
  %v2412 = vpop.f32.mrb[0].mxu0
  %v2413 = vadd.f32 0.0, %v2412
  %v2414 = vpop.f32.mrb[0].mxu0
  %2415 = vmatprep.mubr.f32.mxu0 0.0
  %2416 = vmatmul.mubr.f32.gmra.mrb[0].mxu0 %v2286
  %v2417 = vpop.f32.mrb[0].mxu0
  %v2418 = vadd.f32 0.0, %v2417
  %v2419 = vpop.f32.mrb[0].mxu0
  %2420 = vmatprep.mubr.f32.mxu0 0.0
  %2421 = vmatmul.mubr.f32.gmra.mrb[0].mxu0 %v2289
  %v2422 = vpop.f32.mrb[0].mxu0
  %v2423 = vadd.f32 0.0, %v2422
  %v2424 = vpop.f32.mrb[0].mxu0
  %2425 = vmatprep.mubr.f32.mxu0 0.0
  %2426 = vmatmul.mubr.f32.gmra.mrb[0].mxu0 %v2292
  %v2427 = vpop.f32.mrb[0].mxu0
  %v2428 = vadd.f32 0.0, %v2427
  %v2429 = vpop.f32.mrb[0].mxu0
  %2430 = vmatprep.mubr.f32.mxu0 0.0
  %2431 = vmatmul.mubr.f32.gmra.mrb[0].mxu0 %v2295
  %v2432 = vpop.f32.mrb[0].mxu0
  %v2433 = vadd.f32 0.0, %v2432
  %v2434 = vpop.f32.mrb[0].mxu0
  %2435 = vmatprep.mubr.f32.mxu0 0.0
  %2436 = vmatmul.mubr.f32.gmra.mrb[0].mxu0 %v2298
  %v2437 = vpop.f32.mrb[0].mxu0
  %v2438 = vadd.f32 0.0, %v2437
  %v2439 = vpop.f32.mrb[0].mxu0
  %2440 = vmatprep.mubr.f32.mxu0 0.0
  %2441 = vmatmul.mubr.f32.gmra.mrb[0].mxu0 %v2301
  %v2442 = vpop.f32.mrb[0].mxu0
  %v2443 = vadd.f32 0.0, %v2442
  %v2444 = vpop.f32.mrb[0].mxu0
  %2445 = vmatprep.mubr.f32.mxu0 0.0
  %2446 = vmatmul.mubr.f32.gmra.mrb[0].mxu0 %v2304
  %v2447 = vpop.f32.mrb[0].mxu0
  %v2448 = vadd.f32 0.0, %v2447
  %v2449 = vpop.f32.mrb[0].mxu0
  %2450 = vdwg.mxu0
  %v2451 = vld [vmem:[%s1 + $0xf8] sm:$0x1]
  %v2452 = vld [vmem:[%s1 + $0xf9] sm:$0x1]
  %v2453 = vld [vmem:[%s1 + $0xfa] sm:$0x1]
  %v2454 = vld [vmem:[%s1 + $0xfb] sm:$0x1]
  %v2455 = vld [vmem:[%s1 + $0xfc] sm:$0x1]
  %v2456 = vld [vmem:[%s1 + $0xfd] sm:$0x1]
  %v2457 = vld [vmem:[%s1 + $0xfe] sm:$0x1]
  %v2458 = vld [vmem:[%s1 + $0xff] sm:$0x1]
  %v2459 = vld [vmem:[%s1 + $0x100] sm:$0x1]
  %s2460 = sld [smem:[#allocation2]]
  %v2461 = vlaneseq
  %v2462 = vshrl.u32 %v2461, 7
  %v2463 = vsub.s32 0, %v2462
  %v2464 = vrot.slane %v2451, %v2463
  %v2465 = vmul.f32 %v2373, %v2464
  %v2466 = vmul.f32 %v2378, %v2464
  %v2467 = vmul.f32 %v2383, %v2464
  %v2468 = vmul.f32 %v2388, %v2464
  %v2469 = vmul.f32 %v2393, %v2464
  %v2470 = vmul.f32 %v2398, %v2464
  %v2471 = vadd.f32 %v2465, 0.0
  %v2472 = vadd.f32 %v2466, 0.0
  %v2473 = vadd.f32 %v2467, 0.0
  %v2474 = vadd.f32 %v2468, 0.0
  %v2475 = vadd.f32 %v2469, 0.0
  %v2476 = vadd.f32 %v2470, 0.0
  %v2477 = vlaneseq
  %v2478 = vshrl.u32 %v2477, 7
  %v2479 = vsub.s32 0, %v2478
  %v2480 = vrot.slane %v2452, %v2479
  %v2481 = vmul.f32 %v2373, %v2480
  %v2482 = vmul.f32 %v2378, %v2480
  %v2483 = vmul.f32 %v2383, %v2480
  %v2484 = vmul.f32 %v2388, %v2480
  %v2485 = vmul.f32 %v2393, %v2480
  %v2486 = vmul.f32 %v2398, %v2480
  %v2493 = vrot.slane %v2481, 1
  %v2494 = vrot.slane %v2482, 1
  %v2495 = vrot.slane %v2483, 1
  %v2496 = vrot.slane %v2484, 1
  %v2497 = vrot.slane %v2485, 1
  %v2498 = vrot.slane %v2486, 1
  %v2505 = vadd.f32 %v2471, %v2493
  %v2506 = vadd.f32 %v2472, %v2494
  %v2507 = vadd.f32 %v2473, %v2495
  %v2508 = vadd.f32 %v2474, %v2496
  %v2509 = vadd.f32 %v2475, %v2497
  %v2510 = vadd.f32 %v2476, %v2498
  %v2511 = vlaneseq
  %v2512 = vshrl.u32 %v2511, 7
  %v2513 = vsub.s32 0, %v2512
  %v2514 = vrot.slane %v2453, %v2513
  %v2515 = vmul.f32 %v2373, %v2514
  %v2516 = vmul.f32 %v2378, %v2514
  %v2517 = vmul.f32 %v2383, %v2514
  %v2518 = vmul.f32 %v2388, %v2514
  %v2519 = vmul.f32 %v2393, %v2514
  %v2520 = vmul.f32 %v2398, %v2514
  %v2527 = vrot.slane %v2515, 2
  %v2528 = vrot.slane %v2516, 2
  %v2529 = vrot.slane %v2517, 2
  %v2530 = vrot.slane %v2518, 2
  %v2531 = vrot.slane %v2519, 2
  %v2532 = vrot.slane %v2520, 2
  %v2539 = vadd.f32 %v2505, %v2527
  %v2540 = vadd.f32 %v2506, %v2528
  %v2541 = vadd.f32 %v2507, %v2529
  %v2542 = vadd.f32 %v2508, %v2530
  %v2543 = vadd.f32 %v2509, %v2531
  %v2544 = vadd.f32 %v2510, %v2532
  %v2545 = vlaneseq
  %v2546 = vshrl.u32 %v2545, 7
  %v2547 = vsub.s32 0, %v2546
  %v2548 = vrot.slane %v2454, %v2547
  %v2549 = vmul.f32 %v2378, %v2548
  %v2550 = vmul.f32 %v2383, %v2548
  %v2551 = vmul.f32 %v2388, %v2548
  %v2552 = vmul.f32 %v2393, %v2548
  %v2553 = vmul.f32 %v2398, %v2548
  %v2554 = vmul.f32 %v2403, %v2548
  %v2555 = vadd.f32 %v2539, %v2549
  %v2556 = vadd.f32 %v2540, %v2550
  %v2557 = vadd.f32 %v2541, %v2551
  %v2558 = vadd.f32 %v2542, %v2552
  %v2559 = vadd.f32 %v2543, %v2553
  %v2560 = vadd.f32 %v2544, %v2554
  %v2561 = vlaneseq
  %v2562 = vshrl.u32 %v2561, 7
  %v2563 = vsub.s32 0, %v2562
  %v2564 = vrot.slane %v2455, %v2563
  %v2565 = vmul.f32 %v2378, %v2564
  %v2566 = vmul.f32 %v2383, %v2564
  %v2567 = vmul.f32 %v2388, %v2564
  %v2568 = vmul.f32 %v2393, %v2564
  %v2569 = vmul.f32 %v2398, %v2564
  %v2570 = vmul.f32 %v2403, %v2564
  %v2577 = vrot.slane %v2565, 1
  %v2578 = vrot.slane %v2566, 1
  %v2579 = vrot.slane %v2567, 1
  %v2580 = vrot.slane %v2568, 1
  %v2581 = vrot.slane %v2569, 1
  %v2582 = vrot.slane %v2570, 1
  %v2589 = vadd.f32 %v2555, %v2577
  %v2590 = vadd.f32 %v2556, %v2578
  %v2591 = vadd.f32 %v2557, %v2579
  %v2592 = vadd.f32 %v2558, %v2580
  %v2593 = vadd.f32 %v2559, %v2581
  %v2594 = vadd.f32 %v2560, %v2582
  %v2595 = vlaneseq
  %v2596 = vshrl.u32 %v2595, 7
  %v2597 = vsub.s32 0, %v2596
  %v2598 = vrot.slane %v2456, %v2597
  %v2599 = vmul.f32 %v2378, %v2598
  %v2600 = vmul.f32 %v2383, %v2598
  %v2601 = vmul.f32 %v2388, %v2598
  %v2602 = vmul.f32 %v2393, %v2598
  %v2603 = vmul.f32 %v2398, %v2598
  %v2604 = vmul.f32 %v2403, %v2598
  %v2611 = vrot.slane %v2599, 2
  %v2612 = vrot.slane %v2600, 2
  %v2613 = vrot.slane %v2601, 2
  %v2614 = vrot.slane %v2602, 2
  %v2615 = vrot.slane %v2603, 2
  %v2616 = vrot.slane %v2604, 2
  %v2623 = vadd.f32 %v2589, %v2611
  %v2624 = vadd.f32 %v2590, %v2612
  %v2625 = vadd.f32 %v2591, %v2613
  %v2626 = vadd.f32 %v2592, %v2614
  %v2627 = vadd.f32 %v2593, %v2615
  %v2628 = vadd.f32 %v2594, %v2616
  %v2629 = vlaneseq
  %v2630 = vshrl.u32 %v2629, 7
  %v2631 = vsub.s32 0, %v2630
  %v2632 = vrot.slane %v2457, %v2631
  %v2633 = vmul.f32 %v2383, %v2632
  %v2634 = vmul.f32 %v2388, %v2632
  %v2635 = vmul.f32 %v2393, %v2632
  %v2636 = vmul.f32 %v2398, %v2632
  %v2637 = vmul.f32 %v2403, %v2632
  %v2638 = vmul.f32 %v2408, %v2632
  %v2639 = vadd.f32 %v2623, %v2633
  %v2640 = vadd.f32 %v2624, %v2634
  %v2641 = vadd.f32 %v2625, %v2635
  %v2642 = vadd.f32 %v2626, %v2636
  %v2643 = vadd.f32 %v2627, %v2637
  %v2644 = vadd.f32 %v2628, %v2638
  %v2645 = vlaneseq
  %v2646 = vshrl.u32 %v2645, 7
  %v2647 = vsub.s32 0, %v2646
  %v2648 = vrot.slane %v2458, %v2647
  %v2649 = vmul.f32 %v2383, %v2648
  %v2650 = vmul.f32 %v2388, %v2648
  %v2651 = vmul.f32 %v2393, %v2648
  %v2652 = vmul.f32 %v2398, %v2648
  %v2653 = vmul.f32 %v2403, %v2648
  %v2654 = vmul.f32 %v2408, %v2648
  %v2661 = vrot.slane %v2649, 1
  %v2662 = vrot.slane %v2650, 1
  %v2663 = vrot.slane %v2651, 1
  %v2664 = vrot.slane %v2652, 1
  %v2665 = vrot.slane %v2653, 1
  %v2666 = vrot.slane %v2654, 1
  %v2673 = vadd.f32 %v2639, %v2661
  %v2674 = vadd.f32 %v2640, %v2662
  %v2675 = vadd.f32 %v2641, %v2663
  %v2676 = vadd.f32 %v2642, %v2664
  %v2677 = vadd.f32 %v2643, %v2665
  %v2678 = vadd.f32 %v2644, %v2666
  %v2679 = vlaneseq
  %v2680 = vshrl.u32 %v2679, 7
  %v2681 = vsub.s32 0, %v2680
  %v2682 = vrot.slane %v2459, %v2681
  %v2683 = vmul.f32 %v2383, %v2682
  %v2684 = vmul.f32 %v2388, %v2682
  %v2685 = vmul.f32 %v2393, %v2682
  %v2686 = vmul.f32 %v2398, %v2682
  %v2687 = vmul.f32 %v2403, %v2682
  %v2688 = vmul.f32 %v2408, %v2682
  %v2695 = vrot.slane %v2683, 2
  %v2696 = vrot.slane %v2684, 2
  %v2697 = vrot.slane %v2685, 2
  %v2698 = vrot.slane %v2686, 2
  %v2699 = vrot.slane %v2687, 2
  %v2700 = vrot.slane %v2688, 2
  %v2707 = vadd.f32 %v2673, %v2695
  %v2708 = vadd.f32 %v2674, %v2696
  %v2709 = vadd.f32 %v2675, %v2697
  %v2710 = vadd.f32 %v2676, %v2698
  %v2711 = vadd.f32 %v2677, %v2699
  %v2712 = vadd.f32 %v2678, %v2700
  %vm2713 = vcmask 70656
  %v2714 = vsel %vm2713, %v2707, 0.0
  %2715 = vadd.xlane.f32.xlu0 %v2714
  %v2716 = vpop.xlane.xlu0 %2715
  %v2717 = vsel %vm2713, %v2708, 0.0
  %2718 = vadd.xlane.f32.xlu0 %v2717
  %v2719 = vpop.xlane.xlu0 %2718
  %v2720 = vsel %vm2713, %v2709, 0.0
  %2721 = vadd.xlane.f32.xlu0 %v2720
  %v2722 = vpop.xlane.xlu0 %2721
  %v2723 = vsel %vm2713, %v2710, 0.0
  %2724 = vadd.xlane.f32.xlu0 %v2723
  %v2725 = vpop.xlane.xlu0 %2724
  %v2726 = vsel %vm2713, %v2711, 0.0
  %2727 = vadd.xlane.f32.xlu0 %v2726
  %v2728 = vpop.xlane.xlu0 %2727
  %v2729 = vsel %vm2713, %v2712, 0.0
  %2730 = vadd.xlane.f32.xlu0 %v2729
  %v2731 = vpop.xlane.xlu0 %2730
  %v2732 = vstv %s2460
  %v2733 = vadd.f32 %v2716, %v2732
  %v2734 = vadd.f32 %v2719, %v2732
  %v2735 = vadd.f32 %v2722, %v2732
  %v2736 = vadd.f32 %v2725, %v2732
  %v2737 = vadd.f32 %v2728, %v2732
  %v2738 = vadd.f32 %v2731, %v2732
  %v2739 = vxor.u32 %v2733, 2147483648
  %v2740 = vxor.u32 %v2734, 2147483648
  %v2741 = vxor.u32 %v2735, 2147483648
  %v2742 = vxor.u32 %v2736, 2147483648
  %v2743 = vxor.u32 %v2737, 2147483648
  %v2744 = vxor.u32 %v2738, 2147483648
  %v2745 = vmul.f32 %v2739, 1.442695
  %v2746 = vpow.pop %v2745
  %v2747 = vmul.f32 %v2740, 1.442695
  %v2748 = vpow.pop %v2747
  %v2749 = vmul.f32 %v2741, 1.442695
  %v2750 = vpow.pop %v2749
  %v2751 = vmul.f32 %v2742, 1.442695
  %v2752 = vpow.pop %v2751
  %v2753 = vmul.f32 %v2743, 1.442695
  %v2754 = vpow.pop %v2753
  %v2755 = vmul.f32 %v2744, 1.442695
  %v2756 = vpow.pop %v2755
  %v2757 = vadd.f32 %v2746, 1.0
  %v2758 = vadd.f32 %v2748, 1.0
  %v2759 = vadd.f32 %v2750, 1.0
  %v2760 = vadd.f32 %v2752, 1.0
  %v2761 = vadd.f32 %v2754, 1.0
  %v2762 = vadd.f32 %v2756, 1.0
  %v2763 = vrcp.pop %v2757
  %v2764 = vmul.f32 1.0, %v2763
  %v2765 = vrcp.pop %v2758
  %v2766 = vmul.f32 1.0, %v2765
  %v2767 = vrcp.pop %v2759
  %v2768 = vmul.f32 1.0, %v2767
  %v2769 = vrcp.pop %v2760
  %v2770 = vmul.f32 1.0, %v2769
  %v2771 = vrcp.pop %v2761
  %v2772 = vmul.f32 1.0, %v2771
  %v2773 = vrcp.pop %v2762
  %v2774 = vmul.f32 1.0, %v2773
  %2781 = vrot.lane.b32.xlu0 %v2707, 119
  %v2782 = vpop.permute.xlu0 %2781
  %2783 = vrot.lane.b32.xlu0 %v2708, 119
  %v2784 = vpop.permute.xlu0 %2783
  %2785 = vrot.lane.b32.xlu0 %v2709, 119
  %v2786 = vpop.permute.xlu0 %2785
  %2787 = vrot.lane.b32.xlu0 %v2710, 119
  %v2788 = vpop.permute.xlu0 %2787
  %2789 = vrot.lane.b32.xlu0 %v2711, 119
  %v2790 = vpop.permute.xlu0 %2789
  %2791 = vrot.lane.b32.xlu0 %v2712, 119
  %v2792 = vpop.permute.xlu0 %2791
  %v2799 = vsel %vm2713, %v2782, 0.0
  %2800 = vadd.xlane.f32.xlu0 %v2799
  %v2801 = vpop.xlane.xlu0 %2800
  %v2802 = vsel %vm2713, %v2784, 0.0
  %2803 = vadd.xlane.f32.xlu0 %v2802
  %v2804 = vpop.xlane.xlu0 %2803
  %v2805 = vsel %vm2713, %v2786, 0.0
  %2806 = vadd.xlane.f32.xlu0 %v2805
  %v2807 = vpop.xlane.xlu0 %2806
  %v2808 = vsel %vm2713, %v2788, 0.0
  %2809 = vadd.xlane.f32.xlu0 %v2808
  %v2810 = vpop.xlane.xlu0 %2809
  %v2811 = vsel %vm2713, %v2790, 0.0
  %2812 = vadd.xlane.f32.xlu0 %v2811
  %v2813 = vpop.xlane.xlu0 %2812
  %v2814 = vsel %vm2713, %v2792, 0.0
  %2815 = vadd.xlane.f32.xlu0 %v2814
  %v2816 = vpop.xlane.xlu0 %2815
  %v2817 = vadd.f32 %v2801, %v2732
  %v2818 = vadd.f32 %v2804, %v2732
  %v2819 = vadd.f32 %v2807, %v2732
  %v2820 = vadd.f32 %v2810, %v2732
  %v2821 = vadd.f32 %v2813, %v2732
  %v2822 = vadd.f32 %v2816, %v2732
  %v2823 = vxor.u32 %v2817, 2147483648
  %v2824 = vxor.u32 %v2818, 2147483648
  %v2825 = vxor.u32 %v2819, 2147483648
  %v2826 = vxor.u32 %v2820, 2147483648
  %v2827 = vxor.u32 %v2821, 2147483648
  %v2828 = vxor.u32 %v2822, 2147483648
  %v2829 = vmul.f32 %v2823, 1.442695
  %v2830 = vpow.pop %v2829
  %v2831 = vmul.f32 %v2824, 1.442695
  %v2832 = vpow.pop %v2831
  %v2833 = vmul.f32 %v2825, 1.442695
  %v2834 = vpow.pop %v2833
  %v2835 = vmul.f32 %v2826, 1.442695
  %v2836 = vpow.pop %v2835
  %v2837 = vmul.f32 %v2827, 1.442695
  %v2838 = vpow.pop %v2837
  %v2839 = vmul.f32 %v2828, 1.442695
  %v2840 = vpow.pop %v2839
  %v2841 = vadd.f32 %v2830, 1.0
  %v2842 = vadd.f32 %v2832, 1.0
  %v2843 = vadd.f32 %v2834, 1.0
  %v2844 = vadd.f32 %v2836, 1.0
  %v2845 = vadd.f32 %v2838, 1.0
  %v2846 = vadd.f32 %v2840, 1.0
  %v2847 = vrcp.pop %v2841
  %v2848 = vmul.f32 1.0, %v2847
  %v2849 = vrcp.pop %v2842
  %v2850 = vmul.f32 1.0, %v2849
  %v2851 = vrcp.pop %v2843
  %v2852 = vmul.f32 1.0, %v2851
  %v2853 = vrcp.pop %v2844
  %v2854 = vmul.f32 1.0, %v2853
  %v2855 = vrcp.pop %v2845
  %v2856 = vmul.f32 1.0, %v2855
  %v2857 = vrcp.pop %v2846
  %v2858 = vmul.f32 1.0, %v2857
  %2859 = vrot.lane.b32.xlu0 %v2707, 110
  %v2860 = vpop.permute.xlu0 %2859
  %2861 = vrot.lane.b32.xlu0 %v2708, 110
  %v2862 = vpop.permute.xlu0 %2861
  %2863 = vrot.lane.b32.xlu0 %v2709, 110
  %v2864 = vpop.permute.xlu0 %2863
  %2865 = vrot.lane.b32.xlu0 %v2710, 110
  %v2866 = vpop.permute.xlu0 %2865
  %2867 = vrot.lane.b32.xlu0 %v2711, 110
  %v2868 = vpop.permute.xlu0 %2867
  %2869 = vrot.lane.b32.xlu0 %v2712, 110
  %v2870 = vpop.permute.xlu0 %2869
  %v2877 = vsel %vm2713, %v2860, 0.0
  %2878 = vadd.xlane.f32.xlu0 %v2877
  %v2879 = vpop.xlane.xlu0 %2878
  %v2880 = vsel %vm2713, %v2862, 0.0
  %2881 = vadd.xlane.f32.xlu0 %v2880
  %v2882 = vpop.xlane.xlu0 %2881
  %v2883 = vsel %vm2713, %v2864, 0.0
  %2884 = vadd.xlane.f32.xlu0 %v2883
  %v2885 = vpop.xlane.xlu0 %2884
  %v2886 = vsel %vm2713, %v2866, 0.0
  %2887 = vadd.xlane.f32.xlu0 %v2886
  %v2888 = vpop.xlane.xlu0 %2887
  %v2889 = vsel %vm2713, %v2868, 0.0
  %2890 = vadd.xlane.f32.xlu0 %v2889
  %v2891 = vpop.xlane.xlu0 %2890
  %v2892 = vsel %vm2713, %v2870, 0.0
  %2893 = vadd.xlane.f32.xlu0 %v2892
  %v2894 = vpop.xlane.xlu0 %2893
  %v2895 = vadd.f32 %v2879, %v2732
  %v2896 = vadd.f32 %v2882, %v2732
  %v2897 = vadd.f32 %v2885, %v2732
  %v2898 = vadd.f32 %v2888, %v2732
  %v2899 = vadd.f32 %v2891, %v2732
  %v2900 = vadd.f32 %v2894, %v2732
  %v2901 = vxor.u32 %v2895, 2147483648
  %v2902 = vxor.u32 %v2896, 2147483648
  %v2903 = vxor.u32 %v2897, 2147483648
  %v2904 = vxor.u32 %v2898, 2147483648
  %v2905 = vxor.u32 %v2899, 2147483648
  %v2906 = vxor.u32 %v2900, 2147483648
  %v2907 = vmul.f32 %v2901, 1.442695
  %v2908 = vpow.pop %v2907
  %v2909 = vmul.f32 %v2902, 1.442695
  %v2910 = vpow.pop %v2909
  %v2911 = vmul.f32 %v2903, 1.442695
  %v2912 = vpow.pop %v2911
  %v2913 = vmul.f32 %v2904, 1.442695
  %v2914 = vpow.pop %v2913
  %v2915 = vmul.f32 %v2905, 1.442695
  %v2916 = vpow.pop %v2915
  %v2917 = vmul.f32 %v2906, 1.442695
  %v2918 = vpow.pop %v2917
  %v2919 = vadd.f32 %v2908, 1.0
  %v2920 = vadd.f32 %v2910, 1.0
  %v2921 = vadd.f32 %v2912, 1.0
  %v2922 = vadd.f32 %v2914, 1.0
  %v2923 = vadd.f32 %v2916, 1.0
  %v2924 = vadd.f32 %v2918, 1.0
  %v2925 = vrcp.pop %v2919
  %v2926 = vmul.f32 1.0, %v2925
  %v2927 = vrcp.pop %v2920
  %v2928 = vmul.f32 1.0, %v2927
  %v2929 = vrcp.pop %v2921
  %v2930 = vmul.f32 1.0, %v2929
  %v2931 = vrcp.pop %v2922
  %v2932 = vmul.f32 1.0, %v2931
  %v2933 = vrcp.pop %v2923
  %v2934 = vmul.f32 1.0, %v2933
  %v2935 = vrcp.pop %v2924
  %v2936 = vmul.f32 1.0, %v2935
  %2937 = vrot.lane.b32.xlu0 %v2707, 101
  %v2938 = vpop.permute.xlu0 %2937
  %2939 = vrot.lane.b32.xlu0 %v2708, 101
  %v2940 = vpop.permute.xlu0 %2939
  %2941 = vrot.lane.b32.xlu0 %v2709, 101
  %v2942 = vpop.permute.xlu0 %2941
  %2943 = vrot.lane.b32.xlu0 %v2710, 101
  %v2944 = vpop.permute.xlu0 %2943
  %2945 = vrot.lane.b32.xlu0 %v2711, 101
  %v2946 = vpop.permute.xlu0 %2945
  %2947 = vrot.lane.b32.xlu0 %v2712, 101
  %v2948 = vpop.permute.xlu0 %2947
  %v2955 = vsel %vm2713, %v2938, 0.0
  %2956 = vadd.xlane.f32.xlu0 %v2955
  %v2957 = vpop.xlane.xlu0 %2956
  %v2958 = vsel %vm2713, %v2940, 0.0
  %2959 = vadd.xlane.f32.xlu0 %v2958
  %v2960 = vpop.xlane.xlu0 %2959
  %v2961 = vsel %vm2713, %v2942, 0.0
  %2962 = vadd.xlane.f32.xlu0 %v2961
  %v2963 = vpop.xlane.xlu0 %2962
  %v2964 = vsel %vm2713, %v2944, 0.0
  %2965 = vadd.xlane.f32.xlu0 %v2964
  %v2966 = vpop.xlane.xlu0 %2965
  %v2967 = vsel %vm2713, %v2946, 0.0
  %2968 = vadd.xlane.f32.xlu0 %v2967
  %v2969 = vpop.xlane.xlu0 %2968
  %v2970 = vsel %vm2713, %v2948, 0.0
  %2971 = vadd.xlane.f32.xlu0 %v2970
  %v2972 = vpop.xlane.xlu0 %2971
  %v2973 = vadd.f32 %v2957, %v2732
  %v2974 = vadd.f32 %v2960, %v2732
  %v2975 = vadd.f32 %v2963, %v2732
  %v2976 = vadd.f32 %v2966, %v2732
  %v2977 = vadd.f32 %v2969, %v2732
  %v2978 = vadd.f32 %v2972, %v2732
  %v2979 = vxor.u32 %v2973, 2147483648
  %v2980 = vxor.u32 %v2974, 2147483648
  %v2981 = vxor.u32 %v2975, 2147483648
  %v2982 = vxor.u32 %v2976, 2147483648
  %v2983 = vxor.u32 %v2977, 2147483648
  %v2984 = vxor.u32 %v2978, 2147483648
  %v2985 = vmul.f32 %v2979, 1.442695
  %v2986 = vpow.pop %v2985
  %v2987 = vmul.f32 %v2980, 1.442695
  %v2988 = vpow.pop %v2987
  %v2989 = vmul.f32 %v2981, 1.442695
  %v2990 = vpow.pop %v2989
  %v2991 = vmul.f32 %v2982, 1.442695
  %v2992 = vpow.pop %v2991
  %v2993 = vmul.f32 %v2983, 1.442695
  %v2994 = vpow.pop %v2993
  %v2995 = vmul.f32 %v2984, 1.442695
  %v2996 = vpow.pop %v2995
  %v2997 = vadd.f32 %v2986, 1.0
  %v2998 = vadd.f32 %v2988, 1.0
  %v2999 = vadd.f32 %v2990, 1.0
  %v3000 = vadd.f32 %v2992, 1.0
  %v3001 = vadd.f32 %v2994, 1.0
  %v3002 = vadd.f32 %v2996, 1.0
  %v3003 = vrcp.pop %v2997
  %v3004 = vmul.f32 1.0, %v3003
  %v3005 = vrcp.pop %v2998
  %v3006 = vmul.f32 1.0, %v3005
  %v3007 = vrcp.pop %v2999
  %v3008 = vmul.f32 1.0, %v3007
  %v3009 = vrcp.pop %v3000
  %v3010 = vmul.f32 1.0, %v3009
  %v3011 = vrcp.pop %v3001
  %v3012 = vmul.f32 1.0, %v3011
  %v3013 = vrcp.pop %v3002
  %v3014 = vmul.f32 1.0, %v3013
  %v3015 = vmul.f32 %v2413, %v2464
  %v3016 = vmul.f32 %v2418, %v2464
  %v3017 = vmul.f32 %v2423, %v2464
  %v3018 = vmul.f32 %v2428, %v2464
  %v3019 = vmul.f32 %v2433, %v2464
  %v3020 = vmul.f32 %v2438, %v2464
  %v3021 = vadd.f32 %v3015, 0.0
  %v3022 = vadd.f32 %v3016, 0.0
  %v3023 = vadd.f32 %v3017, 0.0
  %v3024 = vadd.f32 %v3018, 0.0
  %v3025 = vadd.f32 %v3019, 0.0
  %v3026 = vadd.f32 %v3020, 0.0
  %v3027 = vmul.f32 %v2413, %v2480
  %v3028 = vmul.f32 %v2418, %v2480
  %v3029 = vmul.f32 %v2423, %v2480
  %v3030 = vmul.f32 %v2428, %v2480
  %v3031 = vmul.f32 %v2433, %v2480
  %v3032 = vmul.f32 %v2438, %v2480
  %v3039 = vrot.slane %v3027, 1
  %v3040 = vrot.slane %v3028, 1
  %v3041 = vrot.slane %v3029, 1
  %v3042 = vrot.slane %v3030, 1
  %v3043 = vrot.slane %v3031, 1
  %v3044 = vrot.slane %v3032, 1
  %v3051 = vadd.f32 %v3021, %v3039
  %v3052 = vadd.f32 %v3022, %v3040
  %v3053 = vadd.f32 %v3023, %v3041
  %v3054 = vadd.f32 %v3024, %v3042
  %v3055 = vadd.f32 %v3025, %v3043
  %v3056 = vadd.f32 %v3026, %v3044
  %v3057 = vmul.f32 %v2413, %v2514
  %v3058 = vmul.f32 %v2418, %v2514
  %v3059 = vmul.f32 %v2423, %v2514
  %v3060 = vmul.f32 %v2428, %v2514
  %v3061 = vmul.f32 %v2433, %v2514
  %v3062 = vmul.f32 %v2438, %v2514
  %v3069 = vrot.slane %v3057, 2
  %v3070 = vrot.slane %v3058, 2
  %v3071 = vrot.slane %v3059, 2
  %v3072 = vrot.slane %v3060, 2
  %v3073 = vrot.slane %v3061, 2
  %v3074 = vrot.slane %v3062, 2
  %v3081 = vadd.f32 %v3051, %v3069
  %v3082 = vadd.f32 %v3052, %v3070
  %v3083 = vadd.f32 %v3053, %v3071
  %v3084 = vadd.f32 %v3054, %v3072
  %v3085 = vadd.f32 %v3055, %v3073
  %v3086 = vadd.f32 %v3056, %v3074
  %v3087 = vmul.f32 %v2418, %v2548
  %v3088 = vmul.f32 %v2423, %v2548
  %v3089 = vmul.f32 %v2428, %v2548
  %v3090 = vmul.f32 %v2433, %v2548
  %v3091 = vmul.f32 %v2438, %v2548
  %v3092 = vmul.f32 %v2443, %v2548
  %v3093 = vadd.f32 %v3081, %v3087
  %v3094 = vadd.f32 %v3082, %v3088
  %v3095 = vadd.f32 %v3083, %v3089
  %v3096 = vadd.f32 %v3084, %v3090
  %v3097 = vadd.f32 %v3085, %v3091
  %v3098 = vadd.f32 %v3086, %v3092
  %v3099 = vmul.f32 %v2418, %v2564
  %v3100 = vmul.f32 %v2423, %v2564
  %v3101 = vmul.f32 %v2428, %v2564
  %v3102 = vmul.f32 %v2433, %v2564
  %v3103 = vmul.f32 %v2438, %v2564
  %v3104 = vmul.f32 %v2443, %v2564
  %v3111 = vrot.slane %v3099, 1
  %v3112 = vrot.slane %v3100, 1
  %v3113 = vrot.slane %v3101, 1
  %v3114 = vrot.slane %v3102, 1
  %v3115 = vrot.slane %v3103, 1
  %v3116 = vrot.slane %v3104, 1
  %v3123 = vadd.f32 %v3093, %v3111
  %v3124 = vadd.f32 %v3094, %v3112
  %v3125 = vadd.f32 %v3095, %v3113
  %v3126 = vadd.f32 %v3096, %v3114
  %v3127 = vadd.f32 %v3097, %v3115
  %v3128 = vadd.f32 %v3098, %v3116
  %v3129 = vmul.f32 %v2418, %v2598
  %v3130 = vmul.f32 %v2423, %v2598
  %v3131 = vmul.f32 %v2428, %v2598
  %v3132 = vmul.f32 %v2433, %v2598
  %v3133 = vmul.f32 %v2438, %v2598
  %v3134 = vmul.f32 %v2443, %v2598
  %v3141 = vrot.slane %v3129, 2
  %v3142 = vrot.slane %v3130, 2
  %v3143 = vrot.slane %v3131, 2
  %v3144 = vrot.slane %v3132, 2
  %v3145 = vrot.slane %v3133, 2
  %v3146 = vrot.slane %v3134, 2
  %v3153 = vadd.f32 %v3123, %v3141
  %v3154 = vadd.f32 %v3124, %v3142
  %v3155 = vadd.f32 %v3125, %v3143
  %v3156 = vadd.f32 %v3126, %v3144
  %v3157 = vadd.f32 %v3127, %v3145
  %v3158 = vadd.f32 %v3128, %v3146
  %v3159 = vmul.f32 %v2423, %v2632
  %v3160 = vmul.f32 %v2428, %v2632
  %v3161 = vmul.f32 %v2433, %v2632
  %v3162 = vmul.f32 %v2438, %v2632
  %v3163 = vmul.f32 %v2443, %v2632
  %v3164 = vmul.f32 %v2448, %v2632
  %v3165 = vadd.f32 %v3153, %v3159
  %v3166 = vadd.f32 %v3154, %v3160
  %v3167 = vadd.f32 %v3155, %v3161
  %v3168 = vadd.f32 %v3156, %v3162
  %v3169 = vadd.f32 %v3157, %v3163
  %v3170 = vadd.f32 %v3158, %v3164
  %v3171 = vmul.f32 %v2423, %v2648
  %v3172 = vmul.f32 %v2428, %v2648
  %v3173 = vmul.f32 %v2433, %v2648
  %v3174 = vmul.f32 %v2438, %v2648
  %v3175 = vmul.f32 %v2443, %v2648
  %v3176 = vmul.f32 %v2448, %v2648
  %v3183 = vrot.slane %v3171, 1
  %v3184 = vrot.slane %v3172, 1
  %v3185 = vrot.slane %v3173, 1
  %v3186 = vrot.slane %v3174, 1
  %v3187 = vrot.slane %v3175, 1
  %v3188 = vrot.slane %v3176, 1
  %v3195 = vadd.f32 %v3165, %v3183
  %v3196 = vadd.f32 %v3166, %v3184
  %v3197 = vadd.f32 %v3167, %v3185
  %v3198 = vadd.f32 %v3168, %v3186
  %v3199 = vadd.f32 %v3169, %v3187
  %v3200 = vadd.f32 %v3170, %v3188
  %v3201 = vmul.f32 %v2423, %v2682
  %v3202 = vmul.f32 %v2428, %v2682
  %v3203 = vmul.f32 %v2433, %v2682
  %v3204 = vmul.f32 %v2438, %v2682
  %v3205 = vmul.f32 %v2443, %v2682
  %v3206 = vmul.f32 %v2448, %v2682
  %v3213 = vrot.slane %v3201, 2
  %v3214 = vrot.slane %v3202, 2
  %v3215 = vrot.slane %v3203, 2
  %v3216 = vrot.slane %v3204, 2
  %v3217 = vrot.slane %v3205, 2
  %v3218 = vrot.slane %v3206, 2
  %v3225 = vadd.f32 %v3195, %v3213
  %v3226 = vadd.f32 %v3196, %v3214
  %v3227 = vadd.f32 %v3197, %v3215
  %v3228 = vadd.f32 %v3198, %v3216
  %v3229 = vadd.f32 %v3199, %v3217
  %v3230 = vadd.f32 %v3200, %v3218
  %v3231 = vsel %vm2713, %v3225, 0.0
  %3232 = vadd.xlane.f32.xlu0 %v3231
  %v3233 = vpop.xlane.xlu0 %3232
  %v3234 = vsel %vm2713, %v3226, 0.0
  %3235 = vadd.xlane.f32.xlu0 %v3234
  %v3236 = vpop.xlane.xlu0 %3235
  %v3237 = vsel %vm2713, %v3227, 0.0
  %3238 = vadd.xlane.f32.xlu0 %v3237
  %v3239 = vpop.xlane.xlu0 %3238
  %v3240 = vsel %vm2713, %v3228, 0.0
  %3241 = vadd.xlane.f32.xlu0 %v3240
  %v3242 = vpop.xlane.xlu0 %3241
  %v3243 = vsel %vm2713, %v3229, 0.0
  %3244 = vadd.xlane.f32.xlu0 %v3243
  %v3245 = vpop.xlane.xlu0 %3244
  %v3246 = vsel %vm2713, %v3230, 0.0
  %3247 = vadd.xlane.f32.xlu0 %v3246
  %v3248 = vpop.xlane.xlu0 %3247
  %v3249 = vadd.f32 %v3233, %v2732
  %v3250 = vadd.f32 %v3236, %v2732
  %v3251 = vadd.f32 %v3239, %v2732
  %v3252 = vadd.f32 %v3242, %v2732
  %v3253 = vadd.f32 %v3245, %v2732
  %v3254 = vadd.f32 %v3248, %v2732
  %v3255 = vxor.u32 %v3249, 2147483648
  %v3256 = vxor.u32 %v3250, 2147483648
  %v3257 = vxor.u32 %v3251, 2147483648
  %v3258 = vxor.u32 %v3252, 2147483648
  %v3259 = vxor.u32 %v3253, 2147483648
  %v3260 = vxor.u32 %v3254, 2147483648
  %v3261 = vmul.f32 %v3255, 1.442695
  %v3262 = vpow.pop %v3261
  %v3263 = vmul.f32 %v3256, 1.442695
  %v3264 = vpow.pop %v3263
  %v3265 = vmul.f32 %v3257, 1.442695
  %v3266 = vpow.pop %v3265
  %v3267 = vmul.f32 %v3258, 1.442695
  %v3268 = vpow.pop %v3267
  %v3269 = vmul.f32 %v3259, 1.442695
  %v3270 = vpow.pop %v3269
  %v3271 = vmul.f32 %v3260, 1.442695
  %v3272 = vpow.pop %v3271
  %v3273 = vadd.f32 %v3262, 1.0
  %v3274 = vadd.f32 %v3264, 1.0
  %v3275 = vadd.f32 %v3266, 1.0
  %v3276 = vadd.f32 %v3268, 1.0
  %v3277 = vadd.f32 %v3270, 1.0
  %v3278 = vadd.f32 %v3272, 1.0
  %v3279 = vrcp.pop %v3273
  %v3280 = vmul.f32 1.0, %v3279
  %v3281 = vrcp.pop %v3274
  %v3282 = vmul.f32 1.0, %v3281
  %v3283 = vrcp.pop %v3275
  %v3284 = vmul.f32 1.0, %v3283
  %v3285 = vrcp.pop %v3276
  %v3286 = vmul.f32 1.0, %v3285
  %v3287 = vrcp.pop %v3277
  %v3288 = vmul.f32 1.0, %v3287
  %v3289 = vrcp.pop %v3278
  %v3290 = vmul.f32 1.0, %v3289
  %3297 = vrot.lane.b32.xlu0 %v3225, 119
  %v3298 = vpop.permute.xlu0 %3297
  %3299 = vrot.lane.b32.xlu0 %v3226, 119
  %v3300 = vpop.permute.xlu0 %3299
  %3301 = vrot.lane.b32.xlu0 %v3227, 119
  %v3302 = vpop.permute.xlu0 %3301
  %3303 = vrot.lane.b32.xlu0 %v3228, 119
  %v3304 = vpop.permute.xlu0 %3303
  %3305 = vrot.lane.b32.xlu0 %v3229, 119
  %v3306 = vpop.permute.xlu0 %3305
  %3307 = vrot.lane.b32.xlu0 %v3230, 119
  %v3308 = vpop.permute.xlu0 %3307
  %v3315 = vsel %vm2713, %v3298, 0.0
  %3316 = vadd.xlane.f32.xlu0 %v3315
  %v3317 = vpop.xlane.xlu0 %3316
  %v3318 = vsel %vm2713, %v3300, 0.0
  %3319 = vadd.xlane.f32.xlu0 %v3318
  %v3320 = vpop.xlane.xlu0 %3319
  %v3321 = vsel %vm2713, %v3302, 0.0
  %3322 = vadd.xlane.f32.xlu0 %v3321
  %v3323 = vpop.xlane.xlu0 %3322
  %v3324 = vsel %vm2713, %v3304, 0.0
  %3325 = vadd.xlane.f32.xlu0 %v3324
  %v3326 = vpop.xlane.xlu0 %3325
  %v3327 = vsel %vm2713, %v3306, 0.0
  %3328 = vadd.xlane.f32.xlu0 %v3327
  %v3329 = vpop.xlane.xlu0 %3328
  %v3330 = vsel %vm2713, %v3308, 0.0
  %3331 = vadd.xlane.f32.xlu0 %v3330
  %v3332 = vpop.xlane.xlu0 %3331
  %v3333 = vadd.f32 %v3317, %v2732
  %v3334 = vadd.f32 %v3320, %v2732
  %v3335 = vadd.f32 %v3323, %v2732
  %v3336 = vadd.f32 %v3326, %v2732
  %v3337 = vadd.f32 %v3329, %v2732
  %v3338 = vadd.f32 %v3332, %v2732
  %v3339 = vxor.u32 %v3333, 2147483648
  %v3340 = vxor.u32 %v3334, 2147483648
  %v3341 = vxor.u32 %v3335, 2147483648
  %v3342 = vxor.u32 %v3336, 2147483648
  %v3343 = vxor.u32 %v3337, 2147483648
  %v3344 = vxor.u32 %v3338, 2147483648
  %v3345 = vmul.f32 %v3339, 1.442695
  %v3346 = vpow.pop %v3345
  %v3347 = vmul.f32 %v3340, 1.442695
  %v3348 = vpow.pop %v3347
  %v3349 = vmul.f32 %v3341, 1.442695
  %v3350 = vpow.pop %v3349
  %v3351 = vmul.f32 %v3342, 1.442695
  %v3352 = vpow.pop %v3351
  %v3353 = vmul.f32 %v3343, 1.442695
  %v3354 = vpow.pop %v3353
  %v3355 = vmul.f32 %v3344, 1.442695
  %v3356 = vpow.pop %v3355
  %v3357 = vadd.f32 %v3346, 1.0
  %v3358 = vadd.f32 %v3348, 1.0
  %v3359 = vadd.f32 %v3350, 1.0
  %v3360 = vadd.f32 %v3352, 1.0
  %v3361 = vadd.f32 %v3354, 1.0
  %v3362 = vadd.f32 %v3356, 1.0
  %v3363 = vrcp.pop %v3357
  %v3364 = vmul.f32 1.0, %v3363
  %v3365 = vrcp.pop %v3358
  %v3366 = vmul.f32 1.0, %v3365
  %v3367 = vrcp.pop %v3359
  %v3368 = vmul.f32 1.0, %v3367
  %v3369 = vrcp.pop %v3360
  %v3370 = vmul.f32 1.0, %v3369
  %v3371 = vrcp.pop %v3361
  %v3372 = vmul.f32 1.0, %v3371
  %v3373 = vrcp.pop %v3362
  %v3374 = vmul.f32 1.0, %v3373
  %3375 = vrot.lane.b32.xlu0 %v3225, 110
  %v3376 = vpop.permute.xlu0 %3375
  %3377 = vrot.lane.b32.xlu0 %v3226, 110
  %v3378 = vpop.permute.xlu0 %3377
  %3379 = vrot.lane.b32.xlu0 %v3227, 110
  %v3380 = vpop.permute.xlu0 %3379
  %3381 = vrot.lane.b32.xlu0 %v3228, 110
  %v3382 = vpop.permute.xlu0 %3381
  %3383 = vrot.lane.b32.xlu0 %v3229, 110
  %v3384 = vpop.permute.xlu0 %3383
  %3385 = vrot.lane.b32.xlu0 %v3230, 110
  %v3386 = vpop.permute.xlu0 %3385
  %v3393 = vsel %vm2713, %v3376, 0.0
  %3394 = vadd.xlane.f32.xlu0 %v3393
  %v3395 = vpop.xlane.xlu0 %3394
  %v3396 = vsel %vm2713, %v3378, 0.0
  %3397 = vadd.xlane.f32.xlu0 %v3396
  %v3398 = vpop.xlane.xlu0 %3397
  %v3399 = vsel %vm2713, %v3380, 0.0
  %3400 = vadd.xlane.f32.xlu0 %v3399
  %v3401 = vpop.xlane.xlu0 %3400
  %v3402 = vsel %vm2713, %v3382, 0.0
  %3403 = vadd.xlane.f32.xlu0 %v3402
  %v3404 = vpop.xlane.xlu0 %3403
  %v3405 = vsel %vm2713, %v3384, 0.0
  %3406 = vadd.xlane.f32.xlu0 %v3405
  %v3407 = vpop.xlane.xlu0 %3406
  %v3408 = vsel %vm2713, %v3386, 0.0
  %3409 = vadd.xlane.f32.xlu0 %v3408
  %v3410 = vpop.xlane.xlu0 %3409
  %v3411 = vadd.f32 %v3395, %v2732
  %v3412 = vadd.f32 %v3398, %v2732
  %v3413 = vadd.f32 %v3401, %v2732
  %v3414 = vadd.f32 %v3404, %v2732
  %v3415 = vadd.f32 %v3407, %v2732
  %v3416 = vadd.f32 %v3410, %v2732
  %v3417 = vxor.u32 %v3411, 2147483648
  %v3418 = vxor.u32 %v3412, 2147483648
  %v3419 = vxor.u32 %v3413, 2147483648
  %v3420 = vxor.u32 %v3414, 2147483648
  %v3421 = vxor.u32 %v3415, 2147483648
  %v3422 = vxor.u32 %v3416, 2147483648
  %v3423 = vmul.f32 %v3417, 1.442695
  %v3424 = vpow.pop %v3423
  %v3425 = vmul.f32 %v3418, 1.442695
  %v3426 = vpow.pop %v3425
  %v3427 = vmul.f32 %v3419, 1.442695
  %v3428 = vpow.pop %v3427
  %v3429 = vmul.f32 %v3420, 1.442695
  %v3430 = vpow.pop %v3429
  %v3431 = vmul.f32 %v3421, 1.442695
  %v3432 = vpow.pop %v3431
  %v3433 = vmul.f32 %v3422, 1.442695
  %v3434 = vpow.pop %v3433
  %v3435 = vadd.f32 %v3424, 1.0
  %v3436 = vadd.f32 %v3426, 1.0
  %v3437 = vadd.f32 %v3428, 1.0
  %v3438 = vadd.f32 %v3430, 1.0
  %v3439 = vadd.f32 %v3432, 1.0
  %v3440 = vadd.f32 %v3434, 1.0
  %v3441 = vrcp.pop %v3435
  %v3442 = vmul.f32 1.0, %v3441
  %v3443 = vrcp.pop %v3436
  %v3444 = vmul.f32 1.0, %v3443
  %v3445 = vrcp.pop %v3437
  %v3446 = vmul.f32 1.0, %v3445
  %v3447 = vrcp.pop %v3438
  %v3448 = vmul.f32 1.0, %v3447
  %v3449 = vrcp.pop %v3439
  %v3450 = vmul.f32 1.0, %v3449
  %v3451 = vrcp.pop %v3440
  %v3452 = vmul.f32 1.0, %v3451
  %3453 = vrot.lane.b32.xlu0 %v3225, 101
  %v3454 = vpop.permute.xlu0 %3453
  %3455 = vrot.lane.b32.xlu0 %v3226, 101
  %v3456 = vpop.permute.xlu0 %3455
  %3457 = vrot.lane.b32.xlu0 %v3227, 101
  %v3458 = vpop.permute.xlu0 %3457
  %3459 = vrot.lane.b32.xlu0 %v3228, 101
  %v3460 = vpop.permute.xlu0 %3459
  %3461 = vrot.lane.b32.xlu0 %v3229, 101
  %v3462 = vpop.permute.xlu0 %3461
  %3463 = vrot.lane.b32.xlu0 %v3230, 101
  %v3464 = vpop.permute.xlu0 %3463
  %v3471 = vsel %vm2713, %v3454, 0.0
  %3472 = vadd.xlane.f32.xlu0 %v3471
  %v3473 = vpop.xlane.xlu0 %3472
  %v3474 = vsel %vm2713, %v3456, 0.0
  %3475 = vadd.xlane.f32.xlu0 %v3474
  %v3476 = vpop.xlane.xlu0 %3475
  %v3477 = vsel %vm2713, %v3458, 0.0
  %3478 = vadd.xlane.f32.xlu0 %v3477
  %v3479 = vpop.xlane.xlu0 %3478
  %v3480 = vsel %vm2713, %v3460, 0.0
  %3481 = vadd.xlane.f32.xlu0 %v3480
  %v3482 = vpop.xlane.xlu0 %3481
  %v3483 = vsel %vm2713, %v3462, 0.0
  %3484 = vadd.xlane.f32.xlu0 %v3483
  %v3485 = vpop.xlane.xlu0 %3484
  %v3486 = vsel %vm2713, %v3464, 0.0
  %3487 = vadd.xlane.f32.xlu0 %v3486
  %v3488 = vpop.xlane.xlu0 %3487
  %v3489 = vadd.f32 %v3473, %v2732
  %v3490 = vadd.f32 %v3476, %v2732
  %v3491 = vadd.f32 %v3479, %v2732
  %v3492 = vadd.f32 %v3482, %v2732
  %v3493 = vadd.f32 %v3485, %v2732
  %v3494 = vadd.f32 %v3488, %v2732
  %v3495 = vxor.u32 %v3489, 2147483648
  %v3496 = vxor.u32 %v3490, 2147483648
  %v3497 = vxor.u32 %v3491, 2147483648
  %v3498 = vxor.u32 %v3492, 2147483648
  %v3499 = vxor.u32 %v3493, 2147483648
  %v3500 = vxor.u32 %v3494, 2147483648
  %v3501 = vmul.f32 %v3495, 1.442695
  %v3502 = vpow.pop %v3501
  %v3503 = vmul.f32 %v3496, 1.442695
  %v3504 = vpow.pop %v3503
  %v3505 = vmul.f32 %v3497, 1.442695
  %v3506 = vpow.pop %v3505
  %v3507 = vmul.f32 %v3498, 1.442695
  %v3508 = vpow.pop %v3507
  %v3509 = vmul.f32 %v3499, 1.442695
  %v3510 = vpow.pop %v3509
  %v3511 = vmul.f32 %v3500, 1.442695
  %v3512 = vpow.pop %v3511
  %v3513 = vadd.f32 %v3502, 1.0
  %v3514 = vadd.f32 %v3504, 1.0
  %v3515 = vadd.f32 %v3506, 1.0
  %v3516 = vadd.f32 %v3508, 1.0
  %v3517 = vadd.f32 %v3510, 1.0
  %v3518 = vadd.f32 %v3512, 1.0
  %v3519 = vrcp.pop %v3513
  %v3520 = vmul.f32 1.0, %v3519
  %v3521 = vrcp.pop %v3514
  %v3522 = vmul.f32 1.0, %v3521
  %v3523 = vrcp.pop %v3515
  %v3524 = vmul.f32 1.0, %v3523
  %v3525 = vrcp.pop %v3516
  %v3526 = vmul.f32 1.0, %v3525
  %v3527 = vrcp.pop %v3517
  %v3528 = vmul.f32 1.0, %v3527
  %v3529 = vrcp.pop %v3518
  %v3530 = vmul.f32 1.0, %v3529
  %3579 = vset.pattern.permute.xlu0 0
  %3580 = vperm.xlu0 %3579, %v2764
  %v3581 = vpop.permute.xlu0 %3580
  %3582 = vset.pattern.permute.xlu0 0
  %3583 = vperm.xlu0 %3582, %v2766
  %v3584 = vpop.permute.xlu0 %3583
  %3585 = vset.pattern.permute.xlu0 0
  %3586 = vperm.xlu0 %3585, %v2768
  %v3587 = vpop.permute.xlu0 %3586
  %3588 = vset.pattern.permute.xlu0 0
  %3589 = vperm.xlu0 %3588, %v2770
  %v3590 = vpop.permute.xlu0 %3589
  %3591 = vset.pattern.permute.xlu0 0
  %3592 = vperm.xlu0 %3591, %v2772
  %v3593 = vpop.permute.xlu0 %3592
  %3594 = vset.pattern.permute.xlu0 0
  %3595 = vperm.xlu0 %3594, %v2774
  %v3596 = vpop.permute.xlu0 %3595
  %3597 = vset.pattern.permute.xlu0 0
  %3598 = vperm.xlu0 %3597, %v2848
  %v3599 = vpop.permute.xlu0 %3598
  %3600 = vset.pattern.permute.xlu0 0
  %3601 = vperm.xlu0 %3600, %v2850
  %v3602 = vpop.permute.xlu0 %3601
  %3603 = vset.pattern.permute.xlu0 0
  %3604 = vperm.xlu0 %3603, %v2852
  %v3605 = vpop.permute.xlu0 %3604
  %3606 = vset.pattern.permute.xlu0 0
  %3607 = vperm.xlu0 %3606, %v2854
  %v3608 = vpop.permute.xlu0 %3607
  %3609 = vset.pattern.permute.xlu0 0
  %3610 = vperm.xlu0 %3609, %v2856
  %v3611 = vpop.permute.xlu0 %3610
  %3612 = vset.pattern.permute.xlu0 0
  %3613 = vperm.xlu0 %3612, %v2858
  %v3614 = vpop.permute.xlu0 %3613
  %3615 = vset.pattern.permute.xlu0 0
  %3616 = vperm.xlu0 %3615, %v2926
  %v3617 = vpop.permute.xlu0 %3616
  %3618 = vset.pattern.permute.xlu0 0
  %3619 = vperm.xlu0 %3618, %v2928
  %v3620 = vpop.permute.xlu0 %3619
  %3621 = vset.pattern.permute.xlu0 0
  %3622 = vperm.xlu0 %3621, %v2930
  %v3623 = vpop.permute.xlu0 %3622
  %3624 = vset.pattern.permute.xlu0 0
  %3625 = vperm.xlu0 %3624, %v2932
  %v3626 = vpop.permute.xlu0 %3625
  %3627 = vset.pattern.permute.xlu0 0
  %3628 = vperm.xlu0 %3627, %v2934
  %v3629 = vpop.permute.xlu0 %3628
  %3630 = vset.pattern.permute.xlu0 0
  %3631 = vperm.xlu0 %3630, %v2936
  %v3632 = vpop.permute.xlu0 %3631
  %3633 = vset.pattern.permute.xlu0 0
  %3634 = vperm.xlu0 %3633, %v3004
  %v3635 = vpop.permute.xlu0 %3634
  %3636 = vset.pattern.permute.xlu0 0
  %3637 = vperm.xlu0 %3636, %v3006
  %v3638 = vpop.permute.xlu0 %3637
  %3639 = vset.pattern.permute.xlu0 0
  %3640 = vperm.xlu0 %3639, %v3008
  %v3641 = vpop.permute.xlu0 %3640
  %3642 = vset.pattern.permute.xlu0 0
  %3643 = vperm.xlu0 %3642, %v3010
  %v3644 = vpop.permute.xlu0 %3643
  %3645 = vset.pattern.permute.xlu0 0
  %3646 = vperm.xlu0 %3645, %v3012
  %v3647 = vpop.permute.xlu0 %3646
  %3648 = vset.pattern.permute.xlu0 0
  %3649 = vperm.xlu0 %3648, %v3014
  %v3650 = vpop.permute.xlu0 %3649
  %3651 = vset.pattern.permute.xlu0 0
  %3652 = vperm.xlu0 %3651, %v3280
  %v3653 = vpop.permute.xlu0 %3652
  %3654 = vset.pattern.permute.xlu0 0
  %3655 = vperm.xlu0 %3654, %v3282
  %v3656 = vpop.permute.xlu0 %3655
  %3657 = vset.pattern.permute.xlu0 0
  %3658 = vperm.xlu0 %3657, %v3284
  %v3659 = vpop.permute.xlu0 %3658
  %3660 = vset.pattern.permute.xlu0 0
  %3661 = vperm.xlu0 %3660, %v3286
  %v3662 = vpop.permute.xlu0 %3661
  %3663 = vset.pattern.permute.xlu0 0
  %3664 = vperm.xlu0 %3663, %v3288
  %v3665 = vpop.permute.xlu0 %3664
  %3666 = vset.pattern.permute.xlu0 0
  %3667 = vperm.xlu0 %3666, %v3290
  %v3668 = vpop.permute.xlu0 %3667
  %3669 = vset.pattern.permute.xlu0 0
  %3670 = vperm.xlu0 %3669, %v3364
  %v3671 = vpop.permute.xlu0 %3670
  %3672 = vset.pattern.permute.xlu0 0
  %3673 = vperm.xlu0 %3672, %v3366
  %v3674 = vpop.permute.xlu0 %3673
  %3675 = vset.pattern.permute.xlu0 0
  %3676 = vperm.xlu0 %3675, %v3368
  %v3677 = vpop.permute.xlu0 %3676
  %3678 = vset.pattern.permute.xlu0 0
  %3679 = vperm.xlu0 %3678, %v3370
  %v3680 = vpop.permute.xlu0 %3679
  %3681 = vset.pattern.permute.xlu0 0
  %3682 = vperm.xlu0 %3681, %v3372
  %v3683 = vpop.permute.xlu0 %3682
  %3684 = vset.pattern.permute.xlu0 0
  %3685 = vperm.xlu0 %3684, %v3374
  %v3686 = vpop.permute.xlu0 %3685
  %3687 = vset.pattern.permute.xlu0 0
  %3688 = vperm.xlu0 %3687, %v3442
  %v3689 = vpop.permute.xlu0 %3688
  %3690 = vset.pattern.permute.xlu0 0
  %3691 = vperm.xlu0 %3690, %v3444
  %v3692 = vpop.permute.xlu0 %3691
  %3693 = vset.pattern.permute.xlu0 0
  %3694 = vperm.xlu0 %3693, %v3446
  %v3695 = vpop.permute.xlu0 %3694
  %3696 = vset.pattern.permute.xlu0 0
  %3697 = vperm.xlu0 %3696, %v3448
  %v3698 = vpop.permute.xlu0 %3697
  %3699 = vset.pattern.permute.xlu0 0
  %3700 = vperm.xlu0 %3699, %v3450
  %v3701 = vpop.permute.xlu0 %3700
  %3702 = vset.pattern.permute.xlu0 0
  %3703 = vperm.xlu0 %3702, %v3452
  %v3704 = vpop.permute.xlu0 %3703
  %3705 = vset.pattern.permute.xlu0 0
  %3706 = vperm.xlu0 %3705, %v3520
  %v3707 = vpop.permute.xlu0 %3706
  %3708 = vset.pattern.permute.xlu0 0
  %3709 = vperm.xlu0 %3708, %v3522
  %v3710 = vpop.permute.xlu0 %3709
  %3711 = vset.pattern.permute.xlu0 0
  %3712 = vperm.xlu0 %3711, %v3524
  %v3713 = vpop.permute.xlu0 %3712
  %3714 = vset.pattern.permute.xlu0 0
  %3715 = vperm.xlu0 %3714, %v3526
  %v3716 = vpop.permute.xlu0 %3715
  %3717 = vset.pattern.permute.xlu0 0
  %3718 = vperm.xlu0 %3717, %v3528
  %v3719 = vpop.permute.xlu0 %3718
  %3720 = vset.pattern.permute.xlu0 0
  %3721 = vperm.xlu0 %3720, %v3530
  %v3722 = vpop.permute.xlu0 %3721
  %v3723 = vlaneseq
  %v3724 = vand.u32 %v3723, 127
  %v3725 = vlaneseq
  %v3726 = vshrl.u32 %v3725, 7
  %v3727 = vsub.s32 %v3724, %v3726
  %v3728 = vrot.slane %v3581, %v3727
  %v3729 = vlaneseq
  %v3730 = vshrl.u32 %v3729, 7
  %v3731 = vsub.s32 %v3724, %v3730
  %v3732 = vrot.slane %v3584, %v3731
  %v3733 = vlaneseq
  %v3734 = vshrl.u32 %v3733, 7
  %v3735 = vsub.s32 %v3724, %v3734
  %v3736 = vrot.slane %v3587, %v3735
  %v3737 = vlaneseq
  %v3738 = vshrl.u32 %v3737, 7
  %v3739 = vsub.s32 %v3724, %v3738
  %v3740 = vrot.slane %v3590, %v3739
  %v3741 = vlaneseq
  %v3742 = vshrl.u32 %v3741, 7
  %v3743 = vsub.s32 %v3724, %v3742
  %v3744 = vrot.slane %v3593, %v3743
  %v3745 = vlaneseq
  %v3746 = vshrl.u32 %v3745, 7
  %v3747 = vsub.s32 %v3724, %v3746
  %v3748 = vrot.slane %v3596, %v3747
  %v3749 = vlaneseq
  %v3750 = vshrl.u32 %v3749, 7
  %v3751 = vsub.s32 %v3724, %v3750
  %v3752 = vrot.slane %v3599, %v3751
  %v3753 = vlaneseq
  %v3754 = vshrl.u32 %v3753, 7
  %v3755 = vsub.s32 %v3724, %v3754
  %v3756 = vrot.slane %v3602, %v3755
  %v3757 = vlaneseq
  %v3758 = vshrl.u32 %v3757, 7
  %v3759 = vsub.s32 %v3724, %v3758
  %v3760 = vrot.slane %v3605, %v3759
  %v3761 = vlaneseq
  %v3762 = vshrl.u32 %v3761, 7
  %v3763 = vsub.s32 %v3724, %v3762
  %v3764 = vrot.slane %v3608, %v3763
  %v3765 = vlaneseq
  %v3766 = vshrl.u32 %v3765, 7
  %v3767 = vsub.s32 %v3724, %v3766
  %v3768 = vrot.slane %v3611, %v3767
  %v3769 = vlaneseq
  %v3770 = vshrl.u32 %v3769, 7
  %v3771 = vsub.s32 %v3724, %v3770
  %v3772 = vrot.slane %v3614, %v3771
  %v3773 = vlaneseq
  %v3774 = vshrl.u32 %v3773, 7
  %v3775 = vsub.s32 %v3724, %v3774
  %v3776 = vrot.slane %v3617, %v3775
  %v3777 = vlaneseq
  %v3778 = vshrl.u32 %v3777, 7
  %v3779 = vsub.s32 %v3724, %v3778
  %v3780 = vrot.slane %v3620, %v3779
  %v3781 = vlaneseq
  %v3782 = vshrl.u32 %v3781, 7
  %v3783 = vsub.s32 %v3724, %v3782
  %v3784 = vrot.slane %v3623, %v3783
  %v3785 = vlaneseq
  %v3786 = vshrl.u32 %v3785, 7
  %v3787 = vsub.s32 %v3724, %v3786
  %v3788 = vrot.slane %v3626, %v3787
  %v3789 = vlaneseq
  %v3790 = vshrl.u32 %v3789, 7
  %v3791 = vsub.s32 %v3724, %v3790
  %v3792 = vrot.slane %v3629, %v3791
  %v3793 = vlaneseq
  %v3794 = vshrl.u32 %v3793, 7
  %v3795 = vsub.s32 %v3724, %v3794
  %v3796 = vrot.slane %v3632, %v3795
  %v3797 = vlaneseq
  %v3798 = vshrl.u32 %v3797, 7
  %v3799 = vsub.s32 %v3724, %v3798
  %v3800 = vrot.slane %v3635, %v3799
  %v3801 = vlaneseq
  %v3802 = vshrl.u32 %v3801, 7
  %v3803 = vsub.s32 %v3724, %v3802
  %v3804 = vrot.slane %v3638, %v3803
  %v3805 = vlaneseq
  %v3806 = vshrl.u32 %v3805, 7
  %v3807 = vsub.s32 %v3724, %v3806
  %v3808 = vrot.slane %v3641, %v3807
  %v3809 = vlaneseq
  %v3810 = vshrl.u32 %v3809, 7
  %v3811 = vsub.s32 %v3724, %v3810
  %v3812 = vrot.slane %v3644, %v3811
  %v3813 = vlaneseq
  %v3814 = vshrl.u32 %v3813, 7
  %v3815 = vsub.s32 %v3724, %v3814
  %v3816 = vrot.slane %v3647, %v3815
  %v3817 = vlaneseq
  %v3818 = vshrl.u32 %v3817, 7
  %v3819 = vsub.s32 %v3724, %v3818
  %v3820 = vrot.slane %v3650, %v3819
  %v3821 = vlaneseq
  %v3822 = vshrl.u32 %v3821, 7
  %v3823 = vsub.s32 %v3724, %v3822
  %v3824 = vrot.slane %v3653, %v3823
  %v3825 = vlaneseq
  %v3826 = vshrl.u32 %v3825, 7
  %v3827 = vsub.s32 %v3724, %v3826
  %v3828 = vrot.slane %v3656, %v3827
  %v3829 = vlaneseq
  %v3830 = vshrl.u32 %v3829, 7
  %v3831 = vsub.s32 %v3724, %v3830
  %v3832 = vrot.slane %v3659, %v3831
  %v3833 = vlaneseq
  %v3834 = vshrl.u32 %v3833, 7
  %v3835 = vsub.s32 %v3724, %v3834
  %v3836 = vrot.slane %v3662, %v3835
  %v3837 = vlaneseq
  %v3838 = vshrl.u32 %v3837, 7
  %v3839 = vsub.s32 %v3724, %v3838
  %v3840 = vrot.slane %v3665, %v3839
  %v3841 = vlaneseq
  %v3842 = vshrl.u32 %v3841, 7
  %v3843 = vsub.s32 %v3724, %v3842
  %v3844 = vrot.slane %v3668, %v3843
  %v3845 = vlaneseq
  %v3846 = vshrl.u32 %v3845, 7
  %v3847 = vsub.s32 %v3724, %v3846
  %v3848 = vrot.slane %v3671, %v3847
  %v3849 = vlaneseq
  %v3850 = vshrl.u32 %v3849, 7
  %v3851 = vsub.s32 %v3724, %v3850
  %v3852 = vrot.slane %v3674, %v3851
  %v3853 = vlaneseq
  %v3854 = vshrl.u32 %v3853, 7
  %v3855 = vsub.s32 %v3724, %v3854
  %v3856 = vrot.slane %v3677, %v3855
  %v3857 = vlaneseq
  %v3858 = vshrl.u32 %v3857, 7
  %v3859 = vsub.s32 %v3724, %v3858
  %v3860 = vrot.slane %v3680, %v3859
  %v3861 = vlaneseq
  %v3862 = vshrl.u32 %v3861, 7
  %v3863 = vsub.s32 %v3724, %v3862
  %v3864 = vrot.slane %v3683, %v3863
  %v3865 = vlaneseq
  %v3866 = vshrl.u32 %v3865, 7
  %v3867 = vsub.s32 %v3724, %v3866
  %v3868 = vrot.slane %v3686, %v3867
  %v3869 = vlaneseq
  %v3870 = vshrl.u32 %v3869, 7
  %v3871 = vsub.s32 %v3724, %v3870
  %v3872 = vrot.slane %v3689, %v3871
  %v3873 = vlaneseq
  %v3874 = vshrl.u32 %v3873, 7
  %v3875 = vsub.s32 %v3724, %v3874
  %v3876 = vrot.slane %v3692, %v3875
  %v3877 = vlaneseq
  %v3878 = vshrl.u32 %v3877, 7
  %v3879 = vsub.s32 %v3724, %v3878
  %v3880 = vrot.slane %v3695, %v3879
  %v3881 = vlaneseq
  %v3882 = vshrl.u32 %v3881, 7
  %v3883 = vsub.s32 %v3724, %v3882
  %v3884 = vrot.slane %v3698, %v3883
  %v3885 = vlaneseq
  %v3886 = vshrl.u32 %v3885, 7
  %v3887 = vsub.s32 %v3724, %v3886
  %v3888 = vrot.slane %v3701, %v3887
  %v3889 = vlaneseq
  %v3890 = vshrl.u32 %v3889, 7
  %v3891 = vsub.s32 %v3724, %v3890
  %v3892 = vrot.slane %v3704, %v3891
  %v3893 = vlaneseq
  %v3894 = vshrl.u32 %v3893, 7
  %v3895 = vsub.s32 %v3724, %v3894
  %v3896 = vrot.slane %v3707, %v3895
  %v3897 = vlaneseq
  %v3898 = vshrl.u32 %v3897, 7
  %v3899 = vsub.s32 %v3724, %v3898
  %v3900 = vrot.slane %v3710, %v3899
  %v3901 = vlaneseq
  %v3902 = vshrl.u32 %v3901, 7
  %v3903 = vsub.s32 %v3724, %v3902
  %v3904 = vrot.slane %v3713, %v3903
  %v3905 = vlaneseq
  %v3906 = vshrl.u32 %v3905, 7
  %v3907 = vsub.s32 %v3724, %v3906
  %v3908 = vrot.slane %v3716, %v3907
  %v3909 = vlaneseq
  %v3910 = vshrl.u32 %v3909, 7
  %v3911 = vsub.s32 %v3724, %v3910
  %v3912 = vrot.slane %v3719, %v3911
  %v3913 = vlaneseq
  %v3914 = vshrl.u32 %v3913, 7
  %v3915 = vsub.s32 %v3724, %v3914
  %v3916 = vrot.slane %v3722, %v3915
  %vm3917 = vcmask 1041409
  %v3918 = vsel %vm3917, %v3732, %v3728
  %vm3919 = vcmask 1042434
  %v3920 = vsel %vm3919, %v3736, %v3918
  %vm3921 = vcmask 1043459
  %v3922 = vsel %vm3921, %v3740, %v3920
  %vm3923 = vcmask 1044484
  %v3924 = vsel %vm3923, %v3744, %v3922
  %vm3925 = vcmask 1045509
  %v3926 = vsel %vm3925, %v3748, %v3924
  %v3927 = vsel %vm3917, %v3756, %v3752
  %v3928 = vsel %vm3919, %v3760, %v3927
  %v3929 = vsel %vm3921, %v3764, %v3928
  %v3930 = vsel %vm3923, %v3768, %v3929
  %v3931 = vsel %vm3925, %v3772, %v3930
  %v3932 = vsel %vm3917, %v3780, %v3776
  %v3933 = vsel %vm3919, %v3784, %v3932
  %v3934 = vsel %vm3921, %v3788, %v3933
  %v3935 = vsel %vm3923, %v3792, %v3934
  %v3936 = vsel %vm3925, %v3796, %v3935
  %v3937 = vsel %vm3917, %v3804, %v3800
  %v3938 = vsel %vm3919, %v3808, %v3937
  %v3939 = vsel %vm3921, %v3812, %v3938
  %v3940 = vsel %vm3923, %v3816, %v3939
  %v3941 = vsel %vm3925, %v3820, %v3940
  %v3942 = vsel %vm3917, %v3828, %v3824
  %v3943 = vsel %vm3919, %v3832, %v3942
  %v3944 = vsel %vm3921, %v3836, %v3943
  %v3945 = vsel %vm3923, %v3840, %v3944
  %v3946 = vsel %vm3925, %v3844, %v3945
  %v3947 = vsel %vm3917, %v3852, %v3848
  %v3948 = vsel %vm3919, %v3856, %v3947
  %v3949 = vsel %vm3921, %v3860, %v3948
  %v3950 = vsel %vm3923, %v3864, %v3949
  %v3951 = vsel %vm3925, %v3868, %v3950
  %v3952 = vsel %vm3917, %v3876, %v3872
  %v3953 = vsel %vm3919, %v3880, %v3952
  %v3954 = vsel %vm3921, %v3884, %v3953
  %v3955 = vsel %vm3923, %v3888, %v3954
  %v3956 = vsel %vm3925, %v3892, %v3955
  %v3957 = vsel %vm3917, %v3900, %v3896
  %v3958 = vsel %vm3919, %v3904, %v3957
  %v3959 = vsel %vm3921, %v3908, %v3958
  %v3960 = vsel %vm3923, %v3912, %v3959
  %v3961 = vsel %vm3925, %v3916, %v3960
  %vm3970 = vcmask 46080
  %3971 = vst.msk [vmem:[%s3] sm:$0x3f] %vm3970, %v3926
  %3972 = vst.msk [vmem:[%s3 + $0x8] sm:$0x3f] %vm3970, %v3931
  %3973 = vst.msk [vmem:[%s3 + $0x10] sm:$0x3f] %vm3970, %v3936
  %3974 = vst.msk [vmem:[%s3 + $0x18] sm:$0x3f] %vm3970, %v3941
  %3975 = vst.msk [vmem:[%s3 + $0x20] sm:$0x3f] %vm3970, %v3946
  %3976 = vst.msk [vmem:[%s3 + $0x28] sm:$0x3f] %vm3970, %v3951
  %3977 = vst.msk [vmem:[%s3 + $0x30] sm:$0x3f] %vm3970, %v3956
  %3978 = vst.msk [vmem:[%s3 + $0x38] sm:$0x3f] %vm3970, %v3961
  // Predicated region
  $region14: #{generator_forward.1} parent=0 // pred_check
    _
  $region15: #{generator_forward.1} parent=0 // pred_check_branch
    %3980 = sbr.rel (0) target = $region17
  $region16: #{generator_forward.1} parent=0 // pred_region
    _
  $region17: #{generator_forward.1} parent=0 // pred_fallthru
    _
  // Predicated region
  $region18: #{generator_forward.1} parent=0 // pred_check
    _
  $region19: #{generator_forward.1} parent=0 // pred_check_branch
    %3982 = sbr.rel (0) target = $region21
  $region20: #{generator_forward.1} parent=0 // pred_region
    _
  $region21: #{generator_forward.1} parent=0 // pred_fallthru
    _

</llo_original>
